<compile_context>
chip_gen: v7x
topology: tpu7x:2x2x1
jax: 0.10.0
libtpu: 0.0.40
codegen_flags: <defaults>
</compile_context>

<pallas_src>
import functools

import jax
import jax.numpy as jnp
import numpy as np
from jax.experimental import pallas as pl
from jax.experimental.pallas import tpu as pltpu

_SELU_ALPHA = 1.6732632423543772
_SELU_SCALE = 1.0507009873554805


def _selu(x):
    # clamp exp argument so the dead branch of where() can't produce inf
    return _SELU_SCALE * jnp.where(
        x > 0, x, _SELU_ALPHA * (jnp.exp(jnp.minimum(x, 0.0)) - 1.0))


# --------------------------------------------------------------------------
# Fused kernel: conv stack + stacked LSTM + FC, all VMEM-resident, no grid.
# --------------------------------------------------------------------------
def fused_cnn_lstm_kernel(*refs, kernel_size, dilation, eps, hidden_size,
                          num_layers):
    (x_ref, w1_ref, b1_ref, w2_ref, b2_ref, g1_ref, be1_ref,
     w3_ref, b3_ref, g2_ref, be2_ref, fcw_ref, fcb_ref) = refs[:13]
    lstm_refs = refs[13:13 + 3 * num_layers]
    out_ref = refs[13 + 3 * num_layers]

    L, B, Cin = x_ref.shape            # time-major input (L, B, Cin)
    K, d, H = kernel_size, dilation, hidden_size
    C1 = w1_ref.shape[1]               # 64
    C2 = w2_ref.shape[1]               # 32
    C3 = w3_ref.shape[1]               # 32
    L1 = L - d * (K - 1)               # conv1: valid, dilated
    L2 = L1 + 2 - (K - 1)              # conv2: padding=1
    L3 = L2 + 2 - (K - 1)              # conv3: padding=1

    def mxu(a, b):                     # default precision (single MXU pass)
        return jnp.dot(a, b, preferred_element_type=jnp.float32)

    # ---- conv1 (valid, dilation) + SELU : im2col -> one MXU dot ----
    x = x_ref[...]
    cols = jnp.concatenate([x[k * d:k * d + L1] for k in range(K)], axis=-1)
    y1 = mxu(cols.reshape(L1 * B, K * Cin), w1_ref[...]) + b1_ref[...]
    y1 = _selu(y1).reshape(L1, B, C1)

    # ---- conv2 (padding=1) + BatchNorm(batch stats) + SELU ----
    zp = jnp.zeros((1, B, C1), jnp.float32)
    ya = jnp.concatenate([zp, y1, zp], axis=0)          # leading-axis pad: cheap
    cols = jnp.concatenate([ya[k:k + L2] for k in range(K)], axis=-1)
    y2 = mxu(cols.reshape(L2 * B, K * C1), w2_ref[...]) + b2_ref[...]
    mean = jnp.mean(y2, axis=0, keepdims=True)
    var = jnp.mean((y2 - mean) ** 2, axis=0, keepdims=True)
    y2 = _selu((y2 - mean) * jax.lax.rsqrt(var + eps) * g1_ref[...] + be1_ref[...])
    y2 = y2.reshape(L2, B, C2)

    # ---- conv3 (padding=1) + BatchNorm(batch stats) + SELU ----
    zp = jnp.zeros((1, B, C2), jnp.float32)
    yb = jnp.concatenate([zp, y2, zp], axis=0)
    cols = jnp.concatenate([yb[k:k + L3] for k in range(K)], axis=-1)
    y3 = mxu(cols.reshape(L3 * B, K * C2), w3_ref[...]) + b3_ref[...]
    mean = jnp.mean(y3, axis=0, keepdims=True)
    var = jnp.mean((y3 - mean) ** 2, axis=0, keepdims=True)
    seq2d = _selu((y3 - mean) * jax.lax.rsqrt(var + eps) * g2_ref[...] + be2_ref[...])
    # seq2d: (T*B, C3) time-major -> feeds the hoisted LSTM input projection

    # ---- stacked LSTM: input projections hoisted, only h@Whh in the loop ----
    T = L3
    layer_in = seq2d                                  # (T*B, C) time-major
    h = None
    for l in range(num_layers):
        wih = lstm_refs[3 * l][...]                   # (C_in_l, 4H)
        whh = lstm_refs[3 * l + 1][...]               # (H, 4H)
        bias = lstm_refs[3 * l + 2][...]              # (1, 4H)

        # ONE big MXU dot for all timesteps of this layer (off the recurrence).
        xproj = mxu(layer_in, wih) + bias             # (T*B, 4H)

        h = jnp.zeros((B, H), jnp.float32)
        c = jnp.zeros((B, H), jnp.float32)
        hs = []
        for t in range(T):                            # fully unrolled
            g = xproj[t * B:(t + 1) * B, :] + mxu(h, whh)
            sg = jax.nn.sigmoid(g)                    # one EUP pass over (B, 4H)
            tg = jnp.tanh(g)                          # one EUP pass over (B, 4H)
            c = sg[:, H:2 * H] * c + sg[:, 0:H] * tg[:, 2 * H:3 * H]
            h = sg[:, 3 * H:4 * H] * jnp.tanh(c)
            if l < num_layers - 1:
                hs.append(h)
        if l < num_layers - 1:
            # materialize this layer's hidden sequence (time-major, ~4 KB) so
            # the next layer's input projection is again one MXU dot.
            layer_in = jnp.concatenate(hs, axis=0)    # (T*B, H)

    # ---- final FC on last-timestep hidden of the top layer ----
    out_ref[...] = mxu(h, fcw_ref[...]) + fcb_ref[...]


# --------------------------------------------------------------------------
# Wrapper: single grid-less pallas_call, all operands in VMEM.
# --------------------------------------------------------------------------
def cnn_lstm_forward(x, p, cfg):
    # TODO(synk): strided Conv1d (stride != 1) not implemented; cfg uses stride=1.
    assert cfg['stride'] == 1
    B, L, Cin = x.shape
    K, d, H, NL = (cfg['kernel_size'], cfg['dilation'],
                   cfg['hidden_size'], cfg['num_layers'])
    out_size = p['fc_w'].shape[0]

    # Time-major input so the whole in-kernel pipeline is (L, B, C).
    x_tm = jnp.transpose(x, (1, 0, 2))

    # PyTorch conv weight (C_out, C_in, K) -> im2col layout (K*C_in, C_out)
    w1 = jnp.transpose(p['conv1_w'], (2, 1, 0)).reshape(K * Cin, -1)
    w2 = jnp.transpose(p['conv2_w'], (2, 1, 0)).reshape(K * 64, -1)
    w3 = jnp.transpose(p['conv3_w'], (2, 1, 0)).reshape(K * 32, -1)

    inputs = [
        x_tm, w1, p['conv1_b'].reshape(1, -1),
        w2, p['conv2_b'].reshape(1, -1),
        p['bn1_g'].reshape(1, -1), p['bn1_b'].reshape(1, -1),
        w3, p['conv3_b'].reshape(1, -1),
        p['bn2_g'].reshape(1, -1), p['bn2_b'].reshape(1, -1),
        p['fc_w'].T, p['fc_b'].reshape(1, -1),
    ]
    for l in range(NL):
        lp = p['lstm'][l]
        inputs += [lp['wih'].T, lp['whh'].T,
                   (lp['bih'] + lp['bhh']).reshape(1, -1)]

    return pl.pallas_call(
        functools.partial(fused_cnn_lstm_kernel, kernel_size=K, dilation=d,
                          eps=1e-5, hidden_size=H, num_layers=NL),
        out_shape=jax.ShapeDtypeStruct((B, out_size), jnp.float32),
        in_specs=[pl.BlockSpec(memory_space=pltpu.MemorySpace.VMEM)] * len(inputs),
        out_specs=pl.BlockSpec(memory_space=pltpu.MemorySpace.VMEM),
    )(*inputs)


# --------------------------------------------------------------------------
# Pure-JAX reference (ground truth at HIGHEST precision, for correctness check)
# --------------------------------------------------------------------------
def _conv1d_ref(x_ncl, w, b, stride, padding, dilation):
    y = jax.lax.conv_general_dilated(
        x_ncl, w, window_strides=(stride,), padding=[(padding, padding)],
        rhs_dilation=(dilation,), dimension_numbers=('NCW', 'OIW', 'NCW'),
        precision=jax.lax.Precision.HIGHEST)
    return y + b[None, :, None]


def _bn_ref(x_ncl, gamma, beta, eps=1e-5):
    mean = x_ncl.mean(axis=(0, 2), keepdims=True)
    var = ((x_ncl - mean) ** 2).mean(axis=(0, 2), keepdims=True)
    return ((x_ncl - mean) / jnp.sqrt(var + eps)
            * gamma[None, :, None] + beta[None, :, None])


def reference_forward(x, p, cfg):
    K, s, d, H = (cfg['kernel_size'], cfg['stride'],
                  cfg['dilation'], cfg['hidden_size'])
    xt = jnp.transpose(x, (0, 2, 1))
    y = _selu(_conv1d_ref(xt, p['conv1_w'], p['conv1_b'], s, 0, d))
    y = _conv1d_ref(y, p['conv2_w'], p['conv2_b'], s, 1, 1)
    y = _selu(_bn_ref(y, p['bn1_g'], p['bn1_b']))
    y = _conv1d_ref(y, p['conv3_w'], p['conv3_b'], s, 1, 1)
    y = _selu(_bn_ref(y, p['bn2_g'], p['bn2_b']))
    seq = jnp.transpose(y, (0, 2, 1))       # (B, T, 32)
    B = seq.shape[0]

    h_in = seq
    for l in range(cfg['num_layers']):
        lp = p['lstm'][l]
        wih, whh = lp['wih'], lp['whh']
        bias = lp['bih'] + lp['bhh']

        def step(carry, x_t, wih=wih, whh=whh, bias=bias):
            h, c = carry
            g = (jnp.dot(x_t, wih.T, precision=jax.lax.Precision.HIGHEST)
                 + jnp.dot(h, whh.T, precision=jax.lax.Precision.HIGHEST) + bias)
            i = jax.nn.sigmoid(g[:, 0:H])
            f = jax.nn.sigmoid(g[:, H:2 * H])
            gg = jnp.tanh(g[:, 2 * H:3 * H])
            o = jax.nn.sigmoid(g[:, 3 * H:4 * H])
            c = f * c + i * gg
            h = o * jnp.tanh(c)
            return (h, c), h

        init = (jnp.zeros((B, H), jnp.float32), jnp.zeros((B, H), jnp.float32))
        _, hs = jax.lax.scan(step, init, jnp.transpose(h_in, (1, 0, 2)))
        h_in = jnp.transpose(hs, (1, 0, 2))

    return (jnp.dot(h_in[:, -1, :], p['fc_w'].T,
                    precision=jax.lax.Precision.HIGHEST) + p['fc_b'])


# --------------------------------------------------------------------------
# Deterministic parameter init (matches nn.Module shapes)
# --------------------------------------------------------------------------
def init_params(key, cfg):
    H, K = cfg['hidden_size'], cfg['kernel_size']
    Cin, Co, NL = cfg['input_size'], cfg['output_size'], cfg['num_layers']
    keys = jax.random.split(key, 12 + 4 * NL)

    def nrm(k, shape, s=0.1):
        return jax.random.normal(k, shape, jnp.float32) * s

    p = {
        'conv1_w': nrm(keys[0], (64, Cin, K)), 'conv1_b': nrm(keys[1], (64,)),
        'conv2_w': nrm(keys[2], (32, 64, K)), 'conv2_b': nrm(keys[3], (32,)),
        'bn1_g': 1.0 + nrm(keys[4], (32,)), 'bn1_b': nrm(keys[5], (32,)),
        'conv3_w': nrm(keys[6], (32, 32, K)), 'conv3_b': nrm(keys[7], (32,)),
        'bn2_g': 1.0 + nrm(keys[8], (32,)), 'bn2_b': nrm(keys[9], (32,)),
        'lstm': [],
    }
    idx = 10
    for l in range(NL):
        fin = 32 if l == 0 else H
        p['lstm'].append({
            'wih': nrm(keys[idx], (4 * H, fin)),
            'whh': nrm(keys[idx + 1], (4 * H, H)),
            'bih': nrm(keys[idx + 2], (4 * H,)),
            'bhh': nrm(keys[idx + 3], (4 * H,)),
        })
        idx += 4
    p['fc_w'] = nrm(keys[idx], (Co, H))
    p['fc_b'] = nrm(keys[idx + 1], (Co,))
    return p


# --------------------------------------------------------------------------
if __name__ == "__main__":
    cfg = {
        'input_size': 4,
        'output_size': 3,
        'seq_len': 16,
        'kernel_size': 3,
        'stride': 1,
        'hidden_size': 32,
        'num_layers': 2,
        'dilation': 1,
    }
    key = jax.random.PRNGKey(0)
    pkey, xkey = jax.random.split(key)
    params = init_params(pkey, cfg)
    x = jax.random.normal(xkey, (2, cfg['seq_len'], cfg['input_size']), jnp.float32)

    out = cnn_lstm_forward(x, params, cfg)
    out = jax.block_until_ready(out)
    assert out.shape == (2, cfg['output_size'])

    # Kernel uses default (single-pass MXU) precision; reference is HIGHEST.
    ref = jax.block_until_ready(reference_forward(x, params, cfg))
    np.testing.assert_allclose(np.asarray(out), np.asarray(ref),
                               atol=3e-2, rtol=3e-2)
    print("KERNEL_OK")
</pallas_src>

<mosaic_0001>
module attributes {stable_mosaic.version = 11 : i64} {
  func.func @fused_cnn_lstm_kernel(%arg0: memref<16x2x4xf32, #tpu.memory_space<vmem>>, %arg1: memref<12x64xf32, #tpu.memory_space<vmem>>, %arg2: memref<1x64xf32, #tpu.memory_space<vmem>>, %arg3: memref<192x32xf32, #tpu.memory_space<vmem>>, %arg4: memref<1x32xf32, #tpu.memory_space<vmem>>, %arg5: memref<1x32xf32, #tpu.memory_space<vmem>>, %arg6: memref<1x32xf32, #tpu.memory_space<vmem>>, %arg7: memref<96x32xf32, #tpu.memory_space<vmem>>, %arg8: memref<1x32xf32, #tpu.memory_space<vmem>>, %arg9: memref<1x32xf32, #tpu.memory_space<vmem>>, %arg10: memref<1x32xf32, #tpu.memory_space<vmem>>, %arg11: memref<32x3xf32, #tpu.memory_space<vmem>>, %arg12: memref<1x3xf32, #tpu.memory_space<vmem>>, %arg13: memref<32x128xf32, #tpu.memory_space<vmem>>, %arg14: memref<32x128xf32, #tpu.memory_space<vmem>>, %arg15: memref<1x128xf32, #tpu.memory_space<vmem>>, %arg16: memref<32x128xf32, #tpu.memory_space<vmem>>, %arg17: memref<32x128xf32, #tpu.memory_space<vmem>>, %arg18: memref<1x128xf32, #tpu.memory_space<vmem>>, %arg19: memref<2x3xf32, #tpu.memory_space<vmem>>) attributes {dimension_semantics = [], scalar_prefetch = 0 : i64, scratch_operands = 0 : i64, tpu.core_type = #tpu.core_type<tc>} {
    %c0 = arith.constant 0 : index
    %c0_0 = arith.constant 0 : index
    %c0_1 = arith.constant 0 : index
    %0 = vector.load %arg0[%c0, %c0_0, %c0_1] : memref<16x2x4xf32, #tpu.memory_space<vmem>>, vector<16x2x4xf32>
    %1 = vector.extract_strided_slice %0 {offsets = [0, 0, 0], sizes = [14, 2, 4], strides = [1, 1, 1]} : vector<16x2x4xf32> to vector<14x2x4xf32>
    %2 = vector.extract_strided_slice %0 {offsets = [1, 0, 0], sizes = [14, 2, 4], strides = [1, 1, 1]} : vector<16x2x4xf32> to vector<14x2x4xf32>
    %3 = vector.extract_strided_slice %0 {offsets = [2, 0, 0], sizes = [14, 2, 4], strides = [1, 1, 1]} : vector<16x2x4xf32> to vector<14x2x4xf32>
    %4 = tpu.concatenate %1, %2, %3 in 2 : vector<14x2x4xf32>, vector<14x2x4xf32>, vector<14x2x4xf32> -> vector<14x2x12xf32>
    %5 = vector.shape_cast %4 : vector<14x2x12xf32> to vector<28x12xf32>
    %c0_2 = arith.constant 0 : index
    %c0_3 = arith.constant 0 : index
    %6 = vector.load %arg1[%c0_2, %c0_3] : memref<12x64xf32, #tpu.memory_space<vmem>>, vector<12x64xf32>
    %cst = arith.constant dense<0.000000e+00> : vector<28x64xf32>
    %7 = tpu.matmul %5, %6, %cst {dimension_numbers = #tpu.dot_dimension_numbers<[1], [0], [0], [1], [0, 0, 1, 1], [], []>} : vector<28x12xf32>, vector<12x64xf32>, vector<28x64xf32> -> vector<28x64xf32>
    %c0_4 = arith.constant 0 : index
    %c0_5 = arith.constant 0 : index
    %8 = vector.load %arg2[%c0_4, %c0_5] : memref<1x64xf32, #tpu.memory_space<vmem>>, vector<1x64xf32>
    %9 = vector.broadcast %8 : vector<1x64xf32> to vector<28x64xf32>
    %10 = arith.addf %7, %9 : vector<28x64xf32>
    %cst_6 = arith.constant 0.000000e+00 : f32
    %11 = vector.broadcast %cst_6 : f32 to vector<28x64xf32>
    %12 = arith.cmpf ogt, %10, %11 : vector<28x64xf32>
    %cst_7 = arith.constant 0.000000e+00 : f32
    %13 = vector.broadcast %cst_7 : f32 to vector<28x64xf32>
    %14 = arith.minimumf %10, %13 : vector<28x64xf32>
    %15 = math.exp %14 : vector<28x64xf32>
    %cst_8 = arith.constant 1.000000e+00 : f32
    %16 = vector.broadcast %cst_8 : f32 to vector<28x64xf32>
    %17 = arith.subf %15, %16 : vector<28x64xf32>
    %cst_9 = arith.constant 1.67326319 : f32
    %18 = vector.broadcast %cst_9 : f32 to vector<28x64xf32>
    %19 = arith.mulf %18, %17 : vector<28x64xf32>
    %20 = arith.select %12, %10, %19 : vector<28x64xi1>, vector<28x64xf32>
    %cst_10 = arith.constant 1.05070102 : f32
    %21 = vector.broadcast %cst_10 : f32 to vector<28x64xf32>
    %22 = arith.mulf %21, %20 : vector<28x64xf32>
    %23 = vector.shape_cast %22 : vector<28x64xf32> to vector<14x2x64xf32>
    %cst_11 = arith.constant 0.000000e+00 : f32
    %24 = vector.broadcast %cst_11 : f32 to vector<1x2x64xf32>
    %25 = tpu.concatenate %24, %23, %24 in 0 : vector<1x2x64xf32>, vector<14x2x64xf32>, vector<1x2x64xf32> -> vector<16x2x64xf32>
    %26 = vector.extract_strided_slice %25 {offsets = [0, 0, 0], sizes = [14, 2, 64], strides = [1, 1, 1]} : vector<16x2x64xf32> to vector<14x2x64xf32>
    %27 = vector.extract_strided_slice %25 {offsets = [1, 0, 0], sizes = [14, 2, 64], strides = [1, 1, 1]} : vector<16x2x64xf32> to vector<14x2x64xf32>
    %28 = vector.extract_strided_slice %25 {offsets = [2, 0, 0], sizes = [14, 2, 64], strides = [1, 1, 1]} : vector<16x2x64xf32> to vector<14x2x64xf32>
    %29 = tpu.concatenate %26, %27, %28 in 2 : vector<14x2x64xf32>, vector<14x2x64xf32>, vector<14x2x64xf32> -> vector<14x2x192xf32>
    %30 = vector.shape_cast %29 : vector<14x2x192xf32> to vector<28x192xf32>
    %c0_12 = arith.constant 0 : index
    %c0_13 = arith.constant 0 : index
    %31 = vector.load %arg3[%c0_12, %c0_13] : memref<192x32xf32, #tpu.memory_space<vmem>>, vector<192x32xf32>
    %cst_14 = arith.constant dense<0.000000e+00> : vector<28x32xf32>
    %32 = tpu.matmul %30, %31, %cst_14 {dimension_numbers = #tpu.dot_dimension_numbers<[1], [0], [0], [1], [0, 0, 1, 1], [], []>} : vector<28x192xf32>, vector<192x32xf32>, vector<28x32xf32> -> vector<28x32xf32>
    %c0_15 = arith.constant 0 : index
    %c0_16 = arith.constant 0 : index
    %33 = vector.load %arg4[%c0_15, %c0_16] : memref<1x32xf32, #tpu.memory_space<vmem>>, vector<1x32xf32>
    %34 = vector.broadcast %33 : vector<1x32xf32> to vector<28x32xf32>
    %35 = arith.addf %32, %34 : vector<28x32xf32>
    %cst_17 = arith.constant dense<0.000000e+00> : vector<32xf32>
    %36 = vector.multi_reduction <add>, %35, %cst_17 [0] : vector<28x32xf32> to vector<32xf32>
    %37 = vector.shape_cast %36 : vector<32xf32> to vector<1x32xf32>
    %cst_18 = arith.constant 2.800000e+01 : f32
    %38 = vector.broadcast %cst_18 : f32 to vector<1x32xf32>
    %39 = arith.divf %37, %38 : vector<1x32xf32>
    %40 = vector.broadcast %39 : vector<1x32xf32> to vector<28x32xf32>
    %41 = arith.subf %35, %40 : vector<28x32xf32>
    %42 = arith.mulf %41, %41 : vector<28x32xf32>
    %cst_19 = arith.constant dense<0.000000e+00> : vector<32xf32>
    %43 = vector.multi_reduction <add>, %42, %cst_19 [0] : vector<28x32xf32> to vector<32xf32>
    %44 = vector.shape_cast %43 : vector<32xf32> to vector<1x32xf32>
    %cst_20 = arith.constant 2.800000e+01 : f32
    %45 = vector.broadcast %cst_20 : f32 to vector<1x32xf32>
    %46 = arith.divf %44, %45 : vector<1x32xf32>
    %47 = vector.broadcast %39 : vector<1x32xf32> to vector<28x32xf32>
    %48 = arith.subf %35, %47 : vector<28x32xf32>
    %cst_21 = arith.constant 9.99999974E-6 : f32
    %49 = vector.broadcast %cst_21 : f32 to vector<1x32xf32>
    %50 = arith.addf %46, %49 : vector<1x32xf32>
    %51 = math.rsqrt %50 : vector<1x32xf32>
    %52 = vector.broadcast %51 : vector<1x32xf32> to vector<28x32xf32>
    %53 = arith.mulf %48, %52 : vector<28x32xf32>
    %c0_22 = arith.constant 0 : index
    %c0_23 = arith.constant 0 : index
    %54 = vector.load %arg5[%c0_22, %c0_23] : memref<1x32xf32, #tpu.memory_space<vmem>>, vector<1x32xf32>
    %55 = vector.broadcast %54 : vector<1x32xf32> to vector<28x32xf32>
    %56 = arith.mulf %53, %55 : vector<28x32xf32>
    %c0_24 = arith.constant 0 : index
    %c0_25 = arith.constant 0 : index
    %57 = vector.load %arg6[%c0_24, %c0_25] : memref<1x32xf32, #tpu.memory_space<vmem>>, vector<1x32xf32>
    %58 = vector.broadcast %57 : vector<1x32xf32> to vector<28x32xf32>
    %59 = arith.addf %56, %58 : vector<28x32xf32>
    %cst_26 = arith.constant 0.000000e+00 : f32
    %60 = vector.broadcast %cst_26 : f32 to vector<28x32xf32>
    %61 = arith.cmpf ogt, %59, %60 : vector<28x32xf32>
    %cst_27 = arith.constant 0.000000e+00 : f32
    %62 = vector.broadcast %cst_27 : f32 to vector<28x32xf32>
    %63 = arith.minimumf %59, %62 : vector<28x32xf32>
    %64 = math.exp %63 : vector<28x32xf32>
    %cst_28 = arith.constant 1.000000e+00 : f32
    %65 = vector.broadcast %cst_28 : f32 to vector<28x32xf32>
    %66 = arith.subf %64, %65 : vector<28x32xf32>
    %cst_29 = arith.constant 1.67326319 : f32
    %67 = vector.broadcast %cst_29 : f32 to vector<28x32xf32>
    %68 = arith.mulf %67, %66 : vector<28x32xf32>
    %69 = arith.select %61, %59, %68 : vector<28x32xi1>, vector<28x32xf32>
    %cst_30 = arith.constant 1.05070102 : f32
    %70 = vector.broadcast %cst_30 : f32 to vector<28x32xf32>
    %71 = arith.mulf %70, %69 : vector<28x32xf32>
    %72 = vector.shape_cast %71 : vector<28x32xf32> to vector<14x2x32xf32>
    %cst_31 = arith.constant 0.000000e+00 : f32
    %73 = vector.broadcast %cst_31 : f32 to vector<1x2x32xf32>
    %74 = tpu.concatenate %73, %72, %73 in 0 : vector<1x2x32xf32>, vector<14x2x32xf32>, vector<1x2x32xf32> -> vector<16x2x32xf32>
    %75 = vector.extract_strided_slice %74 {offsets = [0, 0, 0], sizes = [14, 2, 32], strides = [1, 1, 1]} : vector<16x2x32xf32> to vector<14x2x32xf32>
    %76 = vector.extract_strided_slice %74 {offsets = [1, 0, 0], sizes = [14, 2, 32], strides = [1, 1, 1]} : vector<16x2x32xf32> to vector<14x2x32xf32>
    %77 = vector.extract_strided_slice %74 {offsets = [2, 0, 0], sizes = [14, 2, 32], strides = [1, 1, 1]} : vector<16x2x32xf32> to vector<14x2x32xf32>
    %78 = tpu.concatenate %75, %76, %77 in 2 : vector<14x2x32xf32>, vector<14x2x32xf32>, vector<14x2x32xf32> -> vector<14x2x96xf32>
    %79 = vector.shape_cast %78 : vector<14x2x96xf32> to vector<28x96xf32>
    %c0_32 = arith.constant 0 : index
    %c0_33 = arith.constant 0 : index
    %80 = vector.load %arg7[%c0_32, %c0_33] : memref<96x32xf32, #tpu.memory_space<vmem>>, vector<96x32xf32>
    %cst_34 = arith.constant dense<0.000000e+00> : vector<28x32xf32>
    %81 = tpu.matmul %79, %80, %cst_34 {dimension_numbers = #tpu.dot_dimension_numbers<[1], [0], [0], [1], [0, 0, 1, 1], [], []>} : vector<28x96xf32>, vector<96x32xf32>, vector<28x32xf32> -> vector<28x32xf32>
    %c0_35 = arith.constant 0 : index
    %c0_36 = arith.constant 0 : index
    %82 = vector.load %arg8[%c0_35, %c0_36] : memref<1x32xf32, #tpu.memory_space<vmem>>, vector<1x32xf32>
    %83 = vector.broadcast %82 : vector<1x32xf32> to vector<28x32xf32>
    %84 = arith.addf %81, %83 : vector<28x32xf32>
    %cst_37 = arith.constant dense<0.000000e+00> : vector<32xf32>
    %85 = vector.multi_reduction <add>, %84, %cst_37 [0] : vector<28x32xf32> to vector<32xf32>
    %86 = vector.shape_cast %85 : vector<32xf32> to vector<1x32xf32>
    %cst_38 = arith.constant 2.800000e+01 : f32
    %87 = vector.broadcast %cst_38 : f32 to vector<1x32xf32>
    %88 = arith.divf %86, %87 : vector<1x32xf32>
    %89 = vector.broadcast %88 : vector<1x32xf32> to vector<28x32xf32>
    %90 = arith.subf %84, %89 : vector<28x32xf32>
    %91 = arith.mulf %90, %90 : vector<28x32xf32>
    %cst_39 = arith.constant dense<0.000000e+00> : vector<32xf32>
    %92 = vector.multi_reduction <add>, %91, %cst_39 [0] : vector<28x32xf32> to vector<32xf32>
    %93 = vector.shape_cast %92 : vector<32xf32> to vector<1x32xf32>
    %cst_40 = arith.constant 2.800000e+01 : f32
    %94 = vector.broadcast %cst_40 : f32 to vector<1x32xf32>
    %95 = arith.divf %93, %94 : vector<1x32xf32>
    %96 = vector.broadcast %88 : vector<1x32xf32> to vector<28x32xf32>
    %97 = arith.subf %84, %96 : vector<28x32xf32>
    %cst_41 = arith.constant 9.99999974E-6 : f32
    %98 = vector.broadcast %cst_41 : f32 to vector<1x32xf32>
    %99 = arith.addf %95, %98 : vector<1x32xf32>
    %100 = math.rsqrt %99 : vector<1x32xf32>
    %101 = vector.broadcast %100 : vector<1x32xf32> to vector<28x32xf32>
    %102 = arith.mulf %97, %101 : vector<28x32xf32>
    %c0_42 = arith.constant 0 : index
    %c0_43 = arith.constant 0 : index
    %103 = vector.load %arg9[%c0_42, %c0_43] : memref<1x32xf32, #tpu.memory_space<vmem>>, vector<1x32xf32>
    %104 = vector.broadcast %103 : vector<1x32xf32> to vector<28x32xf32>
    %105 = arith.mulf %102, %104 : vector<28x32xf32>
    %c0_44 = arith.constant 0 : index
    %c0_45 = arith.constant 0 : index
    %106 = vector.load %arg10[%c0_44, %c0_45] : memref<1x32xf32, #tpu.memory_space<vmem>>, vector<1x32xf32>
    %107 = vector.broadcast %106 : vector<1x32xf32> to vector<28x32xf32>
    %108 = arith.addf %105, %107 : vector<28x32xf32>
    %cst_46 = arith.constant 0.000000e+00 : f32
    %109 = vector.broadcast %cst_46 : f32 to vector<28x32xf32>
    %110 = arith.cmpf ogt, %108, %109 : vector<28x32xf32>
    %cst_47 = arith.constant 0.000000e+00 : f32
    %111 = vector.broadcast %cst_47 : f32 to vector<28x32xf32>
    %112 = arith.minimumf %108, %111 : vector<28x32xf32>
    %113 = math.exp %112 : vector<28x32xf32>
    %cst_48 = arith.constant 1.000000e+00 : f32
    %114 = vector.broadcast %cst_48 : f32 to vector<28x32xf32>
    %115 = arith.subf %113, %114 : vector<28x32xf32>
    %cst_49 = arith.constant 1.67326319 : f32
    %116 = vector.broadcast %cst_49 : f32 to vector<28x32xf32>
    %117 = arith.mulf %116, %115 : vector<28x32xf32>
    %118 = arith.select %110, %108, %117 : vector<28x32xi1>, vector<28x32xf32>
    %cst_50 = arith.constant 1.05070102 : f32
    %119 = vector.broadcast %cst_50 : f32 to vector<28x32xf32>
    %120 = arith.mulf %119, %118 : vector<28x32xf32>
    %c0_51 = arith.constant 0 : index
    %c0_52 = arith.constant 0 : index
    %121 = vector.load %arg13[%c0_51, %c0_52] : memref<32x128xf32, #tpu.memory_space<vmem>>, vector<32x128xf32>
    %c0_53 = arith.constant 0 : index
    %c0_54 = arith.constant 0 : index
    %122 = vector.load %arg14[%c0_53, %c0_54] : memref<32x128xf32, #tpu.memory_space<vmem>>, vector<32x128xf32>
    %c0_55 = arith.constant 0 : index
    %c0_56 = arith.constant 0 : index
    %123 = vector.load %arg15[%c0_55, %c0_56] : memref<1x128xf32, #tpu.memory_space<vmem>>, vector<1x128xf32>
    %cst_57 = arith.constant dense<0.000000e+00> : vector<28x128xf32>
    %124 = tpu.matmul %120, %121, %cst_57 {dimension_numbers = #tpu.dot_dimension_numbers<[1], [0], [0], [1], [0, 0, 1, 1], [], []>} : vector<28x32xf32>, vector<32x128xf32>, vector<28x128xf32> -> vector<28x128xf32>
    %125 = vector.broadcast %123 : vector<1x128xf32> to vector<28x128xf32>
    %126 = arith.addf %124, %125 : vector<28x128xf32>
    %cst_58 = arith.constant 0.000000e+00 : f32
    %127 = vector.broadcast %cst_58 : f32 to vector<2x32xf32>
    %cst_59 = arith.constant 0.000000e+00 : f32
    %128 = vector.broadcast %cst_59 : f32 to vector<2x32xf32>
    %129 = vector.extract_strided_slice %126 {offsets = [0, 0], sizes = [2, 128], strides = [1, 1]} : vector<28x128xf32> to vector<2x128xf32>
    %cst_60 = arith.constant dense<0.000000e+00> : vector<2x128xf32>
    %130 = tpu.matmul %127, %122, %cst_60 {dimension_numbers = #tpu.dot_dimension_numbers<[1], [0], [0], [1], [0, 0, 1, 1], [], []>} : vector<2x32xf32>, vector<32x128xf32>, vector<2x128xf32> -> vector<2x128xf32>
    %131 = arith.addf %129, %130 : vector<2x128xf32>
    %132 = arith.negf %131 : vector<2x128xf32>
    %133 = math.exp %132 : vector<2x128xf32>
    %cst_61 = arith.constant 1.000000e+00 : f32
    %134 = vector.broadcast %cst_61 : f32 to vector<2x128xf32>
    %135 = arith.addf %134, %133 : vector<2x128xf32>
    %136 = arith.divf %134, %135 : vector<2x128xf32>
    %137 = math.tanh %131 : vector<2x128xf32>
    %138 = vector.extract_strided_slice %136 {offsets = [0, 32], sizes = [2, 32], strides = [1, 1]} : vector<2x128xf32> to vector<2x32xf32>
    %139 = arith.mulf %138, %128 : vector<2x32xf32>
    %140 = vector.extract_strided_slice %136 {offsets = [0, 0], sizes = [2, 32], strides = [1, 1]} : vector<2x128xf32> to vector<2x32xf32>
    %141 = vector.extract_strided_slice %137 {offsets = [0, 64], sizes = [2, 32], strides = [1, 1]} : vector<2x128xf32> to vector<2x32xf32>
    %142 = arith.mulf %140, %141 : vector<2x32xf32>
    %143 = arith.addf %139, %142 : vector<2x32xf32>
    %144 = vector.extract_strided_slice %136 {offsets = [0, 96], sizes = [2, 32], strides = [1, 1]} : vector<2x128xf32> to vector<2x32xf32>
    %145 = math.tanh %143 : vector<2x32xf32>
    %146 = arith.mulf %144, %145 : vector<2x32xf32>
    %147 = vector.extract_strided_slice %126 {offsets = [2, 0], sizes = [2, 128], strides = [1, 1]} : vector<28x128xf32> to vector<2x128xf32>
    %cst_62 = arith.constant dense<0.000000e+00> : vector<2x128xf32>
    %148 = tpu.matmul %146, %122, %cst_62 {dimension_numbers = #tpu.dot_dimension_numbers<[1], [0], [0], [1], [0, 0, 1, 1], [], []>} : vector<2x32xf32>, vector<32x128xf32>, vector<2x128xf32> -> vector<2x128xf32>
    %149 = arith.addf %147, %148 : vector<2x128xf32>
    %150 = arith.negf %149 : vector<2x128xf32>
    %151 = math.exp %150 : vector<2x128xf32>
    %cst_63 = arith.constant 1.000000e+00 : f32
    %152 = vector.broadcast %cst_63 : f32 to vector<2x128xf32>
    %153 = arith.addf %152, %151 : vector<2x128xf32>
    %154 = arith.divf %152, %153 : vector<2x128xf32>
    %155 = math.tanh %149 : vector<2x128xf32>
    %156 = vector.extract_strided_slice %154 {offsets = [0, 32], sizes = [2, 32], strides = [1, 1]} : vector<2x128xf32> to vector<2x32xf32>
    %157 = arith.mulf %156, %143 : vector<2x32xf32>
    %158 = vector.extract_strided_slice %154 {offsets = [0, 0], sizes = [2, 32], strides = [1, 1]} : vector<2x128xf32> to vector<2x32xf32>
    %159 = vector.extract_strided_slice %155 {offsets = [0, 64], sizes = [2, 32], strides = [1, 1]} : vector<2x128xf32> to vector<2x32xf32>
    %160 = arith.mulf %158, %159 : vector<2x32xf32>
    %161 = arith.addf %157, %160 : vector<2x32xf32>
    %162 = vector.extract_strided_slice %154 {offsets = [0, 96], sizes = [2, 32], strides = [1, 1]} : vector<2x128xf32> to vector<2x32xf32>
    %163 = math.tanh %161 : vector<2x32xf32>
    %164 = arith.mulf %162, %163 : vector<2x32xf32>
    %165 = vector.extract_strided_slice %126 {offsets = [4, 0], sizes = [2, 128], strides = [1, 1]} : vector<28x128xf32> to vector<2x128xf32>
    %cst_64 = arith.constant dense<0.000000e+00> : vector<2x128xf32>
    %166 = tpu.matmul %164, %122, %cst_64 {dimension_numbers = #tpu.dot_dimension_numbers<[1], [0], [0], [1], [0, 0, 1, 1], [], []>} : vector<2x32xf32>, vector<32x128xf32>, vector<2x128xf32> -> vector<2x128xf32>
    %167 = arith.addf %165, %166 : vector<2x128xf32>
    %168 = arith.negf %167 : vector<2x128xf32>
    %169 = math.exp %168 : vector<2x128xf32>
    %cst_65 = arith.constant 1.000000e+00 : f32
    %170 = vector.broadcast %cst_65 : f32 to vector<2x128xf32>
    %171 = arith.addf %170, %169 : vector<2x128xf32>
    %172 = arith.divf %170, %171 : vector<2x128xf32>
    %173 = math.tanh %167 : vector<2x128xf32>
    %174 = vector.extract_strided_slice %172 {offsets = [0, 32], sizes = [2, 32], strides = [1, 1]} : vector<2x128xf32> to vector<2x32xf32>
    %175 = arith.mulf %174, %161 : vector<2x32xf32>
    %176 = vector.extract_strided_slice %172 {offsets = [0, 0], sizes = [2, 32], strides = [1, 1]} : vector<2x128xf32> to vector<2x32xf32>
    %177 = vector.extract_strided_slice %173 {offsets = [0, 64], sizes = [2, 32], strides = [1, 1]} : vector<2x128xf32> to vector<2x32xf32>
    %178 = arith.mulf %176, %177 : vector<2x32xf32>
    %179 = arith.addf %175, %178 : vector<2x32xf32>
    %180 = vector.extract_strided_slice %172 {offsets = [0, 96], sizes = [2, 32], strides = [1, 1]} : vector<2x128xf32> to vector<2x32xf32>
    %181 = math.tanh %179 : vector<2x32xf32>
    %182 = arith.mulf %180, %181 : vector<2x32xf32>
    %183 = vector.extract_strided_slice %126 {offsets = [6, 0], sizes = [2, 128], strides = [1, 1]} : vector<28x128xf32> to vector<2x128xf32>
    %cst_66 = arith.constant dense<0.000000e+00> : vector<2x128xf32>
    %184 = tpu.matmul %182, %122, %cst_66 {dimension_numbers = #tpu.dot_dimension_numbers<[1], [0], [0], [1], [0, 0, 1, 1], [], []>} : vector<2x32xf32>, vector<32x128xf32>, vector<2x128xf32> -> vector<2x128xf32>
    %185 = arith.addf %183, %184 : vector<2x128xf32>
    %186 = arith.negf %185 : vector<2x128xf32>
    %187 = math.exp %186 : vector<2x128xf32>
    %cst_67 = arith.constant 1.000000e+00 : f32
    %188 = vector.broadcast %cst_67 : f32 to vector<2x128xf32>
    %189 = arith.addf %188, %187 : vector<2x128xf32>
    %190 = arith.divf %188, %189 : vector<2x128xf32>
    %191 = math.tanh %185 : vector<2x128xf32>
    %192 = vector.extract_strided_slice %190 {offsets = [0, 32], sizes = [2, 32], strides = [1, 1]} : vector<2x128xf32> to vector<2x32xf32>
    %193 = arith.mulf %192, %179 : vector<2x32xf32>
    %194 = vector.extract_strided_slice %190 {offsets = [0, 0], sizes = [2, 32], strides = [1, 1]} : vector<2x128xf32> to vector<2x32xf32>
    %195 = vector.extract_strided_slice %191 {offsets = [0, 64], sizes = [2, 32], strides = [1, 1]} : vector<2x128xf32> to vector<2x32xf32>
    %196 = arith.mulf %194, %195 : vector<2x32xf32>
    %197 = arith.addf %193, %196 : vector<2x32xf32>
    %198 = vector.extract_strided_slice %190 {offsets = [0, 96], sizes = [2, 32], strides = [1, 1]} : vector<2x128xf32> to vector<2x32xf32>
    %199 = math.tanh %197 : vector<2x32xf32>
    %200 = arith.mulf %198, %199 : vector<2x32xf32>
    %201 = vector.extract_strided_slice %126 {offsets = [8, 0], sizes = [2, 128], strides = [1, 1]} : vector<28x128xf32> to vector<2x128xf32>
    %cst_68 = arith.constant dense<0.000000e+00> : vector<2x128xf32>
    %202 = tpu.matmul %200, %122, %cst_68 {dimension_numbers = #tpu.dot_dimension_numbers<[1], [0], [0], [1], [0, 0, 1, 1], [], []>} : vector<2x32xf32>, vector<32x128xf32>, vector<2x128xf32> -> vector<2x128xf32>
    %203 = arith.addf %201, %202 : vector<2x128xf32>
    %204 = arith.negf %203 : vector<2x128xf32>
    %205 = math.exp %204 : vector<2x128xf32>
    %cst_69 = arith.constant 1.000000e+00 : f32
    %206 = vector.broadcast %cst_69 : f32 to vector<2x128xf32>
    %207 = arith.addf %206, %205 : vector<2x128xf32>
    %208 = arith.divf %206, %207 : vector<2x128xf32>
    %209 = math.tanh %203 : vector<2x128xf32>
    %210 = vector.extract_strided_slice %208 {offsets = [0, 32], sizes = [2, 32], strides = [1, 1]} : vector<2x128xf32> to vector<2x32xf32>
    %211 = arith.mulf %210, %197 : vector<2x32xf32>
    %212 = vector.extract_strided_slice %208 {offsets = [0, 0], sizes = [2, 32], strides = [1, 1]} : vector<2x128xf32> to vector<2x32xf32>
    %213 = vector.extract_strided_slice %209 {offsets = [0, 64], sizes = [2, 32], strides = [1, 1]} : vector<2x128xf32> to vector<2x32xf32>
    %214 = arith.mulf %212, %213 : vector<2x32xf32>
    %215 = arith.addf %211, %214 : vector<2x32xf32>
    %216 = vector.extract_strided_slice %208 {offsets = [0, 96], sizes = [2, 32], strides = [1, 1]} : vector<2x128xf32> to vector<2x32xf32>
    %217 = math.tanh %215 : vector<2x32xf32>
    %218 = arith.mulf %216, %217 : vector<2x32xf32>
    %219 = vector.extract_strided_slice %126 {offsets = [10, 0], sizes = [2, 128], strides = [1, 1]} : vector<28x128xf32> to vector<2x128xf32>
    %cst_70 = arith.constant dense<0.000000e+00> : vector<2x128xf32>
    %220 = tpu.matmul %218, %122, %cst_70 {dimension_numbers = #tpu.dot_dimension_numbers<[1], [0], [0], [1], [0, 0, 1, 1], [], []>} : vector<2x32xf32>, vector<32x128xf32>, vector<2x128xf32> -> vector<2x128xf32>
    %221 = arith.addf %219, %220 : vector<2x128xf32>
    %222 = arith.negf %221 : vector<2x128xf32>
    %223 = math.exp %222 : vector<2x128xf32>
    %cst_71 = arith.constant 1.000000e+00 : f32
    %224 = vector.broadcast %cst_71 : f32 to vector<2x128xf32>
    %225 = arith.addf %224, %223 : vector<2x128xf32>
    %226 = arith.divf %224, %225 : vector<2x128xf32>
    %227 = math.tanh %221 : vector<2x128xf32>
    %228 = vector.extract_strided_slice %226 {offsets = [0, 32], sizes = [2, 32], strides = [1, 1]} : vector<2x128xf32> to vector<2x32xf32>
    %229 = arith.mulf %228, %215 : vector<2x32xf32>
    %230 = vector.extract_strided_slice %226 {offsets = [0, 0], sizes = [2, 32], strides = [1, 1]} : vector<2x128xf32> to vector<2x32xf32>
    %231 = vector.extract_strided_slice %227 {offsets = [0, 64], sizes = [2, 32], strides = [1, 1]} : vector<2x128xf32> to vector<2x32xf32>
    %232 = arith.mulf %230, %231 : vector<2x32xf32>
    %233 = arith.addf %229, %232 : vector<2x32xf32>
    %234 = vector.extract_strided_slice %226 {offsets = [0, 96], sizes = [2, 32], strides = [1, 1]} : vector<2x128xf32> to vector<2x32xf32>
    %235 = math.tanh %233 : vector<2x32xf32>
    %236 = arith.mulf %234, %235 : vector<2x32xf32>
    %237 = vector.extract_strided_slice %126 {offsets = [12, 0], sizes = [2, 128], strides = [1, 1]} : vector<28x128xf32> to vector<2x128xf32>
    %cst_72 = arith.constant dense<0.000000e+00> : vector<2x128xf32>
    %238 = tpu.matmul %236, %122, %cst_72 {dimension_numbers = #tpu.dot_dimension_numbers<[1], [0], [0], [1], [0, 0, 1, 1], [], []>} : vector<2x32xf32>, vector<32x128xf32>, vector<2x128xf32> -> vector<2x128xf32>
    %239 = arith.addf %237, %238 : vector<2x128xf32>
    %240 = arith.negf %239 : vector<2x128xf32>
    %241 = math.exp %240 : vector<2x128xf32>
    %cst_73 = arith.constant 1.000000e+00 : f32
    %242 = vector.broadcast %cst_73 : f32 to vector<2x128xf32>
    %243 = arith.addf %242, %241 : vector<2x128xf32>
    %244 = arith.divf %242, %243 : vector<2x128xf32>
    %245 = math.tanh %239 : vector<2x128xf32>
    %246 = vector.extract_strided_slice %244 {offsets = [0, 32], sizes = [2, 32], strides = [1, 1]} : vector<2x128xf32> to vector<2x32xf32>
    %247 = arith.mulf %246, %233 : vector<2x32xf32>
    %248 = vector.extract_strided_slice %244 {offsets = [0, 0], sizes = [2, 32], strides = [1, 1]} : vector<2x128xf32> to vector<2x32xf32>
    %249 = vector.extract_strided_slice %245 {offsets = [0, 64], sizes = [2, 32], strides = [1, 1]} : vector<2x128xf32> to vector<2x32xf32>
    %250 = arith.mulf %248, %249 : vector<2x32xf32>
    %251 = arith.addf %247, %250 : vector<2x32xf32>
    %252 = vector.extract_strided_slice %244 {offsets = [0, 96], sizes = [2, 32], strides = [1, 1]} : vector<2x128xf32> to vector<2x32xf32>
    %253 = math.tanh %251 : vector<2x32xf32>
    %254 = arith.mulf %252, %253 : vector<2x32xf32>
    %255 = vector.extract_strided_slice %126 {offsets = [14, 0], sizes = [2, 128], strides = [1, 1]} : vector<28x128xf32> to vector<2x128xf32>
    %cst_74 = arith.constant dense<0.000000e+00> : vector<2x128xf32>
    %256 = tpu.matmul %254, %122, %cst_74 {dimension_numbers = #tpu.dot_dimension_numbers<[1], [0], [0], [1], [0, 0, 1, 1], [], []>} : vector<2x32xf32>, vector<32x128xf32>, vector<2x128xf32> -> vector<2x128xf32>
    %257 = arith.addf %255, %256 : vector<2x128xf32>
    %258 = arith.negf %257 : vector<2x128xf32>
    %259 = math.exp %258 : vector<2x128xf32>
    %cst_75 = arith.constant 1.000000e+00 : f32
    %260 = vector.broadcast %cst_75 : f32 to vector<2x128xf32>
    %261 = arith.addf %260, %259 : vector<2x128xf32>
    %262 = arith.divf %260, %261 : vector<2x128xf32>
    %263 = math.tanh %257 : vector<2x128xf32>
    %264 = vector.extract_strided_slice %262 {offsets = [0, 32], sizes = [2, 32], strides = [1, 1]} : vector<2x128xf32> to vector<2x32xf32>
    %265 = arith.mulf %264, %251 : vector<2x32xf32>
    %266 = vector.extract_strided_slice %262 {offsets = [0, 0], sizes = [2, 32], strides = [1, 1]} : vector<2x128xf32> to vector<2x32xf32>
    %267 = vector.extract_strided_slice %263 {offsets = [0, 64], sizes = [2, 32], strides = [1, 1]} : vector<2x128xf32> to vector<2x32xf32>
    %268 = arith.mulf %266, %267 : vector<2x32xf32>
    %269 = arith.addf %265, %268 : vector<2x32xf32>
    %270 = vector.extract_strided_slice %262 {offsets = [0, 96], sizes = [2, 32], strides = [1, 1]} : vector<2x128xf32> to vector<2x32xf32>
    %271 = math.tanh %269 : vector<2x32xf32>
    %272 = arith.mulf %270, %271 : vector<2x32xf32>
    %273 = vector.extract_strided_slice %126 {offsets = [16, 0], sizes = [2, 128], strides = [1, 1]} : vector<28x128xf32> to vector<2x128xf32>
    %cst_76 = arith.constant dense<0.000000e+00> : vector<2x128xf32>
    %274 = tpu.matmul %272, %122, %cst_76 {dimension_numbers = #tpu.dot_dimension_numbers<[1], [0], [0], [1], [0, 0, 1, 1], [], []>} : vector<2x32xf32>, vector<32x128xf32>, vector<2x128xf32> -> vector<2x128xf32>
    %275 = arith.addf %273, %274 : vector<2x128xf32>
    %276 = arith.negf %275 : vector<2x128xf32>
    %277 = math.exp %276 : vector<2x128xf32>
    %cst_77 = arith.constant 1.000000e+00 : f32
    %278 = vector.broadcast %cst_77 : f32 to vector<2x128xf32>
    %279 = arith.addf %278, %277 : vector<2x128xf32>
    %280 = arith.divf %278, %279 : vector<2x128xf32>
    %281 = math.tanh %275 : vector<2x128xf32>
    %282 = vector.extract_strided_slice %280 {offsets = [0, 32], sizes = [2, 32], strides = [1, 1]} : vector<2x128xf32> to vector<2x32xf32>
    %283 = arith.mulf %282, %269 : vector<2x32xf32>
    %284 = vector.extract_strided_slice %280 {offsets = [0, 0], sizes = [2, 32], strides = [1, 1]} : vector<2x128xf32> to vector<2x32xf32>
    %285 = vector.extract_strided_slice %281 {offsets = [0, 64], sizes = [2, 32], strides = [1, 1]} : vector<2x128xf32> to vector<2x32xf32>
    %286 = arith.mulf %284, %285 : vector<2x32xf32>
    %287 = arith.addf %283, %286 : vector<2x32xf32>
    %288 = vector.extract_strided_slice %280 {offsets = [0, 96], sizes = [2, 32], strides = [1, 1]} : vector<2x128xf32> to vector<2x32xf32>
    %289 = math.tanh %287 : vector<2x32xf32>
    %290 = arith.mulf %288, %289 : vector<2x32xf32>
    %291 = vector.extract_strided_slice %126 {offsets = [18, 0], sizes = [2, 128], strides = [1, 1]} : vector<28x128xf32> to vector<2x128xf32>
    %cst_78 = arith.constant dense<0.000000e+00> : vector<2x128xf32>
    %292 = tpu.matmul %290, %122, %cst_78 {dimension_numbers = #tpu.dot_dimension_numbers<[1], [0], [0], [1], [0, 0, 1, 1], [], []>} : vector<2x32xf32>, vector<32x128xf32>, vector<2x128xf32> -> vector<2x128xf32>
    %293 = arith.addf %291, %292 : vector<2x128xf32>
    %294 = arith.negf %293 : vector<2x128xf32>
    %295 = math.exp %294 : vector<2x128xf32>
    %cst_79 = arith.constant 1.000000e+00 : f32
    %296 = vector.broadcast %cst_79 : f32 to vector<2x128xf32>
    %297 = arith.addf %296, %295 : vector<2x128xf32>
    %298 = arith.divf %296, %297 : vector<2x128xf32>
    %299 = math.tanh %293 : vector<2x128xf32>
    %300 = vector.extract_strided_slice %298 {offsets = [0, 32], sizes = [2, 32], strides = [1, 1]} : vector<2x128xf32> to vector<2x32xf32>
    %301 = arith.mulf %300, %287 : vector<2x32xf32>
    %302 = vector.extract_strided_slice %298 {offsets = [0, 0], sizes = [2, 32], strides = [1, 1]} : vector<2x128xf32> to vector<2x32xf32>
    %303 = vector.extract_strided_slice %299 {offsets = [0, 64], sizes = [2, 32], strides = [1, 1]} : vector<2x128xf32> to vector<2x32xf32>
    %304 = arith.mulf %302, %303 : vector<2x32xf32>
    %305 = arith.addf %301, %304 : vector<2x32xf32>
    %306 = vector.extract_strided_slice %298 {offsets = [0, 96], sizes = [2, 32], strides = [1, 1]} : vector<2x128xf32> to vector<2x32xf32>
    %307 = math.tanh %305 : vector<2x32xf32>
    %308 = arith.mulf %306, %307 : vector<2x32xf32>
    %309 = vector.extract_strided_slice %126 {offsets = [20, 0], sizes = [2, 128], strides = [1, 1]} : vector<28x128xf32> to vector<2x128xf32>
    %cst_80 = arith.constant dense<0.000000e+00> : vector<2x128xf32>
    %310 = tpu.matmul %308, %122, %cst_80 {dimension_numbers = #tpu.dot_dimension_numbers<[1], [0], [0], [1], [0, 0, 1, 1], [], []>} : vector<2x32xf32>, vector<32x128xf32>, vector<2x128xf32> -> vector<2x128xf32>
    %311 = arith.addf %309, %310 : vector<2x128xf32>
    %312 = arith.negf %311 : vector<2x128xf32>
    %313 = math.exp %312 : vector<2x128xf32>
    %cst_81 = arith.constant 1.000000e+00 : f32
    %314 = vector.broadcast %cst_81 : f32 to vector<2x128xf32>
    %315 = arith.addf %314, %313 : vector<2x128xf32>
    %316 = arith.divf %314, %315 : vector<2x128xf32>
    %317 = math.tanh %311 : vector<2x128xf32>
    %318 = vector.extract_strided_slice %316 {offsets = [0, 32], sizes = [2, 32], strides = [1, 1]} : vector<2x128xf32> to vector<2x32xf32>
    %319 = arith.mulf %318, %305 : vector<2x32xf32>
    %320 = vector.extract_strided_slice %316 {offsets = [0, 0], sizes = [2, 32], strides = [1, 1]} : vector<2x128xf32> to vector<2x32xf32>
    %321 = vector.extract_strided_slice %317 {offsets = [0, 64], sizes = [2, 32], strides = [1, 1]} : vector<2x128xf32> to vector<2x32xf32>
    %322 = arith.mulf %320, %321 : vector<2x32xf32>
    %323 = arith.addf %319, %322 : vector<2x32xf32>
    %324 = vector.extract_strided_slice %316 {offsets = [0, 96], sizes = [2, 32], strides = [1, 1]} : vector<2x128xf32> to vector<2x32xf32>
    %325 = math.tanh %323 : vector<2x32xf32>
    %326 = arith.mulf %324, %325 : vector<2x32xf32>
    %327 = vector.extract_strided_slice %126 {offsets = [22, 0], sizes = [2, 128], strides = [1, 1]} : vector<28x128xf32> to vector<2x128xf32>
    %cst_82 = arith.constant dense<0.000000e+00> : vector<2x128xf32>
    %328 = tpu.matmul %326, %122, %cst_82 {dimension_numbers = #tpu.dot_dimension_numbers<[1], [0], [0], [1], [0, 0, 1, 1], [], []>} : vector<2x32xf32>, vector<32x128xf32>, vector<2x128xf32> -> vector<2x128xf32>
    %329 = arith.addf %327, %328 : vector<2x128xf32>
    %330 = arith.negf %329 : vector<2x128xf32>
    %331 = math.exp %330 : vector<2x128xf32>
    %cst_83 = arith.constant 1.000000e+00 : f32
    %332 = vector.broadcast %cst_83 : f32 to vector<2x128xf32>
    %333 = arith.addf %332, %331 : vector<2x128xf32>
    %334 = arith.divf %332, %333 : vector<2x128xf32>
    %335 = math.tanh %329 : vector<2x128xf32>
    %336 = vector.extract_strided_slice %334 {offsets = [0, 32], sizes = [2, 32], strides = [1, 1]} : vector<2x128xf32> to vector<2x32xf32>
    %337 = arith.mulf %336, %323 : vector<2x32xf32>
    %338 = vector.extract_strided_slice %334 {offsets = [0, 0], sizes = [2, 32], strides = [1, 1]} : vector<2x128xf32> to vector<2x32xf32>
    %339 = vector.extract_strided_slice %335 {offsets = [0, 64], sizes = [2, 32], strides = [1, 1]} : vector<2x128xf32> to vector<2x32xf32>
    %340 = arith.mulf %338, %339 : vector<2x32xf32>
    %341 = arith.addf %337, %340 : vector<2x32xf32>
    %342 = vector.extract_strided_slice %334 {offsets = [0, 96], sizes = [2, 32], strides = [1, 1]} : vector<2x128xf32> to vector<2x32xf32>
    %343 = math.tanh %341 : vector<2x32xf32>
    %344 = arith.mulf %342, %343 : vector<2x32xf32>
    %345 = vector.extract_strided_slice %126 {offsets = [24, 0], sizes = [2, 128], strides = [1, 1]} : vector<28x128xf32> to vector<2x128xf32>
    %cst_84 = arith.constant dense<0.000000e+00> : vector<2x128xf32>
    %346 = tpu.matmul %344, %122, %cst_84 {dimension_numbers = #tpu.dot_dimension_numbers<[1], [0], [0], [1], [0, 0, 1, 1], [], []>} : vector<2x32xf32>, vector<32x128xf32>, vector<2x128xf32> -> vector<2x128xf32>
    %347 = arith.addf %345, %346 : vector<2x128xf32>
    %348 = arith.negf %347 : vector<2x128xf32>
    %349 = math.exp %348 : vector<2x128xf32>
    %cst_85 = arith.constant 1.000000e+00 : f32
    %350 = vector.broadcast %cst_85 : f32 to vector<2x128xf32>
    %351 = arith.addf %350, %349 : vector<2x128xf32>
    %352 = arith.divf %350, %351 : vector<2x128xf32>
    %353 = math.tanh %347 : vector<2x128xf32>
    %354 = vector.extract_strided_slice %352 {offsets = [0, 32], sizes = [2, 32], strides = [1, 1]} : vector<2x128xf32> to vector<2x32xf32>
    %355 = arith.mulf %354, %341 : vector<2x32xf32>
    %356 = vector.extract_strided_slice %352 {offsets = [0, 0], sizes = [2, 32], strides = [1, 1]} : vector<2x128xf32> to vector<2x32xf32>
    %357 = vector.extract_strided_slice %353 {offsets = [0, 64], sizes = [2, 32], strides = [1, 1]} : vector<2x128xf32> to vector<2x32xf32>
    %358 = arith.mulf %356, %357 : vector<2x32xf32>
    %359 = arith.addf %355, %358 : vector<2x32xf32>
    %360 = vector.extract_strided_slice %352 {offsets = [0, 96], sizes = [2, 32], strides = [1, 1]} : vector<2x128xf32> to vector<2x32xf32>
    %361 = math.tanh %359 : vector<2x32xf32>
    %362 = arith.mulf %360, %361 : vector<2x32xf32>
    %363 = vector.extract_strided_slice %126 {offsets = [26, 0], sizes = [2, 128], strides = [1, 1]} : vector<28x128xf32> to vector<2x128xf32>
    %cst_86 = arith.constant dense<0.000000e+00> : vector<2x128xf32>
    %364 = tpu.matmul %362, %122, %cst_86 {dimension_numbers = #tpu.dot_dimension_numbers<[1], [0], [0], [1], [0, 0, 1, 1], [], []>} : vector<2x32xf32>, vector<32x128xf32>, vector<2x128xf32> -> vector<2x128xf32>
    %365 = arith.addf %363, %364 : vector<2x128xf32>
    %366 = arith.negf %365 : vector<2x128xf32>
    %367 = math.exp %366 : vector<2x128xf32>
    %cst_87 = arith.constant 1.000000e+00 : f32
    %368 = vector.broadcast %cst_87 : f32 to vector<2x128xf32>
    %369 = arith.addf %368, %367 : vector<2x128xf32>
    %370 = arith.divf %368, %369 : vector<2x128xf32>
    %371 = math.tanh %365 : vector<2x128xf32>
    %372 = vector.extract_strided_slice %370 {offsets = [0, 32], sizes = [2, 32], strides = [1, 1]} : vector<2x128xf32> to vector<2x32xf32>
    %373 = arith.mulf %372, %359 : vector<2x32xf32>
    %374 = vector.extract_strided_slice %370 {offsets = [0, 0], sizes = [2, 32], strides = [1, 1]} : vector<2x128xf32> to vector<2x32xf32>
    %375 = vector.extract_strided_slice %371 {offsets = [0, 64], sizes = [2, 32], strides = [1, 1]} : vector<2x128xf32> to vector<2x32xf32>
    %376 = arith.mulf %374, %375 : vector<2x32xf32>
    %377 = arith.addf %373, %376 : vector<2x32xf32>
    %378 = vector.extract_strided_slice %370 {offsets = [0, 96], sizes = [2, 32], strides = [1, 1]} : vector<2x128xf32> to vector<2x32xf32>
    %379 = math.tanh %377 : vector<2x32xf32>
    %380 = arith.mulf %378, %379 : vector<2x32xf32>
    %381 = tpu.concatenate %146, %164, %182, %200, %218, %236, %254, %272, %290, %308, %326, %344, %362, %380 in 0 : vector<2x32xf32>, vector<2x32xf32>, vector<2x32xf32>, vector<2x32xf32>, vector<2x32xf32>, vector<2x32xf32>, vector<2x32xf32>, vector<2x32xf32>, vector<2x32xf32>, vector<2x32xf32>, vector<2x32xf32>, vector<2x32xf32>, vector<2x32xf32>, vector<2x32xf32> -> vector<28x32xf32>
    %c0_88 = arith.constant 0 : index
    %c0_89 = arith.constant 0 : index
    %382 = vector.load %arg16[%c0_88, %c0_89] : memref<32x128xf32, #tpu.memory_space<vmem>>, vector<32x128xf32>
    %c0_90 = arith.constant 0 : index
    %c0_91 = arith.constant 0 : index
    %383 = vector.load %arg17[%c0_90, %c0_91] : memref<32x128xf32, #tpu.memory_space<vmem>>, vector<32x128xf32>
    %c0_92 = arith.constant 0 : index
    %c0_93 = arith.constant 0 : index
    %384 = vector.load %arg18[%c0_92, %c0_93] : memref<1x128xf32, #tpu.memory_space<vmem>>, vector<1x128xf32>
    %cst_94 = arith.constant dense<0.000000e+00> : vector<28x128xf32>
    %385 = tpu.matmul %381, %382, %cst_94 {dimension_numbers = #tpu.dot_dimension_numbers<[1], [0], [0], [1], [0, 0, 1, 1], [], []>} : vector<28x32xf32>, vector<32x128xf32>, vector<28x128xf32> -> vector<28x128xf32>
    %386 = vector.broadcast %384 : vector<1x128xf32> to vector<28x128xf32>
    %387 = arith.addf %385, %386 : vector<28x128xf32>
    %cst_95 = arith.constant 0.000000e+00 : f32
    %388 = vector.broadcast %cst_95 : f32 to vector<2x32xf32>
    %cst_96 = arith.constant 0.000000e+00 : f32
    %389 = vector.broadcast %cst_96 : f32 to vector<2x32xf32>
    %390 = vector.extract_strided_slice %387 {offsets = [0, 0], sizes = [2, 128], strides = [1, 1]} : vector<28x128xf32> to vector<2x128xf32>
    %cst_97 = arith.constant dense<0.000000e+00> : vector<2x128xf32>
    %391 = tpu.matmul %388, %383, %cst_97 {dimension_numbers = #tpu.dot_dimension_numbers<[1], [0], [0], [1], [0, 0, 1, 1], [], []>} : vector<2x32xf32>, vector<32x128xf32>, vector<2x128xf32> -> vector<2x128xf32>
    %392 = arith.addf %390, %391 : vector<2x128xf32>
    %393 = arith.negf %392 : vector<2x128xf32>
    %394 = math.exp %393 : vector<2x128xf32>
    %cst_98 = arith.constant 1.000000e+00 : f32
    %395 = vector.broadcast %cst_98 : f32 to vector<2x128xf32>
    %396 = arith.addf %395, %394 : vector<2x128xf32>
    %397 = arith.divf %395, %396 : vector<2x128xf32>
    %398 = math.tanh %392 : vector<2x128xf32>
    %399 = vector.extract_strided_slice %397 {offsets = [0, 32], sizes = [2, 32], strides = [1, 1]} : vector<2x128xf32> to vector<2x32xf32>
    %400 = arith.mulf %399, %389 : vector<2x32xf32>
    %401 = vector.extract_strided_slice %397 {offsets = [0, 0], sizes = [2, 32], strides = [1, 1]} : vector<2x128xf32> to vector<2x32xf32>
    %402 = vector.extract_strided_slice %398 {offsets = [0, 64], sizes = [2, 32], strides = [1, 1]} : vector<2x128xf32> to vector<2x32xf32>
    %403 = arith.mulf %401, %402 : vector<2x32xf32>
    %404 = arith.addf %400, %403 : vector<2x32xf32>
    %405 = vector.extract_strided_slice %397 {offsets = [0, 96], sizes = [2, 32], strides = [1, 1]} : vector<2x128xf32> to vector<2x32xf32>
    %406 = math.tanh %404 : vector<2x32xf32>
    %407 = arith.mulf %405, %406 : vector<2x32xf32>
    %408 = vector.extract_strided_slice %387 {offsets = [2, 0], sizes = [2, 128], strides = [1, 1]} : vector<28x128xf32> to vector<2x128xf32>
    %cst_99 = arith.constant dense<0.000000e+00> : vector<2x128xf32>
    %409 = tpu.matmul %407, %383, %cst_99 {dimension_numbers = #tpu.dot_dimension_numbers<[1], [0], [0], [1], [0, 0, 1, 1], [], []>} : vector<2x32xf32>, vector<32x128xf32>, vector<2x128xf32> -> vector<2x128xf32>
    %410 = arith.addf %408, %409 : vector<2x128xf32>
    %411 = arith.negf %410 : vector<2x128xf32>
    %412 = math.exp %411 : vector<2x128xf32>
    %cst_100 = arith.constant 1.000000e+00 : f32
    %413 = vector.broadcast %cst_100 : f32 to vector<2x128xf32>
    %414 = arith.addf %413, %412 : vector<2x128xf32>
    %415 = arith.divf %413, %414 : vector<2x128xf32>
    %416 = math.tanh %410 : vector<2x128xf32>
    %417 = vector.extract_strided_slice %415 {offsets = [0, 32], sizes = [2, 32], strides = [1, 1]} : vector<2x128xf32> to vector<2x32xf32>
    %418 = arith.mulf %417, %404 : vector<2x32xf32>
    %419 = vector.extract_strided_slice %415 {offsets = [0, 0], sizes = [2, 32], strides = [1, 1]} : vector<2x128xf32> to vector<2x32xf32>
    %420 = vector.extract_strided_slice %416 {offsets = [0, 64], sizes = [2, 32], strides = [1, 1]} : vector<2x128xf32> to vector<2x32xf32>
    %421 = arith.mulf %419, %420 : vector<2x32xf32>
    %422 = arith.addf %418, %421 : vector<2x32xf32>
    %423 = vector.extract_strided_slice %415 {offsets = [0, 96], sizes = [2, 32], strides = [1, 1]} : vector<2x128xf32> to vector<2x32xf32>
    %424 = math.tanh %422 : vector<2x32xf32>
    %425 = arith.mulf %423, %424 : vector<2x32xf32>
    %426 = vector.extract_strided_slice %387 {offsets = [4, 0], sizes = [2, 128], strides = [1, 1]} : vector<28x128xf32> to vector<2x128xf32>
    %cst_101 = arith.constant dense<0.000000e+00> : vector<2x128xf32>
    %427 = tpu.matmul %425, %383, %cst_101 {dimension_numbers = #tpu.dot_dimension_numbers<[1], [0], [0], [1], [0, 0, 1, 1], [], []>} : vector<2x32xf32>, vector<32x128xf32>, vector<2x128xf32> -> vector<2x128xf32>
    %428 = arith.addf %426, %427 : vector<2x128xf32>
    %429 = arith.negf %428 : vector<2x128xf32>
    %430 = math.exp %429 : vector<2x128xf32>
    %cst_102 = arith.constant 1.000000e+00 : f32
    %431 = vector.broadcast %cst_102 : f32 to vector<2x128xf32>
    %432 = arith.addf %431, %430 : vector<2x128xf32>
    %433 = arith.divf %431, %432 : vector<2x128xf32>
    %434 = math.tanh %428 : vector<2x128xf32>
    %435 = vector.extract_strided_slice %433 {offsets = [0, 32], sizes = [2, 32], strides = [1, 1]} : vector<2x128xf32> to vector<2x32xf32>
    %436 = arith.mulf %435, %422 : vector<2x32xf32>
    %437 = vector.extract_strided_slice %433 {offsets = [0, 0], sizes = [2, 32], strides = [1, 1]} : vector<2x128xf32> to vector<2x32xf32>
    %438 = vector.extract_strided_slice %434 {offsets = [0, 64], sizes = [2, 32], strides = [1, 1]} : vector<2x128xf32> to vector<2x32xf32>
    %439 = arith.mulf %437, %438 : vector<2x32xf32>
    %440 = arith.addf %436, %439 : vector<2x32xf32>
    %441 = vector.extract_strided_slice %433 {offsets = [0, 96], sizes = [2, 32], strides = [1, 1]} : vector<2x128xf32> to vector<2x32xf32>
    %442 = math.tanh %440 : vector<2x32xf32>
    %443 = arith.mulf %441, %442 : vector<2x32xf32>
    %444 = vector.extract_strided_slice %387 {offsets = [6, 0], sizes = [2, 128], strides = [1, 1]} : vector<28x128xf32> to vector<2x128xf32>
    %cst_103 = arith.constant dense<0.000000e+00> : vector<2x128xf32>
    %445 = tpu.matmul %443, %383, %cst_103 {dimension_numbers = #tpu.dot_dimension_numbers<[1], [0], [0], [1], [0, 0, 1, 1], [], []>} : vector<2x32xf32>, vector<32x128xf32>, vector<2x128xf32> -> vector<2x128xf32>
    %446 = arith.addf %444, %445 : vector<2x128xf32>
    %447 = arith.negf %446 : vector<2x128xf32>
    %448 = math.exp %447 : vector<2x128xf32>
    %cst_104 = arith.constant 1.000000e+00 : f32
    %449 = vector.broadcast %cst_104 : f32 to vector<2x128xf32>
    %450 = arith.addf %449, %448 : vector<2x128xf32>
    %451 = arith.divf %449, %450 : vector<2x128xf32>
    %452 = math.tanh %446 : vector<2x128xf32>
    %453 = vector.extract_strided_slice %451 {offsets = [0, 32], sizes = [2, 32], strides = [1, 1]} : vector<2x128xf32> to vector<2x32xf32>
    %454 = arith.mulf %453, %440 : vector<2x32xf32>
    %455 = vector.extract_strided_slice %451 {offsets = [0, 0], sizes = [2, 32], strides = [1, 1]} : vector<2x128xf32> to vector<2x32xf32>
    %456 = vector.extract_strided_slice %452 {offsets = [0, 64], sizes = [2, 32], strides = [1, 1]} : vector<2x128xf32> to vector<2x32xf32>
    %457 = arith.mulf %455, %456 : vector<2x32xf32>
    %458 = arith.addf %454, %457 : vector<2x32xf32>
    %459 = vector.extract_strided_slice %451 {offsets = [0, 96], sizes = [2, 32], strides = [1, 1]} : vector<2x128xf32> to vector<2x32xf32>
    %460 = math.tanh %458 : vector<2x32xf32>
    %461 = arith.mulf %459, %460 : vector<2x32xf32>
    %462 = vector.extract_strided_slice %387 {offsets = [8, 0], sizes = [2, 128], strides = [1, 1]} : vector<28x128xf32> to vector<2x128xf32>
    %cst_105 = arith.constant dense<0.000000e+00> : vector<2x128xf32>
    %463 = tpu.matmul %461, %383, %cst_105 {dimension_numbers = #tpu.dot_dimension_numbers<[1], [0], [0], [1], [0, 0, 1, 1], [], []>} : vector<2x32xf32>, vector<32x128xf32>, vector<2x128xf32> -> vector<2x128xf32>
    %464 = arith.addf %462, %463 : vector<2x128xf32>
    %465 = arith.negf %464 : vector<2x128xf32>
    %466 = math.exp %465 : vector<2x128xf32>
    %cst_106 = arith.constant 1.000000e+00 : f32
    %467 = vector.broadcast %cst_106 : f32 to vector<2x128xf32>
    %468 = arith.addf %467, %466 : vector<2x128xf32>
    %469 = arith.divf %467, %468 : vector<2x128xf32>
    %470 = math.tanh %464 : vector<2x128xf32>
    %471 = vector.extract_strided_slice %469 {offsets = [0, 32], sizes = [2, 32], strides = [1, 1]} : vector<2x128xf32> to vector<2x32xf32>
    %472 = arith.mulf %471, %458 : vector<2x32xf32>
    %473 = vector.extract_strided_slice %469 {offsets = [0, 0], sizes = [2, 32], strides = [1, 1]} : vector<2x128xf32> to vector<2x32xf32>
    %474 = vector.extract_strided_slice %470 {offsets = [0, 64], sizes = [2, 32], strides = [1, 1]} : vector<2x128xf32> to vector<2x32xf32>
    %475 = arith.mulf %473, %474 : vector<2x32xf32>
    %476 = arith.addf %472, %475 : vector<2x32xf32>
    %477 = vector.extract_strided_slice %469 {offsets = [0, 96], sizes = [2, 32], strides = [1, 1]} : vector<2x128xf32> to vector<2x32xf32>
    %478 = math.tanh %476 : vector<2x32xf32>
    %479 = arith.mulf %477, %478 : vector<2x32xf32>
    %480 = vector.extract_strided_slice %387 {offsets = [10, 0], sizes = [2, 128], strides = [1, 1]} : vector<28x128xf32> to vector<2x128xf32>
    %cst_107 = arith.constant dense<0.000000e+00> : vector<2x128xf32>
    %481 = tpu.matmul %479, %383, %cst_107 {dimension_numbers = #tpu.dot_dimension_numbers<[1], [0], [0], [1], [0, 0, 1, 1], [], []>} : vector<2x32xf32>, vector<32x128xf32>, vector<2x128xf32> -> vector<2x128xf32>
    %482 = arith.addf %480, %481 : vector<2x128xf32>
    %483 = arith.negf %482 : vector<2x128xf32>
    %484 = math.exp %483 : vector<2x128xf32>
    %cst_108 = arith.constant 1.000000e+00 : f32
    %485 = vector.broadcast %cst_108 : f32 to vector<2x128xf32>
    %486 = arith.addf %485, %484 : vector<2x128xf32>
    %487 = arith.divf %485, %486 : vector<2x128xf32>
    %488 = math.tanh %482 : vector<2x128xf32>
    %489 = vector.extract_strided_slice %487 {offsets = [0, 32], sizes = [2, 32], strides = [1, 1]} : vector<2x128xf32> to vector<2x32xf32>
    %490 = arith.mulf %489, %476 : vector<2x32xf32>
    %491 = vector.extract_strided_slice %487 {offsets = [0, 0], sizes = [2, 32], strides = [1, 1]} : vector<2x128xf32> to vector<2x32xf32>
    %492 = vector.extract_strided_slice %488 {offsets = [0, 64], sizes = [2, 32], strides = [1, 1]} : vector<2x128xf32> to vector<2x32xf32>
    %493 = arith.mulf %491, %492 : vector<2x32xf32>
    %494 = arith.addf %490, %493 : vector<2x32xf32>
    %495 = vector.extract_strided_slice %487 {offsets = [0, 96], sizes = [2, 32], strides = [1, 1]} : vector<2x128xf32> to vector<2x32xf32>
    %496 = math.tanh %494 : vector<2x32xf32>
    %497 = arith.mulf %495, %496 : vector<2x32xf32>
    %498 = vector.extract_strided_slice %387 {offsets = [12, 0], sizes = [2, 128], strides = [1, 1]} : vector<28x128xf32> to vector<2x128xf32>
    %cst_109 = arith.constant dense<0.000000e+00> : vector<2x128xf32>
    %499 = tpu.matmul %497, %383, %cst_109 {dimension_numbers = #tpu.dot_dimension_numbers<[1], [0], [0], [1], [0, 0, 1, 1], [], []>} : vector<2x32xf32>, vector<32x128xf32>, vector<2x128xf32> -> vector<2x128xf32>
    %500 = arith.addf %498, %499 : vector<2x128xf32>
    %501 = arith.negf %500 : vector<2x128xf32>
    %502 = math.exp %501 : vector<2x128xf32>
    %cst_110 = arith.constant 1.000000e+00 : f32
    %503 = vector.broadcast %cst_110 : f32 to vector<2x128xf32>
    %504 = arith.addf %503, %502 : vector<2x128xf32>
    %505 = arith.divf %503, %504 : vector<2x128xf32>
    %506 = math.tanh %500 : vector<2x128xf32>
    %507 = vector.extract_strided_slice %505 {offsets = [0, 32], sizes = [2, 32], strides = [1, 1]} : vector<2x128xf32> to vector<2x32xf32>
    %508 = arith.mulf %507, %494 : vector<2x32xf32>
    %509 = vector.extract_strided_slice %505 {offsets = [0, 0], sizes = [2, 32], strides = [1, 1]} : vector<2x128xf32> to vector<2x32xf32>
    %510 = vector.extract_strided_slice %506 {offsets = [0, 64], sizes = [2, 32], strides = [1, 1]} : vector<2x128xf32> to vector<2x32xf32>
    %511 = arith.mulf %509, %510 : vector<2x32xf32>
    %512 = arith.addf %508, %511 : vector<2x32xf32>
    %513 = vector.extract_strided_slice %505 {offsets = [0, 96], sizes = [2, 32], strides = [1, 1]} : vector<2x128xf32> to vector<2x32xf32>
    %514 = math.tanh %512 : vector<2x32xf32>
    %515 = arith.mulf %513, %514 : vector<2x32xf32>
    %516 = vector.extract_strided_slice %387 {offsets = [14, 0], sizes = [2, 128], strides = [1, 1]} : vector<28x128xf32> to vector<2x128xf32>
    %cst_111 = arith.constant dense<0.000000e+00> : vector<2x128xf32>
    %517 = tpu.matmul %515, %383, %cst_111 {dimension_numbers = #tpu.dot_dimension_numbers<[1], [0], [0], [1], [0, 0, 1, 1], [], []>} : vector<2x32xf32>, vector<32x128xf32>, vector<2x128xf32> -> vector<2x128xf32>
    %518 = arith.addf %516, %517 : vector<2x128xf32>
    %519 = arith.negf %518 : vector<2x128xf32>
    %520 = math.exp %519 : vector<2x128xf32>
    %cst_112 = arith.constant 1.000000e+00 : f32
    %521 = vector.broadcast %cst_112 : f32 to vector<2x128xf32>
    %522 = arith.addf %521, %520 : vector<2x128xf32>
    %523 = arith.divf %521, %522 : vector<2x128xf32>
    %524 = math.tanh %518 : vector<2x128xf32>
    %525 = vector.extract_strided_slice %523 {offsets = [0, 32], sizes = [2, 32], strides = [1, 1]} : vector<2x128xf32> to vector<2x32xf32>
    %526 = arith.mulf %525, %512 : vector<2x32xf32>
    %527 = vector.extract_strided_slice %523 {offsets = [0, 0], sizes = [2, 32], strides = [1, 1]} : vector<2x128xf32> to vector<2x32xf32>
    %528 = vector.extract_strided_slice %524 {offsets = [0, 64], sizes = [2, 32], strides = [1, 1]} : vector<2x128xf32> to vector<2x32xf32>
    %529 = arith.mulf %527, %528 : vector<2x32xf32>
    %530 = arith.addf %526, %529 : vector<2x32xf32>
    %531 = vector.extract_strided_slice %523 {offsets = [0, 96], sizes = [2, 32], strides = [1, 1]} : vector<2x128xf32> to vector<2x32xf32>
    %532 = math.tanh %530 : vector<2x32xf32>
    %533 = arith.mulf %531, %532 : vector<2x32xf32>
    %534 = vector.extract_strided_slice %387 {offsets = [16, 0], sizes = [2, 128], strides = [1, 1]} : vector<28x128xf32> to vector<2x128xf32>
    %cst_113 = arith.constant dense<0.000000e+00> : vector<2x128xf32>
    %535 = tpu.matmul %533, %383, %cst_113 {dimension_numbers = #tpu.dot_dimension_numbers<[1], [0], [0], [1], [0, 0, 1, 1], [], []>} : vector<2x32xf32>, vector<32x128xf32>, vector<2x128xf32> -> vector<2x128xf32>
    %536 = arith.addf %534, %535 : vector<2x128xf32>
    %537 = arith.negf %536 : vector<2x128xf32>
    %538 = math.exp %537 : vector<2x128xf32>
    %cst_114 = arith.constant 1.000000e+00 : f32
    %539 = vector.broadcast %cst_114 : f32 to vector<2x128xf32>
    %540 = arith.addf %539, %538 : vector<2x128xf32>
    %541 = arith.divf %539, %540 : vector<2x128xf32>
    %542 = math.tanh %536 : vector<2x128xf32>
    %543 = vector.extract_strided_slice %541 {offsets = [0, 32], sizes = [2, 32], strides = [1, 1]} : vector<2x128xf32> to vector<2x32xf32>
    %544 = arith.mulf %543, %530 : vector<2x32xf32>
    %545 = vector.extract_strided_slice %541 {offsets = [0, 0], sizes = [2, 32], strides = [1, 1]} : vector<2x128xf32> to vector<2x32xf32>
    %546 = vector.extract_strided_slice %542 {offsets = [0, 64], sizes = [2, 32], strides = [1, 1]} : vector<2x128xf32> to vector<2x32xf32>
    %547 = arith.mulf %545, %546 : vector<2x32xf32>
    %548 = arith.addf %544, %547 : vector<2x32xf32>
    %549 = vector.extract_strided_slice %541 {offsets = [0, 96], sizes = [2, 32], strides = [1, 1]} : vector<2x128xf32> to vector<2x32xf32>
    %550 = math.tanh %548 : vector<2x32xf32>
    %551 = arith.mulf %549, %550 : vector<2x32xf32>
    %552 = vector.extract_strided_slice %387 {offsets = [18, 0], sizes = [2, 128], strides = [1, 1]} : vector<28x128xf32> to vector<2x128xf32>
    %cst_115 = arith.constant dense<0.000000e+00> : vector<2x128xf32>
    %553 = tpu.matmul %551, %383, %cst_115 {dimension_numbers = #tpu.dot_dimension_numbers<[1], [0], [0], [1], [0, 0, 1, 1], [], []>} : vector<2x32xf32>, vector<32x128xf32>, vector<2x128xf32> -> vector<2x128xf32>
    %554 = arith.addf %552, %553 : vector<2x128xf32>
    %555 = arith.negf %554 : vector<2x128xf32>
    %556 = math.exp %555 : vector<2x128xf32>
    %cst_116 = arith.constant 1.000000e+00 : f32
    %557 = vector.broadcast %cst_116 : f32 to vector<2x128xf32>
    %558 = arith.addf %557, %556 : vector<2x128xf32>
    %559 = arith.divf %557, %558 : vector<2x128xf32>
    %560 = math.tanh %554 : vector<2x128xf32>
    %561 = vector.extract_strided_slice %559 {offsets = [0, 32], sizes = [2, 32], strides = [1, 1]} : vector<2x128xf32> to vector<2x32xf32>
    %562 = arith.mulf %561, %548 : vector<2x32xf32>
    %563 = vector.extract_strided_slice %559 {offsets = [0, 0], sizes = [2, 32], strides = [1, 1]} : vector<2x128xf32> to vector<2x32xf32>
    %564 = vector.extract_strided_slice %560 {offsets = [0, 64], sizes = [2, 32], strides = [1, 1]} : vector<2x128xf32> to vector<2x32xf32>
    %565 = arith.mulf %563, %564 : vector<2x32xf32>
    %566 = arith.addf %562, %565 : vector<2x32xf32>
    %567 = vector.extract_strided_slice %559 {offsets = [0, 96], sizes = [2, 32], strides = [1, 1]} : vector<2x128xf32> to vector<2x32xf32>
    %568 = math.tanh %566 : vector<2x32xf32>
    %569 = arith.mulf %567, %568 : vector<2x32xf32>
    %570 = vector.extract_strided_slice %387 {offsets = [20, 0], sizes = [2, 128], strides = [1, 1]} : vector<28x128xf32> to vector<2x128xf32>
    %cst_117 = arith.constant dense<0.000000e+00> : vector<2x128xf32>
    %571 = tpu.matmul %569, %383, %cst_117 {dimension_numbers = #tpu.dot_dimension_numbers<[1], [0], [0], [1], [0, 0, 1, 1], [], []>} : vector<2x32xf32>, vector<32x128xf32>, vector<2x128xf32> -> vector<2x128xf32>
    %572 = arith.addf %570, %571 : vector<2x128xf32>
    %573 = arith.negf %572 : vector<2x128xf32>
    %574 = math.exp %573 : vector<2x128xf32>
    %cst_118 = arith.constant 1.000000e+00 : f32
    %575 = vector.broadcast %cst_118 : f32 to vector<2x128xf32>
    %576 = arith.addf %575, %574 : vector<2x128xf32>
    %577 = arith.divf %575, %576 : vector<2x128xf32>
    %578 = math.tanh %572 : vector<2x128xf32>
    %579 = vector.extract_strided_slice %577 {offsets = [0, 32], sizes = [2, 32], strides = [1, 1]} : vector<2x128xf32> to vector<2x32xf32>
    %580 = arith.mulf %579, %566 : vector<2x32xf32>
    %581 = vector.extract_strided_slice %577 {offsets = [0, 0], sizes = [2, 32], strides = [1, 1]} : vector<2x128xf32> to vector<2x32xf32>
    %582 = vector.extract_strided_slice %578 {offsets = [0, 64], sizes = [2, 32], strides = [1, 1]} : vector<2x128xf32> to vector<2x32xf32>
    %583 = arith.mulf %581, %582 : vector<2x32xf32>
    %584 = arith.addf %580, %583 : vector<2x32xf32>
    %585 = vector.extract_strided_slice %577 {offsets = [0, 96], sizes = [2, 32], strides = [1, 1]} : vector<2x128xf32> to vector<2x32xf32>
    %586 = math.tanh %584 : vector<2x32xf32>
    %587 = arith.mulf %585, %586 : vector<2x32xf32>
    %588 = vector.extract_strided_slice %387 {offsets = [22, 0], sizes = [2, 128], strides = [1, 1]} : vector<28x128xf32> to vector<2x128xf32>
    %cst_119 = arith.constant dense<0.000000e+00> : vector<2x128xf32>
    %589 = tpu.matmul %587, %383, %cst_119 {dimension_numbers = #tpu.dot_dimension_numbers<[1], [0], [0], [1], [0, 0, 1, 1], [], []>} : vector<2x32xf32>, vector<32x128xf32>, vector<2x128xf32> -> vector<2x128xf32>
    %590 = arith.addf %588, %589 : vector<2x128xf32>
    %591 = arith.negf %590 : vector<2x128xf32>
    %592 = math.exp %591 : vector<2x128xf32>
    %cst_120 = arith.constant 1.000000e+00 : f32
    %593 = vector.broadcast %cst_120 : f32 to vector<2x128xf32>
    %594 = arith.addf %593, %592 : vector<2x128xf32>
    %595 = arith.divf %593, %594 : vector<2x128xf32>
    %596 = math.tanh %590 : vector<2x128xf32>
    %597 = vector.extract_strided_slice %595 {offsets = [0, 32], sizes = [2, 32], strides = [1, 1]} : vector<2x128xf32> to vector<2x32xf32>
    %598 = arith.mulf %597, %584 : vector<2x32xf32>
    %599 = vector.extract_strided_slice %595 {offsets = [0, 0], sizes = [2, 32], strides = [1, 1]} : vector<2x128xf32> to vector<2x32xf32>
    %600 = vector.extract_strided_slice %596 {offsets = [0, 64], sizes = [2, 32], strides = [1, 1]} : vector<2x128xf32> to vector<2x32xf32>
    %601 = arith.mulf %599, %600 : vector<2x32xf32>
    %602 = arith.addf %598, %601 : vector<2x32xf32>
    %603 = vector.extract_strided_slice %595 {offsets = [0, 96], sizes = [2, 32], strides = [1, 1]} : vector<2x128xf32> to vector<2x32xf32>
    %604 = math.tanh %602 : vector<2x32xf32>
    %605 = arith.mulf %603, %604 : vector<2x32xf32>
    %606 = vector.extract_strided_slice %387 {offsets = [24, 0], sizes = [2, 128], strides = [1, 1]} : vector<28x128xf32> to vector<2x128xf32>
    %cst_121 = arith.constant dense<0.000000e+00> : vector<2x128xf32>
    %607 = tpu.matmul %605, %383, %cst_121 {dimension_numbers = #tpu.dot_dimension_numbers<[1], [0], [0], [1], [0, 0, 1, 1], [], []>} : vector<2x32xf32>, vector<32x128xf32>, vector<2x128xf32> -> vector<2x128xf32>
    %608 = arith.addf %606, %607 : vector<2x128xf32>
    %609 = arith.negf %608 : vector<2x128xf32>
    %610 = math.exp %609 : vector<2x128xf32>
    %cst_122 = arith.constant 1.000000e+00 : f32
    %611 = vector.broadcast %cst_122 : f32 to vector<2x128xf32>
    %612 = arith.addf %611, %610 : vector<2x128xf32>
    %613 = arith.divf %611, %612 : vector<2x128xf32>
    %614 = math.tanh %608 : vector<2x128xf32>
    %615 = vector.extract_strided_slice %613 {offsets = [0, 32], sizes = [2, 32], strides = [1, 1]} : vector<2x128xf32> to vector<2x32xf32>
    %616 = arith.mulf %615, %602 : vector<2x32xf32>
    %617 = vector.extract_strided_slice %613 {offsets = [0, 0], sizes = [2, 32], strides = [1, 1]} : vector<2x128xf32> to vector<2x32xf32>
    %618 = vector.extract_strided_slice %614 {offsets = [0, 64], sizes = [2, 32], strides = [1, 1]} : vector<2x128xf32> to vector<2x32xf32>
    %619 = arith.mulf %617, %618 : vector<2x32xf32>
    %620 = arith.addf %616, %619 : vector<2x32xf32>
    %621 = vector.extract_strided_slice %613 {offsets = [0, 96], sizes = [2, 32], strides = [1, 1]} : vector<2x128xf32> to vector<2x32xf32>
    %622 = math.tanh %620 : vector<2x32xf32>
    %623 = arith.mulf %621, %622 : vector<2x32xf32>
    %624 = vector.extract_strided_slice %387 {offsets = [26, 0], sizes = [2, 128], strides = [1, 1]} : vector<28x128xf32> to vector<2x128xf32>
    %cst_123 = arith.constant dense<0.000000e+00> : vector<2x128xf32>
    %625 = tpu.matmul %623, %383, %cst_123 {dimension_numbers = #tpu.dot_dimension_numbers<[1], [0], [0], [1], [0, 0, 1, 1], [], []>} : vector<2x32xf32>, vector<32x128xf32>, vector<2x128xf32> -> vector<2x128xf32>
    %626 = arith.addf %624, %625 : vector<2x128xf32>
    %627 = arith.negf %626 : vector<2x128xf32>
    %628 = math.exp %627 : vector<2x128xf32>
    %cst_124 = arith.constant 1.000000e+00 : f32
    %629 = vector.broadcast %cst_124 : f32 to vector<2x128xf32>
    %630 = arith.addf %629, %628 : vector<2x128xf32>
    %631 = arith.divf %629, %630 : vector<2x128xf32>
    %632 = math.tanh %626 : vector<2x128xf32>
    %633 = vector.extract_strided_slice %631 {offsets = [0, 32], sizes = [2, 32], strides = [1, 1]} : vector<2x128xf32> to vector<2x32xf32>
    %634 = arith.mulf %633, %620 : vector<2x32xf32>
    %635 = vector.extract_strided_slice %631 {offsets = [0, 0], sizes = [2, 32], strides = [1, 1]} : vector<2x128xf32> to vector<2x32xf32>
    %636 = vector.extract_strided_slice %632 {offsets = [0, 64], sizes = [2, 32], strides = [1, 1]} : vector<2x128xf32> to vector<2x32xf32>
    %637 = arith.mulf %635, %636 : vector<2x32xf32>
    %638 = arith.addf %634, %637 : vector<2x32xf32>
    %639 = vector.extract_strided_slice %631 {offsets = [0, 96], sizes = [2, 32], strides = [1, 1]} : vector<2x128xf32> to vector<2x32xf32>
    %640 = math.tanh %638 : vector<2x32xf32>
    %641 = arith.mulf %639, %640 : vector<2x32xf32>
    %c0_125 = arith.constant 0 : index
    %c0_126 = arith.constant 0 : index
    %642 = vector.load %arg11[%c0_125, %c0_126] : memref<32x3xf32, #tpu.memory_space<vmem>>, vector<32x3xf32>
    %cst_127 = arith.constant dense<0.000000e+00> : vector<2x3xf32>
    %643 = tpu.matmul %641, %642, %cst_127 {dimension_numbers = #tpu.dot_dimension_numbers<[1], [0], [0], [1], [0, 0, 1, 1], [], []>} : vector<2x32xf32>, vector<32x3xf32>, vector<2x3xf32> -> vector<2x3xf32>
    %c0_128 = arith.constant 0 : index
    %c0_129 = arith.constant 0 : index
    %644 = vector.load %arg12[%c0_128, %c0_129] : memref<1x3xf32, #tpu.memory_space<vmem>>, vector<1x3xf32>
    %645 = vector.broadcast %644 : vector<1x3xf32> to vector<2x3xf32>
    %646 = arith.addf %643, %645 : vector<2x3xf32>
    %c0_130 = arith.constant 0 : index
    %c0_131 = arith.constant 0 : index
    %647 = vector.load %arg19[%c0_130, %c0_131] : memref<2x3xf32, #tpu.memory_space<vmem>>, vector<2x3xf32>
    tpu.vector_store %arg19[%c0_130, %c0_131], %646 {strides = array<i32>} : memref<2x3xf32, #tpu.memory_space<vmem>>, vector<2x3xf32>,
    return
  }
}

</mosaic_0001>

<llo_original>
// kernel: tpu_custom_call.1
$region0: #{tpu_custom_call.1}
  #allocation0 [shape = 'u32[]', space=smem, size = 0x4, offset = 0x4, fixed_abs, tag = 'smem constant byte address 0x4 - core index']
  #allocation1 [shape = 'u32[144,128]{1,0:T(1,128)}', space=vmem, size = 0x12000, scoped, tag = 'internal scratch']
  %s0 = inlined_call_operand.vmem [shape: f32[16,2,4], index: 0, kind: input, shape index: {}]
  %s1 = inlined_call_operand.vmem [shape: f32[12,64], index: 1, kind: input, shape index: {}]
  %s2 = inlined_call_operand.vmem [shape: f32[1,64], index: 2, kind: input, shape index: {}]
  %s3 = inlined_call_operand.vmem [shape: f32[192,32], index: 3, kind: input, shape index: {}]
  %s4 = inlined_call_operand.vmem [shape: f32[1,32], index: 4, kind: input, shape index: {}]
  %s5 = inlined_call_operand.vmem [shape: f32[1,32], index: 5, kind: input, shape index: {}]
  %s6 = inlined_call_operand.vmem [shape: f32[1,32], index: 6, kind: input, shape index: {}]
  %s7 = inlined_call_operand.vmem [shape: f32[96,32], index: 7, kind: input, shape index: {}]
  %s8 = inlined_call_operand.vmem [shape: f32[1,32], index: 8, kind: input, shape index: {}]
  %s9 = inlined_call_operand.vmem [shape: f32[1,32], index: 9, kind: input, shape index: {}]
  %s10 = inlined_call_operand.vmem [shape: f32[1,32], index: 10, kind: input, shape index: {}]
  %s11 = inlined_call_operand.vmem [shape: f32[32,3], index: 11, kind: input, shape index: {}]
  %s12 = inlined_call_operand.vmem [shape: f32[1,3], index: 12, kind: input, shape index: {}]
  %s13 = inlined_call_operand.vmem [shape: f32[32,128], index: 13, kind: input, shape index: {}]
  %s14 = inlined_call_operand.vmem [shape: f32[32,128], index: 14, kind: input, shape index: {}]
  %s15 = inlined_call_operand.vmem [shape: f32[1,128], index: 15, kind: input, shape index: {}]
  %s16 = inlined_call_operand.vmem [shape: f32[32,128], index: 16, kind: input, shape index: {}]
  %s17 = inlined_call_operand.vmem [shape: f32[32,128], index: 17, kind: input, shape index: {}]
  %s18 = inlined_call_operand.vmem [shape: f32[1,128], index: 18, kind: input, shape index: {}]
  %s19 = inlined_call_operand.hbm [shape: f32[2,3], index: 19, kind: output, shape index: {}]
  %s20 = sld [smem:[#allocation0]]
  $region86: #{tpu_custom_call.1} parent=0
    _
  %s22 = ssub.s32 1, %s20
  %s23 = scalar_select 0, %s22, %s20
  $region1: #{tpu_custom_call.1} parent=0
    #allocation2 [shape = 'u8[1024]{0}', space=vmem, size = 0x400, scoped, tag = 'output window, operand 0, single buffered']
    #allocation3 [shape = 's32[1]{0}', space=sflag, size = 0x4, scoped, tag = 'scoped memory for tpu_custom_call.1']
    %24 = vsyncpa [#allocation3], 0
    // Predicated region
    $region2: #{tpu_custom_call.1} parent=1 // pred_check
      _
    $region3: #{tpu_custom_call.1} parent=1 // pred_check_branch
      %26 = sbr.rel (0) target = $region5
    $region4: #{tpu_custom_call.1} parent=1 // pred_region
      _
    $region5: #{tpu_custom_call.1} parent=1 // pred_fallthru
      _
    // Predicated region
    $region6: #{tpu_custom_call.1} parent=1 // pred_check
      _
    $region7: #{tpu_custom_call.1} parent=1 // pred_check_branch
      %28 = sbr.rel (0) target = $region9
    $region8: #{tpu_custom_call.1} parent=1 // pred_region
      _
    $region9: #{tpu_custom_call.1} parent=1 // pred_fallthru
      _
    // Predicated region
    $region10: #{tpu_custom_call.1} parent=1 // pred_check
      _
    $region11: #{tpu_custom_call.1} parent=1 // pred_check_branch
      %30 = sbr.rel (0) target = $region13
    $region12: #{tpu_custom_call.1} parent=1 // pred_region
      _
    $region13: #{tpu_custom_call.1} parent=1 // pred_fallthru
      _
    // Predicated region
    $region14: #{tpu_custom_call.1} parent=1 // pred_check
      _
    $region15: #{tpu_custom_call.1} parent=1 // pred_check_branch
      %32 = sbr.rel (0) target = $region17
    $region16: #{tpu_custom_call.1} parent=1 // pred_region
      _
    $region17: #{tpu_custom_call.1} parent=1 // pred_fallthru
      _
    // Predicated region
    $region18: #{tpu_custom_call.1} parent=1 // pred_check
      _
    $region19: #{tpu_custom_call.1} parent=1 // pred_check_branch
      %34 = sbr.rel (0) target = $region21
    $region20: #{tpu_custom_call.1} parent=1 // pred_region
      _
    $region21: #{tpu_custom_call.1} parent=1 // pred_fallthru
      _
    // Predicated region
    $region22: #{tpu_custom_call.1} parent=1 // pred_check
      _
    $region23: #{tpu_custom_call.1} parent=1 // pred_check_branch
      %36 = sbr.rel (0) target = $region25
    $region24: #{tpu_custom_call.1} parent=1 // pred_region
      _
    $region25: #{tpu_custom_call.1} parent=1 // pred_fallthru
      _
    // Predicated region
    $region26: #{tpu_custom_call.1} parent=1 // pred_check
      _
    $region27: #{tpu_custom_call.1} parent=1 // pred_check_branch
      %38 = sbr.rel (0) target = $region29
    $region28: #{tpu_custom_call.1} parent=1 // pred_region
      _
    $region29: #{tpu_custom_call.1} parent=1 // pred_fallthru
      _
    // Predicated region
    $region30: #{tpu_custom_call.1} parent=1 // pred_check
      _
    $region31: #{tpu_custom_call.1} parent=1 // pred_check_branch
      %40 = sbr.rel (0) target = $region33
    $region32: #{tpu_custom_call.1} parent=1 // pred_region
      _
    $region33: #{tpu_custom_call.1} parent=1 // pred_fallthru
      _
    // Predicated region
    $region34: #{tpu_custom_call.1} parent=1 // pred_check
      _
    $region35: #{tpu_custom_call.1} parent=1 // pred_check_branch
      %42 = sbr.rel (0) target = $region37
    $region36: #{tpu_custom_call.1} parent=1 // pred_region
      _
    $region37: #{tpu_custom_call.1} parent=1 // pred_fallthru
      _
    // Predicated region
    $region38: #{tpu_custom_call.1} parent=1 // pred_check
      _
    $region39: #{tpu_custom_call.1} parent=1 // pred_check_branch
      %44 = sbr.rel (0) target = $region41
    $region40: #{tpu_custom_call.1} parent=1 // pred_region
      _
    $region41: #{tpu_custom_call.1} parent=1 // pred_fallthru
      _
    // Predicated region
    $region42: #{tpu_custom_call.1} parent=1 // pred_check
      _
    $region43: #{tpu_custom_call.1} parent=1 // pred_check_branch
      %46 = sbr.rel (0) target = $region45
    $region44: #{tpu_custom_call.1} parent=1 // pred_region
      _
    $region45: #{tpu_custom_call.1} parent=1 // pred_fallthru
      _
    // Predicated region
    $region46: #{tpu_custom_call.1} parent=1 // pred_check
      _
    $region47: #{tpu_custom_call.1} parent=1 // pred_check_branch
      %48 = sbr.rel (0) target = $region49
    $region48: #{tpu_custom_call.1} parent=1 // pred_region
      _
    $region49: #{tpu_custom_call.1} parent=1 // pred_fallthru
      _
    // Predicated region
    $region50: #{tpu_custom_call.1} parent=1 // pred_check
      _
    $region51: #{tpu_custom_call.1} parent=1 // pred_check_branch
      %50 = sbr.rel (0) target = $region53
    $region52: #{tpu_custom_call.1} parent=1 // pred_region
      _
    $region53: #{tpu_custom_call.1} parent=1 // pred_fallthru
      _
    // Predicated region
    $region54: #{tpu_custom_call.1} parent=1 // pred_check
      _
    $region55: #{tpu_custom_call.1} parent=1 // pred_check_branch
      %52 = sbr.rel (0) target = $region57
    $region56: #{tpu_custom_call.1} parent=1 // pred_region
      _
    $region57: #{tpu_custom_call.1} parent=1 // pred_fallthru
      _
    // Predicated region
    $region58: #{tpu_custom_call.1} parent=1 // pred_check
      _
    $region59: #{tpu_custom_call.1} parent=1 // pred_check_branch
      %54 = sbr.rel (0) target = $region61
    $region60: #{tpu_custom_call.1} parent=1 // pred_region
      _
    $region61: #{tpu_custom_call.1} parent=1 // pred_fallthru
      _
    // Predicated region
    $region62: #{tpu_custom_call.1} parent=1 // pred_check
      _
    $region63: #{tpu_custom_call.1} parent=1 // pred_check_branch
      %56 = sbr.rel (0) target = $region65
    $region64: #{tpu_custom_call.1} parent=1 // pred_region
      _
    $region65: #{tpu_custom_call.1} parent=1 // pred_fallthru
      _
    // Predicated region
    $region66: #{tpu_custom_call.1} parent=1 // pred_check
      _
    $region67: #{tpu_custom_call.1} parent=1 // pred_check_branch
      %58 = sbr.rel (0) target = $region69
    $region68: #{tpu_custom_call.1} parent=1 // pred_region
      _
    $region69: #{tpu_custom_call.1} parent=1 // pred_fallthru
      _
    // Predicated region
    $region70: #{tpu_custom_call.1} parent=1 // pred_check
      _
    $region71: #{tpu_custom_call.1} parent=1 // pred_check_branch
      %60 = sbr.rel (0) target = $region73
    $region72: #{tpu_custom_call.1} parent=1 // pred_region
      _
    $region73: #{tpu_custom_call.1} parent=1 // pred_fallthru
      _
    // Predicated region
    $region74: #{tpu_custom_call.1} parent=1 // pred_check
      _
    $region75: #{tpu_custom_call.1} parent=1 // pred_check_branch
      %62 = sbr.rel (0) target = $region77
    $region76: #{tpu_custom_call.1} parent=1 // pred_region
      _
    $region77: #{tpu_custom_call.1} parent=1 // pred_fallthru
      _
    %v63 = vld [vmem:[%s0] sm:$0x3]
    %v64 = vld [vmem:[%s0 + $0x2] sm:$0x3]
    %v65 = vld [vmem:[%s0 + $0x4] sm:$0x3]
    %v66 = vld [vmem:[%s0 + $0x6] sm:$0x3]
    %v67 = vld [vmem:[%s0 + $0x8] sm:$0x3]
    %v68 = vld [vmem:[%s0 + $0xa] sm:$0x3]
    %v69 = vld [vmem:[%s0 + $0xc] sm:$0x3]
    %v70 = vld [vmem:[%s0 + $0xe] sm:$0x3]
    %v71 = vld [vmem:[%s0 + $0x10] sm:$0x3]
    %v72 = vld [vmem:[%s0 + $0x12] sm:$0x3]
    %v73 = vld [vmem:[%s0 + $0x14] sm:$0x3]
    %v74 = vld [vmem:[%s0 + $0x16] sm:$0x3]
    %v75 = vld [vmem:[%s0 + $0x18] sm:$0x3]
    %v76 = vld [vmem:[%s0 + $0x1a] sm:$0x3]
    %v77 = vld [vmem:[%s0 + $0x1c] sm:$0x3]
    %v78 = vld [vmem:[%s0 + $0x1e] sm:$0x3]
    %93 = vrot.lane.b32.xlu0 %v64, 4
    %v94 = vpop.permute.xlu0 %93
    %95 = vrot.lane.b32.xlu0 %v65, 4
    %v96 = vpop.permute.xlu0 %95
    %97 = vrot.lane.b32.xlu0 %v66, 4
    %v98 = vpop.permute.xlu0 %97
    %99 = vrot.lane.b32.xlu0 %v67, 4
    %v100 = vpop.permute.xlu0 %99
    %101 = vrot.lane.b32.xlu0 %v68, 4
    %v102 = vpop.permute.xlu0 %101
    %103 = vrot.lane.b32.xlu0 %v69, 4
    %v104 = vpop.permute.xlu0 %103
    %105 = vrot.lane.b32.xlu0 %v70, 4
    %v106 = vpop.permute.xlu0 %105
    %107 = vrot.lane.b32.xlu0 %v71, 4
    %v108 = vpop.permute.xlu0 %107
    %109 = vrot.lane.b32.xlu0 %v72, 4
    %v110 = vpop.permute.xlu0 %109
    %111 = vrot.lane.b32.xlu0 %v73, 4
    %v112 = vpop.permute.xlu0 %111
    %113 = vrot.lane.b32.xlu0 %v74, 4
    %v114 = vpop.permute.xlu0 %113
    %115 = vrot.lane.b32.xlu0 %v75, 4
    %v116 = vpop.permute.xlu0 %115
    %117 = vrot.lane.b32.xlu0 %v76, 4
    %v118 = vpop.permute.xlu0 %117
    %119 = vrot.lane.b32.xlu0 %v77, 4
    %v120 = vpop.permute.xlu0 %119
    %136 = vrot.lane.b32.xlu0 %v65, 8
    %v137 = vpop.permute.xlu0 %136
    %138 = vrot.lane.b32.xlu0 %v66, 8
    %v139 = vpop.permute.xlu0 %138
    %140 = vrot.lane.b32.xlu0 %v67, 8
    %v141 = vpop.permute.xlu0 %140
    %142 = vrot.lane.b32.xlu0 %v68, 8
    %v143 = vpop.permute.xlu0 %142
    %144 = vrot.lane.b32.xlu0 %v69, 8
    %v145 = vpop.permute.xlu0 %144
    %146 = vrot.lane.b32.xlu0 %v70, 8
    %v147 = vpop.permute.xlu0 %146
    %148 = vrot.lane.b32.xlu0 %v71, 8
    %v149 = vpop.permute.xlu0 %148
    %150 = vrot.lane.b32.xlu0 %v72, 8
    %v151 = vpop.permute.xlu0 %150
    %152 = vrot.lane.b32.xlu0 %v73, 8
    %v153 = vpop.permute.xlu0 %152
    %154 = vrot.lane.b32.xlu0 %v74, 8
    %v155 = vpop.permute.xlu0 %154
    %156 = vrot.lane.b32.xlu0 %v75, 8
    %v157 = vpop.permute.xlu0 %156
    %158 = vrot.lane.b32.xlu0 %v76, 8
    %v159 = vpop.permute.xlu0 %158
    %160 = vrot.lane.b32.xlu0 %v77, 8
    %v161 = vpop.permute.xlu0 %160
    %162 = vrot.lane.b32.xlu0 %v78, 8
    %v163 = vpop.permute.xlu0 %162
    %vm178 = vcmask 31744
    %v179 = vsel %vm178, %v63, %v94
    %v180 = vsel %vm178, %v64, %v96
    %v181 = vsel %vm178, %v65, %v98
    %v182 = vsel %vm178, %v66, %v100
    %v183 = vsel %vm178, %v67, %v102
    %v184 = vsel %vm178, %v68, %v104
    %v185 = vsel %vm178, %v69, %v106
    %v186 = vsel %vm178, %v70, %v108
    %v187 = vsel %vm178, %v71, %v110
    %v188 = vsel %vm178, %v72, %v112
    %v189 = vsel %vm178, %v73, %v114
    %v190 = vsel %vm178, %v74, %v116
    %v191 = vsel %vm178, %v75, %v118
    %v192 = vsel %vm178, %v76, %v120
    %vm193 = vcmask 64512
    %v194 = vsel %vm193, %v179, %v137
    %v195 = vsel %vm193, %v180, %v139
    %v196 = vsel %vm193, %v181, %v141
    %v197 = vsel %vm193, %v182, %v143
    %v198 = vsel %vm193, %v183, %v145
    %v199 = vsel %vm193, %v184, %v147
    %v200 = vsel %vm193, %v185, %v149
    %v201 = vsel %vm193, %v186, %v151
    %v202 = vsel %vm193, %v187, %v153
    %v203 = vsel %vm193, %v188, %v155
    %v204 = vsel %vm193, %v189, %v157
    %v205 = vsel %vm193, %v190, %v159
    %v206 = vsel %vm193, %v191, %v161
    %v207 = vsel %vm193, %v192, %v163
    %v208 = vld [vmem:[%s1] sm:$0xff]
    %v209 = vld [vmem:[%s1 + $0x8] sm:$0xf]
    %v210 = vld [vmem:[%s2] sm:$0x1]
    %v212 = vlaneseq
    %v213 = vshrl.u32 %v212, 7
    %v214 = vsub.s32 0, %v213
    %v215 = vrot.slane %v210, %v214
    %v231 = vcombine.low %v194, %v195
    %v232 = vcombine.low %v196, %v197
    %v234 = vunpack.c.l.s4 1983009808
    %v235 = vunpack.c.0.s8 %v234
    %v236 = vlaneseq
    %v237 = vshrl.u32 %v236, 7
    %v238 = vsub.s32 %v235, %v237
    %v239 = vrot.slane %v231, %v238
    %v241 = vunpack.c.l.s4 1983009808
    %v242 = vunpack.c.0.s8 %v241
    %v243 = vlaneseq
    %v244 = vshrl.u32 %v243, 7
    %v245 = vsub.s32 %v242, %v244
    %v246 = vrot.slane %v232, %v245
    %v247 = vcombine.low %v239, %v246
    %v248 = vcombine.low %v198, %v199
    %v249 = vcombine.low %v200, %v201
    %v251 = vunpack.c.l.s4 1983009808
    %v252 = vunpack.c.0.s8 %v251
    %v253 = vlaneseq
    %v254 = vshrl.u32 %v253, 7
    %v255 = vsub.s32 %v252, %v254
    %v256 = vrot.slane %v248, %v255
    %v258 = vunpack.c.l.s4 1983009808
    %v259 = vunpack.c.0.s8 %v258
    %v260 = vlaneseq
    %v261 = vshrl.u32 %v260, 7
    %v262 = vsub.s32 %v259, %v261
    %v263 = vrot.slane %v249, %v262
    %v264 = vcombine.low %v256, %v263
    %v265 = vcombine.low %v202, %v203
    %v266 = vcombine.low %v204, %v205
    %v268 = vunpack.c.l.s4 1983009808
    %v269 = vunpack.c.0.s8 %v268
    %v270 = vlaneseq
    %v271 = vshrl.u32 %v270, 7
    %v272 = vsub.s32 %v269, %v271
    %v273 = vrot.slane %v265, %v272
    %v275 = vunpack.c.l.s4 1983009808
    %v276 = vunpack.c.0.s8 %v275
    %v277 = vlaneseq
    %v278 = vshrl.u32 %v277, 7
    %v279 = vsub.s32 %v276, %v278
    %v280 = vrot.slane %v266, %v279
    %v281 = vcombine.low %v273, %v280
    %v282 = vcombine.low %v206, %v207
    %v284 = vunpack.c.l.s4 1983009808
    %v285 = vunpack.c.0.s8 %v284
    %v286 = vlaneseq
    %v287 = vshrl.u32 %v286, 7
    %v288 = vsub.s32 %v285, %v287
    %v289 = vrot.slane %v282, %v288
    %vm290 = vcmask 97280
    %v291 = vsel %vm290, %v247, 0
    %v293 = vsel %vm290, %v264, 0
    %v295 = vsel %vm290, %v281, 0
    %v297 = vsel %vm290, %v289, 0
    %vm299 = vcmask 1043456
    %v301 = vsel %vm299, %v209, 0
    %303 = vmatprep.subr.mxu0 0.0
    %304 = vmatpush1.msra.mxu0 %v208
    %305 = vmatprep.subr.mxu0 0.0
    %306 = vmatpush1.msra.mxu0 %v301
    %307 = vmatprep.subr.mxu0 0.0
    %308 = vmatpush1.msra.mxu0 0.0
    %309 = vmatprep.subr.mxu0 0.0
    %310 = vmatpush1.msra.mxu0 0.0
    %311 = vmatprep.subr.mxu0 0.0
    %312 = vmatpush1.msra.mxu0 0.0
    %313 = vmatprep.subr.mxu0 0.0
    %314 = vmatpush1.msra.mxu0 0.0
    %315 = vmatprep.subr.mxu0 0.0
    %316 = vmatpush1.msra.mxu0 0.0
    %317 = vmatprep.subr.mxu0 0.0
    %318 = vmatpush1.msra.mxu0 0.0
    %319 = vmatprep.subr.mxu0 0.0
    %320 = vmatpush1.msra.mxu0 0.0
    %321 = vmatprep.subr.mxu0 0.0
    %322 = vmatpush1.msra.mxu0 0.0
    %323 = vmatprep.subr.mxu0 0.0
    %324 = vmatpush1.msra.mxu0 0.0
    %325 = vmatprep.subr.mxu0 0.0
    %326 = vmatpush1.msra.mxu0 0.0
    %327 = vmatprep.subr.mxu0 0.0
    %328 = vmatpush1.msra.mxu0 0.0
    %329 = vmatprep.subr.mxu0 0.0
    %330 = vmatpush1.msra.mxu0 0.0
    %331 = vmatprep.subr.mxu0 0.0
    %332 = vmatpush1.msra.mxu0 0.0
    %333 = vmatprep.subr.mxu0 0.0
    %334 = vmatpush1.msra.mxu0 0.0
    %335 = vmatprep.subr.mxu0 0.0
    %336 = vmatpush1.msra.mxu0 0.0
    %337 = vmatprep.subr.mxu0 0.0
    %338 = vmatpush1.msra.mxu0 0.0
    %339 = vmatprep.subr.mxu0 0.0
    %340 = vmatpush1.msra.mxu0 0.0
    %341 = vmatprep.subr.mxu0 0.0
    %342 = vmatpush1.msra.mxu0 0.0
    %343 = vmatprep.subr.mxu0 0.0
    %344 = vmatpush1.msra.mxu0 0.0
    %345 = vmatprep.subr.mxu0 0.0
    %346 = vmatpush1.msra.mxu0 0.0
    %347 = vmatprep.subr.mxu0 0.0
    %348 = vmatpush1.msra.mxu0 0.0
    %349 = vmatprep.subr.mxu0 0.0
    %350 = vmatpush1.msra.mxu0 0.0
    %351 = vmatprep.subr.mxu0 0.0
    %352 = vmatpush1.msra.mxu0 0.0
    %353 = vmatprep.subr.mxu0 0.0
    %354 = vmatpush1.msra.mxu0 0.0
    %355 = vmatprep.subr.mxu0 0.0
    %356 = vmatpush1.msra.mxu0 0.0
    %357 = vmatprep.subr.mxu0 0.0
    %358 = vmatpush1.msra.mxu0 0.0
    %359 = vmatprep.subr.mxu0 0.0
    %360 = vmatpush1.msra.mxu0 0.0
    %361 = vmatprep.subr.mxu0 0.0
    %362 = vmatpush1.msra.mxu0 0.0
    %363 = vmatprep.subr.mxu0 0.0
    %364 = vmatpush1.msra.mxu0 0.0
    %365 = vmatprep.subr.mxu0 0.0
    %366 = vmatpush1.msra.mxu0 0.0
    %367 = vmatprep.mubr.f32.mxu0 0.0
    %368 = vmatmul.mubr.f32.gmra.mrb[0].mxu0 %v291
    %v369 = vpop.f32.mrb[0].mxu0
    %v370 = vadd.f32 %v215, %v369
    %v371 = vpop.f32.mrb[0].mxu0
    %372 = vmatprep.mubr.f32.mxu0 0.0
    %373 = vmatmul.mubr.f32.gmra.mrb[0].mxu0 %v293
    %v374 = vpop.f32.mrb[0].mxu0
    %v375 = vadd.f32 %v215, %v374
    %v376 = vpop.f32.mrb[0].mxu0
    %377 = vmatprep.mubr.f32.mxu0 0.0
    %378 = vmatmul.mubr.f32.gmra.mrb[0].mxu0 %v295
    %v379 = vpop.f32.mrb[0].mxu0
    %v380 = vadd.f32 %v215, %v379
    %v381 = vpop.f32.mrb[0].mxu0
    %382 = vmatprep.mubr.f32.mxu0 0.0
    %383 = vmatmul.mubr.f32.gmra.mrb[0].mxu0 %v297
    %v384 = vpop.f32.mrb[0].mxu0
    %v385 = vadd.f32 %v215, %v384
    %v386 = vpop.f32.mrb[0].mxu0
    %387 = vdwg.mxu0
    %vm388 = vcmp.gt.f32.partialorder %v370, 0.0
    %vm389 = vcmp.gt.f32.partialorder %v375, 0.0
    %vm390 = vcmp.gt.f32.partialorder %v380, 0.0
    %vm391 = vcmp.gt.f32.partialorder %v385, 0.0
    %v392 = vmin.f32 %v370, 0.0
    %v393 = vmin.f32 %v375, 0.0
    %v394 = vmin.f32 %v380, 0.0
    %v395 = vmin.f32 %v385, 0.0
    %v396 = vmul.f32 %v392, 1.442695
    %v397 = vpow.pop %v396
    %v398 = vmul.f32 %v393, 1.442695
    %v399 = vpow.pop %v398
    %v400 = vmul.f32 %v394, 1.442695
    %v401 = vpow.pop %v400
    %v402 = vmul.f32 %v395, 1.442695
    %v403 = vpow.pop %v402
    %v404 = vsub.f32 %v397, 1.0
    %v405 = vsub.f32 %v399, 1.0
    %v406 = vsub.f32 %v401, 1.0
    %v407 = vsub.f32 %v403, 1.0
    %v408 = vmul.f32 %v404, 1.6732632
    %v409 = vmul.f32 %v405, 1.6732632
    %v410 = vmul.f32 %v406, 1.6732632
    %v411 = vmul.f32 %v407, 1.6732632
    %v412 = vsel %vm388, %v370, %v408
    %v413 = vsel %vm389, %v375, %v409
    %v414 = vsel %vm390, %v380, %v410
    %v415 = vsel %vm391, %v385, %v411
    %v416 = vmul.f32 %v412, 1.050701
    %v417 = vmul.f32 %v413, 1.050701
    %v418 = vmul.f32 %v414, 1.050701
    %v419 = vmul.f32 %v415, 1.050701
    %v424 = vcombine.high %v416, %v416
    %v426 = vunpack.c.l.s4 1983009808
    %v427 = vunpack.c.0.s8 %v426
    %v428 = vlaneseq
    %v429 = vshrl.u32 %v428, 7
    %v430 = vsub.s32 %v427, %v429
    %v431 = vrot.slane %v416, %v430
    %v433 = vunpack.c.l.s4 1983009808
    %v434 = vunpack.c.0.s8 %v433
    %v435 = vlaneseq
    %v436 = vshrl.u32 %v435, 7
    %v437 = vsub.s32 %v434, %v436
    %v438 = vrot.slane %v424, %v437
    %v439 = vcombine.high %v431, %v431
    %v440 = vcombine.high %v438, %v438
    %v441 = vcombine.high %v417, %v417
    %v443 = vunpack.c.l.s4 1983009808
    %v444 = vunpack.c.0.s8 %v443
    %v445 = vlaneseq
    %v446 = vshrl.u32 %v445, 7
    %v447 = vsub.s32 %v444, %v446
    %v448 = vrot.slane %v417, %v447
    %v450 = vunpack.c.l.s4 1983009808
    %v451 = vunpack.c.0.s8 %v450
    %v452 = vlaneseq
    %v453 = vshrl.u32 %v452, 7
    %v454 = vsub.s32 %v451, %v453
    %v455 = vrot.slane %v441, %v454
    %v456 = vcombine.high %v448, %v448
    %v457 = vcombine.high %v455, %v455
    %v458 = vcombine.high %v418, %v418
    %v460 = vunpack.c.l.s4 1983009808
    %v461 = vunpack.c.0.s8 %v460
    %v462 = vlaneseq
    %v463 = vshrl.u32 %v462, 7
    %v464 = vsub.s32 %v461, %v463
    %v465 = vrot.slane %v418, %v464
    %v467 = vunpack.c.l.s4 1983009808
    %v468 = vunpack.c.0.s8 %v467
    %v469 = vlaneseq
    %v470 = vshrl.u32 %v469, 7
    %v471 = vsub.s32 %v468, %v470
    %v472 = vrot.slane %v458, %v471
    %v473 = vcombine.high %v465, %v465
    %v474 = vcombine.high %v472, %v472
    %v476 = vunpack.c.l.s4 1983009808
    %v477 = vunpack.c.0.s8 %v476
    %v478 = vlaneseq
    %v479 = vshrl.u32 %v478, 7
    %v480 = vsub.s32 %v477, %v479
    %v481 = vrot.slane %v419, %v480
    %v482 = vcombine.high %v481, %v481
    %496 = vrot.lane.b32.xlu0 %v431, 64
    %v497 = vpop.permute.xlu0 %496
    %498 = vrot.lane.b32.xlu0 %v439, 64
    %v499 = vpop.permute.xlu0 %498
    %500 = vrot.lane.b32.xlu0 %v438, 64
    %v501 = vpop.permute.xlu0 %500
    %502 = vrot.lane.b32.xlu0 %v440, 64
    %v503 = vpop.permute.xlu0 %502
    %504 = vrot.lane.b32.xlu0 %v448, 64
    %v505 = vpop.permute.xlu0 %504
    %506 = vrot.lane.b32.xlu0 %v456, 64
    %v507 = vpop.permute.xlu0 %506
    %508 = vrot.lane.b32.xlu0 %v455, 64
    %v509 = vpop.permute.xlu0 %508
    %510 = vrot.lane.b32.xlu0 %v457, 64
    %v511 = vpop.permute.xlu0 %510
    %512 = vrot.lane.b32.xlu0 %v465, 64
    %v513 = vpop.permute.xlu0 %512
    %514 = vrot.lane.b32.xlu0 %v473, 64
    %v515 = vpop.permute.xlu0 %514
    %516 = vrot.lane.b32.xlu0 %v472, 64
    %v517 = vpop.permute.xlu0 %516
    %518 = vrot.lane.b32.xlu0 %v474, 64
    %v519 = vpop.permute.xlu0 %518
    %520 = vrot.lane.b32.xlu0 %v481, 64
    %v521 = vpop.permute.xlu0 %520
    %522 = vrot.lane.b32.xlu0 %v482, 64
    %v523 = vpop.permute.xlu0 %522
    %vm538 = vcmask 523264
    %v539 = vsel %vm538, 0.0, %v497
    %v540 = vsel %vm538, %v431, %v499
    %v541 = vsel %vm538, %v439, %v501
    %v542 = vsel %vm538, %v438, %v503
    %v543 = vsel %vm538, %v440, %v505
    %v544 = vsel %vm538, %v448, %v507
    %v545 = vsel %vm538, %v456, %v509
    %v546 = vsel %vm538, %v455, %v511
    %v547 = vsel %vm538, %v457, %v513
    %v548 = vsel %vm538, %v465, %v515
    %v549 = vsel %vm538, %v473, %v517
    %v550 = vsel %vm538, %v472, %v519
    %v551 = vsel %vm538, %v474, %v521
    %v552 = vsel %vm538, %v481, %v523
    %v568 = vcombine.low %v539, %v439
    %v570 = vunpack.c.l.s4 1983009808
    %v571 = vunpack.c.0.s8 %v570
    %v572 = vlaneseq
    %v573 = vshrl.u32 %v572, 7
    %v574 = vsub.s32 %v571, %v573
    %v575 = vrot.slane %v568, %v574
    %v576 = vcombine.low %v540, %v438
    %v578 = vunpack.c.l.s4 1983009808
    %v579 = vunpack.c.0.s8 %v578
    %v580 = vlaneseq
    %v581 = vshrl.u32 %v580, 7
    %v582 = vsub.s32 %v579, %v581
    %v583 = vrot.slane %v576, %v582
    %v584 = vcombine.low %v541, %v440
    %v586 = vunpack.c.l.s4 1983009808
    %v587 = vunpack.c.0.s8 %v586
    %v588 = vlaneseq
    %v589 = vshrl.u32 %v588, 7
    %v590 = vsub.s32 %v587, %v589
    %v591 = vrot.slane %v584, %v590
    %v592 = vcombine.low %v542, %v448
    %v594 = vunpack.c.l.s4 1983009808
    %v595 = vunpack.c.0.s8 %v594
    %v596 = vlaneseq
    %v597 = vshrl.u32 %v596, 7
    %v598 = vsub.s32 %v595, %v597
    %v599 = vrot.slane %v592, %v598
    %v600 = vcombine.low %v543, %v456
    %v602 = vunpack.c.l.s4 1983009808
    %v603 = vunpack.c.0.s8 %v602
    %v604 = vlaneseq
    %v605 = vshrl.u32 %v604, 7
    %v606 = vsub.s32 %v603, %v605
    %v607 = vrot.slane %v600, %v606
    %v608 = vcombine.low %v544, %v455
    %v610 = vunpack.c.l.s4 1983009808
    %v611 = vunpack.c.0.s8 %v610
    %v612 = vlaneseq
    %v613 = vshrl.u32 %v612, 7
    %v614 = vsub.s32 %v611, %v613
    %v615 = vrot.slane %v608, %v614
    %v616 = vcombine.low %v545, %v457
    %v618 = vunpack.c.l.s4 1983009808
    %v619 = vunpack.c.0.s8 %v618
    %v620 = vlaneseq
    %v621 = vshrl.u32 %v620, 7
    %v622 = vsub.s32 %v619, %v621
    %v623 = vrot.slane %v616, %v622
    %v624 = vcombine.low %v546, %v465
    %v626 = vunpack.c.l.s4 1983009808
    %v627 = vunpack.c.0.s8 %v626
    %v628 = vlaneseq
    %v629 = vshrl.u32 %v628, 7
    %v630 = vsub.s32 %v627, %v629
    %v631 = vrot.slane %v624, %v630
    %v632 = vcombine.low %v547, %v473
    %v634 = vunpack.c.l.s4 1983009808
    %v635 = vunpack.c.0.s8 %v634
    %v636 = vlaneseq
    %v637 = vshrl.u32 %v636, 7
    %v638 = vsub.s32 %v635, %v637
    %v639 = vrot.slane %v632, %v638
    %v640 = vcombine.low %v548, %v472
    %v642 = vunpack.c.l.s4 1983009808
    %v643 = vunpack.c.0.s8 %v642
    %v644 = vlaneseq
    %v645 = vshrl.u32 %v644, 7
    %v646 = vsub.s32 %v643, %v645
    %v647 = vrot.slane %v640, %v646
    %v648 = vcombine.low %v549, %v474
    %v650 = vunpack.c.l.s4 1983009808
    %v651 = vunpack.c.0.s8 %v650
    %v652 = vlaneseq
    %v653 = vshrl.u32 %v652, 7
    %v654 = vsub.s32 %v651, %v653
    %v655 = vrot.slane %v648, %v654
    %v656 = vcombine.low %v550, %v481
    %v658 = vunpack.c.l.s4 1983009808
    %v659 = vunpack.c.0.s8 %v658
    %v660 = vlaneseq
    %v661 = vshrl.u32 %v660, 7
    %v662 = vsub.s32 %v659, %v661
    %v663 = vrot.slane %v656, %v662
    %v664 = vcombine.low %v551, %v482
    %v666 = vunpack.c.l.s4 1983009808
    %v667 = vunpack.c.0.s8 %v666
    %v668 = vlaneseq
    %v669 = vshrl.u32 %v668, 7
    %v670 = vsub.s32 %v667, %v669
    %v671 = vrot.slane %v664, %v670
    %v672 = vcombine.low %v552, 0.0
    %v674 = vunpack.c.l.s4 1983009808
    %v675 = vunpack.c.0.s8 %v674
    %v676 = vlaneseq
    %v677 = vshrl.u32 %v676, 7
    %v678 = vsub.s32 %v675, %v677
    %v679 = vrot.slane %v672, %v678
    %v680 = vld [vmem:[%s3] sm:$0xff]
    %v681 = vld [vmem:[%s3 + $0x8] sm:$0xff]
    %v682 = vld [vmem:[%s3 + $0x10] sm:$0xff]
    %v683 = vld [vmem:[%s3 + $0x18] sm:$0xff]
    %v684 = vld [vmem:[%s3 + $0x20] sm:$0xff]
    %v685 = vld [vmem:[%s3 + $0x28] sm:$0xff]
    %v686 = vld [vmem:[%s3 + $0x30] sm:$0xff]
    %v687 = vld [vmem:[%s3 + $0x38] sm:$0xff]
    %v688 = vld [vmem:[%s3 + $0x40] sm:$0xff]
    %v689 = vld [vmem:[%s3 + $0x48] sm:$0xff]
    %v690 = vld [vmem:[%s3 + $0x50] sm:$0xff]
    %v691 = vld [vmem:[%s3 + $0x58] sm:$0xff]
    %v692 = vld [vmem:[%s3 + $0x60] sm:$0xff]
    %v693 = vld [vmem:[%s3 + $0x68] sm:$0xff]
    %v694 = vld [vmem:[%s3 + $0x70] sm:$0xff]
    %v695 = vld [vmem:[%s3 + $0x78] sm:$0xff]
    %v696 = vld [vmem:[%s3 + $0x80] sm:$0xff]
    %v697 = vld [vmem:[%s3 + $0x88] sm:$0xff]
    %v698 = vld [vmem:[%s3 + $0x90] sm:$0xff]
    %v699 = vld [vmem:[%s3 + $0x98] sm:$0xff]
    %v700 = vld [vmem:[%s3 + $0xa0] sm:$0xff]
    %v701 = vld [vmem:[%s3 + $0xa8] sm:$0xff]
    %v702 = vld [vmem:[%s3 + $0xb0] sm:$0xff]
    %v703 = vld [vmem:[%s3 + $0xb8] sm:$0xff]
    %v704 = vld [vmem:[%s4] sm:$0x1]
    %v706 = vlaneseq
    %v707 = vshrl.u32 %v706, 7
    %v708 = vsub.s32 0, %v707
    %v709 = vrot.slane %v704, %v708
    %v711 = vcombine.low %v575, %v583
    %v712 = vcombine.low %v591, %v599
    %v714 = vunpack.c.l.s4 1983009808
    %v715 = vunpack.c.0.s8 %v714
    %v716 = vlaneseq
    %v717 = vshrl.u32 %v716, 7
    %v718 = vsub.s32 %v715, %v717
    %v719 = vrot.slane %v711, %v718
    %v721 = vunpack.c.l.s4 1983009808
    %v722 = vunpack.c.0.s8 %v721
    %v723 = vlaneseq
    %v724 = vshrl.u32 %v723, 7
    %v725 = vsub.s32 %v722, %v724
    %v726 = vrot.slane %v712, %v725
    %v727 = vcombine.low %v719, %v726
    %v728 = vcombine.high %v719, %v726
    %v729 = vcombine.low %v607, %v615
    %v730 = vcombine.low %v623, %v631
    %v732 = vunpack.c.l.s4 1983009808
    %v733 = vunpack.c.0.s8 %v732
    %v734 = vlaneseq
    %v735 = vshrl.u32 %v734, 7
    %v736 = vsub.s32 %v733, %v735
    %v737 = vrot.slane %v729, %v736
    %v739 = vunpack.c.l.s4 1983009808
    %v740 = vunpack.c.0.s8 %v739
    %v741 = vlaneseq
    %v742 = vshrl.u32 %v741, 7
    %v743 = vsub.s32 %v740, %v742
    %v744 = vrot.slane %v730, %v743
    %v745 = vcombine.low %v737, %v744
    %v746 = vcombine.high %v737, %v744
    %v747 = vcombine.low %v639, %v647
    %v748 = vcombine.low %v655, %v663
    %v750 = vunpack.c.l.s4 1983009808
    %v751 = vunpack.c.0.s8 %v750
    %v752 = vlaneseq
    %v753 = vshrl.u32 %v752, 7
    %v754 = vsub.s32 %v751, %v753
    %v755 = vrot.slane %v747, %v754
    %v757 = vunpack.c.l.s4 1983009808
    %v758 = vunpack.c.0.s8 %v757
    %v759 = vlaneseq
    %v760 = vshrl.u32 %v759, 7
    %v761 = vsub.s32 %v758, %v760
    %v762 = vrot.slane %v748, %v761
    %v763 = vcombine.low %v755, %v762
    %v764 = vcombine.high %v755, %v762
    %v765 = vcombine.low %v671, %v679
    %v767 = vunpack.c.l.s4 1983009808
    %v768 = vunpack.c.0.s8 %v767
    %v769 = vlaneseq
    %v770 = vshrl.u32 %v769, 7
    %v771 = vsub.s32 %v768, %v770
    %v772 = vrot.slane %v765, %v771
    %v773 = vcombine.high %v772, %v772
    %v778 = vsel %vm538, %v728, 0
    %v780 = vsel %vm538, %v746, 0
    %v782 = vsel %vm538, %v764, 0
    %v784 = vsel %vm538, %v773, 0
    %786 = vmatprep.subr.mxu0 0.0
    %787 = vmatpush1.msra.mxu0 %v680
    %788 = vmatprep.subr.mxu0 0.0
    %789 = vmatpush1.msra.mxu0 %v681
    %790 = vmatprep.subr.mxu0 0.0
    %791 = vmatpush1.msra.mxu0 %v682
    %792 = vmatprep.subr.mxu0 0.0
    %793 = vmatpush1.msra.mxu0 %v683
    %794 = vmatprep.subr.mxu0 0.0
    %795 = vmatpush1.msra.mxu0 %v684
    %796 = vmatprep.subr.mxu0 0.0
    %797 = vmatpush1.msra.mxu0 %v685
    %798 = vmatprep.subr.mxu0 0.0
    %799 = vmatpush1.msra.mxu0 %v686
    %800 = vmatprep.subr.mxu0 0.0
    %801 = vmatpush1.msra.mxu0 %v687
    %802 = vmatprep.subr.mxu0 0.0
    %803 = vmatpush1.msra.mxu0 %v688
    %804 = vmatprep.subr.mxu0 0.0
    %805 = vmatpush1.msra.mxu0 %v689
    %806 = vmatprep.subr.mxu0 0.0
    %807 = vmatpush1.msra.mxu0 %v690
    %808 = vmatprep.subr.mxu0 0.0
    %809 = vmatpush1.msra.mxu0 %v691
    %810 = vmatprep.subr.mxu0 0.0
    %811 = vmatpush1.msra.mxu0 %v692
    %812 = vmatprep.subr.mxu0 0.0
    %813 = vmatpush1.msra.mxu0 %v693
    %814 = vmatprep.subr.mxu0 0.0
    %815 = vmatpush1.msra.mxu0 %v694
    %816 = vmatprep.subr.mxu0 0.0
    %817 = vmatpush1.msra.mxu0 %v695
    %818 = vmatprep.subr.mxu0 0.0
    %819 = vmatpush1.msra.mxu0 %v696
    %820 = vmatprep.subr.mxu0 0.0
    %821 = vmatpush1.msra.mxu0 %v697
    %822 = vmatprep.subr.mxu0 0.0
    %823 = vmatpush1.msra.mxu0 %v698
    %824 = vmatprep.subr.mxu0 0.0
    %825 = vmatpush1.msra.mxu0 %v699
    %826 = vmatprep.subr.mxu0 0.0
    %827 = vmatpush1.msra.mxu0 %v700
    %828 = vmatprep.subr.mxu0 0.0
    %829 = vmatpush1.msra.mxu0 %v701
    %830 = vmatprep.subr.mxu0 0.0
    %831 = vmatpush1.msra.mxu0 %v702
    %832 = vmatprep.subr.mxu0 0.0
    %833 = vmatpush1.msra.mxu0 %v703
    %834 = vmatprep.subr.mxu0 0.0
    %835 = vmatpush1.msra.mxu0 0.0
    %836 = vmatprep.subr.mxu0 0.0
    %837 = vmatpush1.msra.mxu0 0.0
    %838 = vmatprep.subr.mxu0 0.0
    %839 = vmatpush1.msra.mxu0 0.0
    %840 = vmatprep.subr.mxu0 0.0
    %841 = vmatpush1.msra.mxu0 0.0
    %842 = vmatprep.subr.mxu0 0.0
    %843 = vmatpush1.msra.mxu0 0.0
    %844 = vmatprep.subr.mxu0 0.0
    %845 = vmatpush1.msra.mxu0 0.0
    %846 = vmatprep.subr.mxu0 0.0
    %847 = vmatpush1.msra.mxu0 0.0
    %848 = vmatprep.subr.mxu0 0.0
    %849 = vmatpush1.msra.mxu0 0.0
    %850 = vmatprep.mubr.f32.mxu0 %v778
    %851 = vmatmul.mubr.f32.gmra.mrb[0].mxu0 %v727
    %v852 = vpop.f32.mrb[0].mxu0
    %v853 = vadd.f32 %v709, %v852
    %v854 = vpop.f32.mrb[0].mxu0
    %855 = vmatprep.mubr.f32.mxu0 %v780
    %856 = vmatmul.mubr.f32.gmra.mrb[0].mxu0 %v745
    %v857 = vpop.f32.mrb[0].mxu0
    %v858 = vadd.f32 %v709, %v857
    %v859 = vpop.f32.mrb[0].mxu0
    %860 = vmatprep.mubr.f32.mxu0 %v782
    %861 = vmatmul.mubr.f32.gmra.mrb[0].mxu0 %v763
    %v862 = vpop.f32.mrb[0].mxu0
    %v863 = vadd.f32 %v709, %v862
    %v864 = vpop.f32.mrb[0].mxu0
    %865 = vmatprep.mubr.f32.mxu0 %v784
    %866 = vmatmul.mubr.f32.gmra.mrb[0].mxu0 %v772
    %v867 = vpop.f32.mrb[0].mxu0
    %v868 = vadd.f32 %v709, %v867
    %v869 = vpop.f32.mrb[0].mxu0
    %870 = vdwg.mxu0
    %vm871 = vcmask 261120
    %v872 = vsel %vm871, %v853, 0.0
    %v873 = vsel %vm871, %v858, 0.0
    %v874 = vadd.f32 %v872, %v873
    %v875 = vsel %vm871, %v863, 0.0
    %v876 = vadd.f32 %v874, %v875
    %vm877 = vcmask 257024
    %v878 = vsel %vm877, %v868, 0.0
    %v879 = vadd.f32 %v876, %v878
    %v880 = vrot.slane %v879, 4
    %v881 = vadd.f32 %v879, %v880
    %v882 = vrot.slane %v881, 2
    %v883 = vadd.f32 %v881, %v882
    %v884 = vrot.slane %v883, 1
    %v885 = vadd.f32 %v883, %v884
    %v886 = vrcp.pop 28.0
    %v887 = vmul.f32 %v885, %v886
    %v888 = vsub.f32 %v853, %v887
    %v889 = vsub.f32 %v858, %v887
    %v890 = vsub.f32 %v863, %v887
    %v891 = vsub.f32 %v868, %v887
    %v892 = vmul.f32 %v888, %v888
    %v893 = vmul.f32 %v889, %v889
    %v894 = vmul.f32 %v890, %v890
    %v895 = vmul.f32 %v891, %v891
    %v896 = vsel %vm871, %v892, 0.0
    %v897 = vsel %vm871, %v893, 0.0
    %v898 = vadd.f32 %v896, %v897
    %v899 = vsel %vm871, %v894, 0.0
    %v900 = vadd.f32 %v898, %v899
    %v901 = vsel %vm877, %v895, 0.0
    %v902 = vadd.f32 %v900, %v901
    %v903 = vrot.slane %v902, 4
    %v904 = vadd.f32 %v902, %v903
    %v905 = vrot.slane %v904, 2
    %v906 = vadd.f32 %v904, %v905
    %v907 = vrot.slane %v906, 1
    %v908 = vadd.f32 %v906, %v907
    %v909 = vmul.f32 %v908, %v886
    %v910 = vadd.f32 %v909, 1e-05
    %v911 = vrsqrt.pop %v910
    %v912 = vmul.f32 %v888, %v911
    %v913 = vmul.f32 %v889, %v911
    %v914 = vmul.f32 %v890, %v911
    %v915 = vmul.f32 %v891, %v911
    %v916 = vld [vmem:[%s5] sm:$0x1]
    %v918 = vlaneseq
    %v919 = vshrl.u32 %v918, 7
    %v920 = vsub.s32 0, %v919
    %v921 = vrot.slane %v916, %v920
    %v923 = vmul.f32 %v912, %v921
    %v924 = vmul.f32 %v913, %v921
    %v925 = vmul.f32 %v914, %v921
    %v926 = vmul.f32 %v915, %v921
    %v927 = vld [vmem:[%s6] sm:$0x1]
    %v929 = vlaneseq
    %v930 = vshrl.u32 %v929, 7
    %v931 = vsub.s32 0, %v930
    %v932 = vrot.slane %v927, %v931
    %v934 = vadd.f32 %v923, %v932
    %v935 = vadd.f32 %v924, %v932
    %v936 = vadd.f32 %v925, %v932
    %v937 = vadd.f32 %v926, %v932
    %vm938 = vcmp.gt.f32.partialorder %v934, 0.0
    %vm939 = vcmp.gt.f32.partialorder %v935, 0.0
    %vm940 = vcmp.gt.f32.partialorder %v936, 0.0
    %vm941 = vcmp.gt.f32.partialorder %v937, 0.0
    %v942 = vmin.f32 %v934, 0.0
    %v943 = vmin.f32 %v935, 0.0
    %v944 = vmin.f32 %v936, 0.0
    %v945 = vmin.f32 %v937, 0.0
    %v946 = vmul.f32 %v942, 1.442695
    %v947 = vpow.pop %v946
    %v948 = vmul.f32 %v943, 1.442695
    %v949 = vpow.pop %v948
    %v950 = vmul.f32 %v944, 1.442695
    %v951 = vpow.pop %v950
    %v952 = vmul.f32 %v945, 1.442695
    %v953 = vpow.pop %v952
    %v954 = vsub.f32 %v947, 1.0
    %v955 = vsub.f32 %v949, 1.0
    %v956 = vsub.f32 %v951, 1.0
    %v957 = vsub.f32 %v953, 1.0
    %v958 = vmul.f32 %v954, 1.6732632
    %v959 = vmul.f32 %v955, 1.6732632
    %v960 = vmul.f32 %v956, 1.6732632
    %v961 = vmul.f32 %v957, 1.6732632
    %v962 = vsel %vm938, %v934, %v958
    %v963 = vsel %vm939, %v935, %v959
    %v964 = vsel %vm940, %v936, %v960
    %v965 = vsel %vm941, %v937, %v961
    %v966 = vmul.f32 %v962, 1.050701
    %v967 = vmul.f32 %v963, 1.050701
    %v968 = vmul.f32 %v964, 1.050701
    %v969 = vmul.f32 %v965, 1.050701
    %v974 = vcombine.high %v966, %v966
    %v976 = vunpack.c.l.s4 1983009808
    %v977 = vunpack.c.0.s8 %v976
    %v978 = vlaneseq
    %v979 = vshrl.u32 %v978, 7
    %v980 = vsub.s32 %v977, %v979
    %v981 = vrot.slane %v966, %v980
    %v983 = vunpack.c.l.s4 1983009808
    %v984 = vunpack.c.0.s8 %v983
    %v985 = vlaneseq
    %v986 = vshrl.u32 %v985, 7
    %v987 = vsub.s32 %v984, %v986
    %v988 = vrot.slane %v974, %v987
    %v989 = vcombine.high %v981, %v981
    %v990 = vcombine.high %v988, %v988
    %v991 = vcombine.high %v967, %v967
    %v993 = vunpack.c.l.s4 1983009808
    %v994 = vunpack.c.0.s8 %v993
    %v995 = vlaneseq
    %v996 = vshrl.u32 %v995, 7
    %v997 = vsub.s32 %v994, %v996
    %v998 = vrot.slane %v967, %v997
    %v1000 = vunpack.c.l.s4 1983009808
    %v1001 = vunpack.c.0.s8 %v1000
    %v1002 = vlaneseq
    %v1003 = vshrl.u32 %v1002, 7
    %v1004 = vsub.s32 %v1001, %v1003
    %v1005 = vrot.slane %v991, %v1004
    %v1006 = vcombine.high %v998, %v998
    %v1007 = vcombine.high %v1005, %v1005
    %v1008 = vcombine.high %v968, %v968
    %v1010 = vunpack.c.l.s4 1983009808
    %v1011 = vunpack.c.0.s8 %v1010
    %v1012 = vlaneseq
    %v1013 = vshrl.u32 %v1012, 7
    %v1014 = vsub.s32 %v1011, %v1013
    %v1015 = vrot.slane %v968, %v1014
    %v1017 = vunpack.c.l.s4 1983009808
    %v1018 = vunpack.c.0.s8 %v1017
    %v1019 = vlaneseq
    %v1020 = vshrl.u32 %v1019, 7
    %v1021 = vsub.s32 %v1018, %v1020
    %v1022 = vrot.slane %v1008, %v1021
    %v1023 = vcombine.high %v1015, %v1015
    %v1024 = vcombine.high %v1022, %v1022
    %v1026 = vunpack.c.l.s4 1983009808
    %v1027 = vunpack.c.0.s8 %v1026
    %v1028 = vlaneseq
    %v1029 = vshrl.u32 %v1028, 7
    %v1030 = vsub.s32 %v1027, %v1029
    %v1031 = vrot.slane %v969, %v1030
    %v1032 = vcombine.high %v1031, %v1031
    %1046 = vrot.lane.b32.xlu0 %v981, 32
    %v1047 = vpop.permute.xlu0 %1046
    %1048 = vrot.lane.b32.xlu0 %v989, 32
    %v1049 = vpop.permute.xlu0 %1048
    %1050 = vrot.lane.b32.xlu0 %v988, 32
    %v1051 = vpop.permute.xlu0 %1050
    %1052 = vrot.lane.b32.xlu0 %v990, 32
    %v1053 = vpop.permute.xlu0 %1052
    %1054 = vrot.lane.b32.xlu0 %v998, 32
    %v1055 = vpop.permute.xlu0 %1054
    %1056 = vrot.lane.b32.xlu0 %v1006, 32
    %v1057 = vpop.permute.xlu0 %1056
    %1058 = vrot.lane.b32.xlu0 %v1005, 32
    %v1059 = vpop.permute.xlu0 %1058
    %1060 = vrot.lane.b32.xlu0 %v1007, 32
    %v1061 = vpop.permute.xlu0 %1060
    %1062 = vrot.lane.b32.xlu0 %v1015, 32
    %v1063 = vpop.permute.xlu0 %1062
    %1064 = vrot.lane.b32.xlu0 %v1023, 32
    %v1065 = vpop.permute.xlu0 %1064
    %1066 = vrot.lane.b32.xlu0 %v1022, 32
    %v1067 = vpop.permute.xlu0 %1066
    %1068 = vrot.lane.b32.xlu0 %v1024, 32
    %v1069 = vpop.permute.xlu0 %1068
    %1070 = vrot.lane.b32.xlu0 %v1031, 32
    %v1071 = vpop.permute.xlu0 %1070
    %1072 = vrot.lane.b32.xlu0 %v1032, 32
    %v1073 = vpop.permute.xlu0 %1072
    %1088 = vrot.lane.b32.xlu0 %v989, 64
    %v1089 = vpop.permute.xlu0 %1088
    %1090 = vrot.lane.b32.xlu0 %v988, 64
    %v1091 = vpop.permute.xlu0 %1090
    %1092 = vrot.lane.b32.xlu0 %v990, 64
    %v1093 = vpop.permute.xlu0 %1092
    %1094 = vrot.lane.b32.xlu0 %v998, 64
    %v1095 = vpop.permute.xlu0 %1094
    %1096 = vrot.lane.b32.xlu0 %v1006, 64
    %v1097 = vpop.permute.xlu0 %1096
    %1098 = vrot.lane.b32.xlu0 %v1005, 64
    %v1099 = vpop.permute.xlu0 %1098
    %1100 = vrot.lane.b32.xlu0 %v1007, 64
    %v1101 = vpop.permute.xlu0 %1100
    %1102 = vrot.lane.b32.xlu0 %v1015, 64
    %v1103 = vpop.permute.xlu0 %1102
    %1104 = vrot.lane.b32.xlu0 %v1023, 64
    %v1105 = vpop.permute.xlu0 %1104
    %1106 = vrot.lane.b32.xlu0 %v1022, 64
    %v1107 = vpop.permute.xlu0 %1106
    %1108 = vrot.lane.b32.xlu0 %v1024, 64
    %v1109 = vpop.permute.xlu0 %1108
    %1110 = vrot.lane.b32.xlu0 %v1031, 64
    %v1111 = vpop.permute.xlu0 %1110
    %1112 = vrot.lane.b32.xlu0 %v1032, 64
    %v1113 = vpop.permute.xlu0 %1112
    %1114 = vrot.lane.b32.xlu0 0.0, 64
    %v1115 = vpop.permute.xlu0 %1114
    %v1130 = vsel %vm871, 0.0, %v1047
    %v1131 = vsel %vm871, %v981, %v1049
    %v1132 = vsel %vm871, %v989, %v1051
    %v1133 = vsel %vm871, %v988, %v1053
    %v1134 = vsel %vm871, %v990, %v1055
    %v1135 = vsel %vm871, %v998, %v1057
    %v1136 = vsel %vm871, %v1006, %v1059
    %v1137 = vsel %vm871, %v1005, %v1061
    %v1138 = vsel %vm871, %v1007, %v1063
    %v1139 = vsel %vm871, %v1015, %v1065
    %v1140 = vsel %vm871, %v1023, %v1067
    %v1141 = vsel %vm871, %v1022, %v1069
    %v1142 = vsel %vm871, %v1024, %v1071
    %v1143 = vsel %vm871, %v1031, %v1073
    %v1144 = vsel %vm538, %v1130, %v1089
    %v1145 = vsel %vm538, %v1131, %v1091
    %v1146 = vsel %vm538, %v1132, %v1093
    %v1147 = vsel %vm538, %v1133, %v1095
    %v1148 = vsel %vm538, %v1134, %v1097
    %v1149 = vsel %vm538, %v1135, %v1099
    %v1150 = vsel %vm538, %v1136, %v1101
    %v1151 = vsel %vm538, %v1137, %v1103
    %v1152 = vsel %vm538, %v1138, %v1105
    %v1153 = vsel %vm538, %v1139, %v1107
    %v1154 = vsel %vm538, %v1140, %v1109
    %v1155 = vsel %vm538, %v1141, %v1111
    %v1156 = vsel %vm538, %v1142, %v1113
    %v1157 = vsel %vm538, %v1143, %v1115
    %v1158 = vld [vmem:[%s7] sm:$0xff]
    %v1159 = vld [vmem:[%s7 + $0x8] sm:$0xff]
    %v1160 = vld [vmem:[%s7 + $0x10] sm:$0xff]
    %v1161 = vld [vmem:[%s7 + $0x18] sm:$0xff]
    %v1162 = vld [vmem:[%s7 + $0x20] sm:$0xff]
    %v1163 = vld [vmem:[%s7 + $0x28] sm:$0xff]
    %v1164 = vld [vmem:[%s7 + $0x30] sm:$0xff]
    %v1165 = vld [vmem:[%s7 + $0x38] sm:$0xff]
    %v1166 = vld [vmem:[%s7 + $0x40] sm:$0xff]
    %v1167 = vld [vmem:[%s7 + $0x48] sm:$0xff]
    %v1168 = vld [vmem:[%s7 + $0x50] sm:$0xff]
    %v1169 = vld [vmem:[%s7 + $0x58] sm:$0xff]
    %v1170 = vld [vmem:[%s8] sm:$0x1]
    %v1172 = vlaneseq
    %v1173 = vshrl.u32 %v1172, 7
    %v1174 = vsub.s32 0, %v1173
    %v1175 = vrot.slane %v1170, %v1174
    %v1191 = vcombine.low %v1144, %v1145
    %v1192 = vcombine.low %v1146, %v1147
    %v1194 = vunpack.c.l.s4 1983009808
    %v1195 = vunpack.c.0.s8 %v1194
    %v1196 = vlaneseq
    %v1197 = vshrl.u32 %v1196, 7
    %v1198 = vsub.s32 %v1195, %v1197
    %v1199 = vrot.slane %v1191, %v1198
    %v1201 = vunpack.c.l.s4 1983009808
    %v1202 = vunpack.c.0.s8 %v1201
    %v1203 = vlaneseq
    %v1204 = vshrl.u32 %v1203, 7
    %v1205 = vsub.s32 %v1202, %v1204
    %v1206 = vrot.slane %v1192, %v1205
    %v1207 = vcombine.low %v1199, %v1206
    %v1208 = vcombine.low %v1148, %v1149
    %v1209 = vcombine.low %v1150, %v1151
    %v1211 = vunpack.c.l.s4 1983009808
    %v1212 = vunpack.c.0.s8 %v1211
    %v1213 = vlaneseq
    %v1214 = vshrl.u32 %v1213, 7
    %v1215 = vsub.s32 %v1212, %v1214
    %v1216 = vrot.slane %v1208, %v1215
    %v1218 = vunpack.c.l.s4 1983009808
    %v1219 = vunpack.c.0.s8 %v1218
    %v1220 = vlaneseq
    %v1221 = vshrl.u32 %v1220, 7
    %v1222 = vsub.s32 %v1219, %v1221
    %v1223 = vrot.slane %v1209, %v1222
    %v1224 = vcombine.low %v1216, %v1223
    %v1225 = vcombine.low %v1152, %v1153
    %v1226 = vcombine.low %v1154, %v1155
    %v1228 = vunpack.c.l.s4 1983009808
    %v1229 = vunpack.c.0.s8 %v1228
    %v1230 = vlaneseq
    %v1231 = vshrl.u32 %v1230, 7
    %v1232 = vsub.s32 %v1229, %v1231
    %v1233 = vrot.slane %v1225, %v1232
    %v1235 = vunpack.c.l.s4 1983009808
    %v1236 = vunpack.c.0.s8 %v1235
    %v1237 = vlaneseq
    %v1238 = vshrl.u32 %v1237, 7
    %v1239 = vsub.s32 %v1236, %v1238
    %v1240 = vrot.slane %v1226, %v1239
    %v1241 = vcombine.low %v1233, %v1240
    %v1242 = vcombine.low %v1156, %v1157
    %v1244 = vunpack.c.l.s4 1983009808
    %v1245 = vunpack.c.0.s8 %v1244
    %v1246 = vlaneseq
    %v1247 = vshrl.u32 %v1246, 7
    %v1248 = vsub.s32 %v1245, %v1247
    %v1249 = vrot.slane %v1242, %v1248
    %vm1250 = vcmask 785408
    %v1251 = vsel %vm1250, %v1207, 0
    %v1253 = vsel %vm1250, %v1224, 0
    %v1255 = vsel %vm1250, %v1241, 0
    %v1257 = vsel %vm1250, %v1249, 0
    %1259 = vmatprep.subr.mxu0 0.0
    %1260 = vmatpush1.msra.mxu0 %v1158
    %1261 = vmatprep.subr.mxu0 0.0
    %1262 = vmatpush1.msra.mxu0 %v1159
    %1263 = vmatprep.subr.mxu0 0.0
    %1264 = vmatpush1.msra.mxu0 %v1160
    %1265 = vmatprep.subr.mxu0 0.0
    %1266 = vmatpush1.msra.mxu0 %v1161
    %1267 = vmatprep.subr.mxu0 0.0
    %1268 = vmatpush1.msra.mxu0 %v1162
    %1269 = vmatprep.subr.mxu0 0.0
    %1270 = vmatpush1.msra.mxu0 %v1163
    %1271 = vmatprep.subr.mxu0 0.0
    %1272 = vmatpush1.msra.mxu0 %v1164
    %1273 = vmatprep.subr.mxu0 0.0
    %1274 = vmatpush1.msra.mxu0 %v1165
    %1275 = vmatprep.subr.mxu0 0.0
    %1276 = vmatpush1.msra.mxu0 %v1166
    %1277 = vmatprep.subr.mxu0 0.0
    %1278 = vmatpush1.msra.mxu0 %v1167
    %1279 = vmatprep.subr.mxu0 0.0
    %1280 = vmatpush1.msra.mxu0 %v1168
    %1281 = vmatprep.subr.mxu0 0.0
    %1282 = vmatpush1.msra.mxu0 %v1169
    %1283 = vmatprep.subr.mxu0 0.0
    %1284 = vmatpush1.msra.mxu0 0.0
    %1285 = vmatprep.subr.mxu0 0.0
    %1286 = vmatpush1.msra.mxu0 0.0
    %1287 = vmatprep.subr.mxu0 0.0
    %1288 = vmatpush1.msra.mxu0 0.0
    %1289 = vmatprep.subr.mxu0 0.0
    %1290 = vmatpush1.msra.mxu0 0.0
    %1291 = vmatprep.subr.mxu0 0.0
    %1292 = vmatpush1.msra.mxu0 0.0
    %1293 = vmatprep.subr.mxu0 0.0
    %1294 = vmatpush1.msra.mxu0 0.0
    %1295 = vmatprep.subr.mxu0 0.0
    %1296 = vmatpush1.msra.mxu0 0.0
    %1297 = vmatprep.subr.mxu0 0.0
    %1298 = vmatpush1.msra.mxu0 0.0
    %1299 = vmatprep.subr.mxu0 0.0
    %1300 = vmatpush1.msra.mxu0 0.0
    %1301 = vmatprep.subr.mxu0 0.0
    %1302 = vmatpush1.msra.mxu0 0.0
    %1303 = vmatprep.subr.mxu0 0.0
    %1304 = vmatpush1.msra.mxu0 0.0
    %1305 = vmatprep.subr.mxu0 0.0
    %1306 = vmatpush1.msra.mxu0 0.0
    %1307 = vmatprep.subr.mxu0 0.0
    %1308 = vmatpush1.msra.mxu0 0.0
    %1309 = vmatprep.subr.mxu0 0.0
    %1310 = vmatpush1.msra.mxu0 0.0
    %1311 = vmatprep.subr.mxu0 0.0
    %1312 = vmatpush1.msra.mxu0 0.0
    %1313 = vmatprep.subr.mxu0 0.0
    %1314 = vmatpush1.msra.mxu0 0.0
    %1315 = vmatprep.subr.mxu0 0.0
    %1316 = vmatpush1.msra.mxu0 0.0
    %1317 = vmatprep.subr.mxu0 0.0
    %1318 = vmatpush1.msra.mxu0 0.0
    %1319 = vmatprep.subr.mxu0 0.0
    %1320 = vmatpush1.msra.mxu0 0.0
    %1321 = vmatprep.subr.mxu0 0.0
    %1322 = vmatpush1.msra.mxu0 0.0
    %1323 = vmatprep.mubr.f32.mxu0 0.0
    %1324 = vmatmul.mubr.f32.gmra.mrb[0].mxu0 %v1251
    %v1325 = vpop.f32.mrb[0].mxu0
    %v1326 = vadd.f32 %v1175, %v1325
    %v1327 = vpop.f32.mrb[0].mxu0
    %1328 = vmatprep.mubr.f32.mxu0 0.0
    %1329 = vmatmul.mubr.f32.gmra.mrb[0].mxu0 %v1253
    %v1330 = vpop.f32.mrb[0].mxu0
    %v1331 = vadd.f32 %v1175, %v1330
    %v1332 = vpop.f32.mrb[0].mxu0
    %1333 = vmatprep.mubr.f32.mxu0 0.0
    %1334 = vmatmul.mubr.f32.gmra.mrb[0].mxu0 %v1255
    %v1335 = vpop.f32.mrb[0].mxu0
    %v1336 = vadd.f32 %v1175, %v1335
    %v1337 = vpop.f32.mrb[0].mxu0
    %1338 = vmatprep.mubr.f32.mxu0 0.0
    %1339 = vmatmul.mubr.f32.gmra.mrb[0].mxu0 %v1257
    %v1340 = vpop.f32.mrb[0].mxu0
    %v1341 = vadd.f32 %v1175, %v1340
    %v1342 = vpop.f32.mrb[0].mxu0
    %1343 = vdwg.mxu0
    %v1344 = vsel %vm871, %v1326, 0.0
    %v1345 = vsel %vm871, %v1331, 0.0
    %v1346 = vadd.f32 %v1344, %v1345
    %v1347 = vsel %vm871, %v1336, 0.0
    %v1348 = vadd.f32 %v1346, %v1347
    %v1349 = vsel %vm877, %v1341, 0.0
    %v1350 = vadd.f32 %v1348, %v1349
    %v1351 = vrot.slane %v1350, 4
    %v1352 = vadd.f32 %v1350, %v1351
    %v1353 = vrot.slane %v1352, 2
    %v1354 = vadd.f32 %v1352, %v1353
    %v1355 = vrot.slane %v1354, 1
    %v1356 = vadd.f32 %v1354, %v1355
    %v1357 = vmul.f32 %v1356, %v886
    %v1358 = vsub.f32 %v1326, %v1357
    %v1359 = vsub.f32 %v1331, %v1357
    %v1360 = vsub.f32 %v1336, %v1357
    %v1361 = vsub.f32 %v1341, %v1357
    %v1362 = vmul.f32 %v1358, %v1358
    %v1363 = vmul.f32 %v1359, %v1359
    %v1364 = vmul.f32 %v1360, %v1360
    %v1365 = vmul.f32 %v1361, %v1361
    %v1366 = vsel %vm871, %v1362, 0.0
    %v1367 = vsel %vm871, %v1363, 0.0
    %v1368 = vadd.f32 %v1366, %v1367
    %v1369 = vsel %vm871, %v1364, 0.0
    %v1370 = vadd.f32 %v1368, %v1369
    %v1371 = vsel %vm877, %v1365, 0.0
    %v1372 = vadd.f32 %v1370, %v1371
    %v1373 = vrot.slane %v1372, 4
    %v1374 = vadd.f32 %v1372, %v1373
    %v1375 = vrot.slane %v1374, 2
    %v1376 = vadd.f32 %v1374, %v1375
    %v1377 = vrot.slane %v1376, 1
    %v1378 = vadd.f32 %v1376, %v1377
    %v1379 = vmul.f32 %v1378, %v886
    %v1380 = vadd.f32 %v1379, 1e-05
    %v1381 = vrsqrt.pop %v1380
    %v1382 = vmul.f32 %v1358, %v1381
    %v1383 = vmul.f32 %v1359, %v1381
    %v1384 = vmul.f32 %v1360, %v1381
    %v1385 = vmul.f32 %v1361, %v1381
    %v1386 = vld [vmem:[%s9] sm:$0x1]
    %v1388 = vlaneseq
    %v1389 = vshrl.u32 %v1388, 7
    %v1390 = vsub.s32 0, %v1389
    %v1391 = vrot.slane %v1386, %v1390
    %v1393 = vmul.f32 %v1382, %v1391
    %v1394 = vmul.f32 %v1383, %v1391
    %v1395 = vmul.f32 %v1384, %v1391
    %v1396 = vmul.f32 %v1385, %v1391
    %v1397 = vld [vmem:[%s10] sm:$0x1]
    %v1399 = vlaneseq
    %v1400 = vshrl.u32 %v1399, 7
    %v1401 = vsub.s32 0, %v1400
    %v1402 = vrot.slane %v1397, %v1401
    %v1404 = vadd.f32 %v1393, %v1402
    %v1405 = vadd.f32 %v1394, %v1402
    %v1406 = vadd.f32 %v1395, %v1402
    %v1407 = vadd.f32 %v1396, %v1402
    %vm1408 = vcmp.gt.f32.partialorder %v1404, 0.0
    %vm1409 = vcmp.gt.f32.partialorder %v1405, 0.0
    %vm1410 = vcmp.gt.f32.partialorder %v1406, 0.0
    %vm1411 = vcmp.gt.f32.partialorder %v1407, 0.0
    %v1412 = vmin.f32 %v1404, 0.0
    %v1413 = vmin.f32 %v1405, 0.0
    %v1414 = vmin.f32 %v1406, 0.0
    %v1415 = vmin.f32 %v1407, 0.0
    %v1416 = vmul.f32 %v1412, 1.442695
    %v1417 = vpow.pop %v1416
    %v1418 = vmul.f32 %v1413, 1.442695
    %v1419 = vpow.pop %v1418
    %v1420 = vmul.f32 %v1414, 1.442695
    %v1421 = vpow.pop %v1420
    %v1422 = vmul.f32 %v1415, 1.442695
    %v1423 = vpow.pop %v1422
    %v1424 = vsub.f32 %v1417, 1.0
    %v1425 = vsub.f32 %v1419, 1.0
    %v1426 = vsub.f32 %v1421, 1.0
    %v1427 = vsub.f32 %v1423, 1.0
    %v1428 = vmul.f32 %v1424, 1.6732632
    %v1429 = vmul.f32 %v1425, 1.6732632
    %v1430 = vmul.f32 %v1426, 1.6732632
    %v1431 = vmul.f32 %v1427, 1.6732632
    %v1432 = vsel %vm1408, %v1404, %v1428
    %v1433 = vsel %vm1409, %v1405, %v1429
    %v1434 = vsel %vm1410, %v1406, %v1430
    %v1435 = vsel %vm1411, %v1407, %v1431
    %v1436 = vmul.f32 %v1432, 1.050701
    %v1437 = vmul.f32 %v1433, 1.050701
    %v1438 = vmul.f32 %v1434, 1.050701
    %v1439 = vmul.f32 %v1435, 1.050701
    %v1440 = vld [vmem:[%s13] sm:$0xff]
    %v1441 = vld [vmem:[%s13 + $0x8] sm:$0xff]
    %v1442 = vld [vmem:[%s13 + $0x10] sm:$0xff]
    %v1443 = vld [vmem:[%s13 + $0x18] sm:$0xff]
    %v1444 = vld [vmem:[%s14] sm:$0xff]
    %v1445 = vld [vmem:[%s14 + $0x8] sm:$0xff]
    %v1446 = vld [vmem:[%s14 + $0x10] sm:$0xff]
    %v1447 = vld [vmem:[%s14 + $0x18] sm:$0xff]
    %v1448 = vld [vmem:[%s15] sm:$0x1]
    %v1450 = vlaneseq
    %v1451 = vshrl.u32 %v1450, 7
    %v1452 = vsub.s32 0, %v1451
    %v1453 = vrot.slane %v1448, %v1452
    %v1456 = vsel %vm871, %v1436, 0
    %v1459 = vsel %vm871, %v1437, 0
    %v1462 = vsel %vm871, %v1438, 0
    %v1465 = vsel %vm871, %v1439, 0
    %1467 = vmatprep.subr.mxu0 0.0
    %1468 = vmatpush1.msra.mxu0 %v1440
    %1469 = vmatprep.subr.mxu0 0.0
    %1470 = vmatpush1.msra.mxu0 %v1441
    %1471 = vmatprep.subr.mxu0 0.0
    %1472 = vmatpush1.msra.mxu0 %v1442
    %1473 = vmatprep.subr.mxu0 0.0
    %1474 = vmatpush1.msra.mxu0 %v1443
    %1475 = vmatprep.subr.mxu0 0.0
    %1476 = vmatpush1.msra.mxu0 0.0
    %1477 = vmatprep.subr.mxu0 0.0
    %1478 = vmatpush1.msra.mxu0 0.0
    %1479 = vmatprep.subr.mxu0 0.0
    %1480 = vmatpush1.msra.mxu0 0.0
    %1481 = vmatprep.subr.mxu0 0.0
    %1482 = vmatpush1.msra.mxu0 0.0
    %1483 = vmatprep.subr.mxu0 0.0
    %1484 = vmatpush1.msra.mxu0 0.0
    %1485 = vmatprep.subr.mxu0 0.0
    %1486 = vmatpush1.msra.mxu0 0.0
    %1487 = vmatprep.subr.mxu0 0.0
    %1488 = vmatpush1.msra.mxu0 0.0
    %1489 = vmatprep.subr.mxu0 0.0
    %1490 = vmatpush1.msra.mxu0 0.0
    %1491 = vmatprep.subr.mxu0 0.0
    %1492 = vmatpush1.msra.mxu0 0.0
    %1493 = vmatprep.subr.mxu0 0.0
    %1494 = vmatpush1.msra.mxu0 0.0
    %1495 = vmatprep.subr.mxu0 0.0
    %1496 = vmatpush1.msra.mxu0 0.0
    %1497 = vmatprep.subr.mxu0 0.0
    %1498 = vmatpush1.msra.mxu0 0.0
    %1499 = vmatprep.subr.mxu0 0.0
    %1500 = vmatpush1.msra.mxu0 0.0
    %1501 = vmatprep.subr.mxu0 0.0
    %1502 = vmatpush1.msra.mxu0 0.0
    %1503 = vmatprep.subr.mxu0 0.0
    %1504 = vmatpush1.msra.mxu0 0.0
    %1505 = vmatprep.subr.mxu0 0.0
    %1506 = vmatpush1.msra.mxu0 0.0
    %1507 = vmatprep.subr.mxu0 0.0
    %1508 = vmatpush1.msra.mxu0 0.0
    %1509 = vmatprep.subr.mxu0 0.0
    %1510 = vmatpush1.msra.mxu0 0.0
    %1511 = vmatprep.subr.mxu0 0.0
    %1512 = vmatpush1.msra.mxu0 0.0
    %1513 = vmatprep.subr.mxu0 0.0
    %1514 = vmatpush1.msra.mxu0 0.0
    %1515 = vmatprep.subr.mxu0 0.0
    %1516 = vmatpush1.msra.mxu0 0.0
    %1517 = vmatprep.subr.mxu0 0.0
    %1518 = vmatpush1.msra.mxu0 0.0
    %1519 = vmatprep.subr.mxu0 0.0
    %1520 = vmatpush1.msra.mxu0 0.0
    %1521 = vmatprep.subr.mxu0 0.0
    %1522 = vmatpush1.msra.mxu0 0.0
    %1523 = vmatprep.subr.mxu0 0.0
    %1524 = vmatpush1.msra.mxu0 0.0
    %1525 = vmatprep.subr.mxu0 0.0
    %1526 = vmatpush1.msra.mxu0 0.0
    %1527 = vmatprep.subr.mxu0 0.0
    %1528 = vmatpush1.msra.mxu0 0.0
    %1529 = vmatprep.subr.mxu0 0.0
    %1530 = vmatpush1.msra.mxu0 0.0
    %1531 = vmatprep.mubr.f32.mxu0 0.0
    %1532 = vmatmul.mubr.f32.gmra.mrb[0].mxu0 %v1456
    %v1533 = vpop.f32.mrb[0].mxu0
    %v1534 = vadd.f32 %v1453, %v1533
    %v1535 = vpop.f32.mrb[0].mxu0
    %1536 = vmatprep.mubr.f32.mxu0 0.0
    %1537 = vmatmul.mubr.f32.gmra.mrb[0].mxu0 %v1459
    %v1538 = vpop.f32.mrb[0].mxu0
    %v1539 = vadd.f32 %v1453, %v1538
    %v1540 = vpop.f32.mrb[0].mxu0
    %1541 = vmatprep.mubr.f32.mxu0 0.0
    %1542 = vmatmul.mubr.f32.gmra.mrb[0].mxu0 %v1462
    %v1543 = vpop.f32.mrb[0].mxu0
    %v1544 = vadd.f32 %v1453, %v1543
    %v1545 = vpop.f32.mrb[0].mxu0
    %1546 = vmatprep.mubr.f32.mxu0 0.0
    %1547 = vmatmul.mubr.f32.gmra.mrb[0].mxu0 %v1465
    %v1548 = vpop.f32.mrb[0].mxu0
    %v1549 = vadd.f32 %v1453, %v1548
    %v1550 = vpop.f32.mrb[0].mxu0
    %1551 = vdwg.mxu0
    %v1552 = vsel %vm871, 0.0, 0
    %1554 = vmatprep.subr.mxu0 0.0
    %1555 = vmatpush1.msra.mxu0 %v1444
    %1556 = vmatprep.subr.mxu0 0.0
    %1557 = vmatpush1.msra.mxu0 %v1445
    %1558 = vmatprep.subr.mxu0 0.0
    %1559 = vmatpush1.msra.mxu0 %v1446
    %1560 = vmatprep.subr.mxu0 0.0
    %1561 = vmatpush1.msra.mxu0 %v1447
    %1562 = vmatprep.subr.mxu0 0.0
    %1563 = vmatpush1.msra.mxu0 0.0
    %1564 = vmatprep.subr.mxu0 0.0
    %1565 = vmatpush1.msra.mxu0 0.0
    %1566 = vmatprep.subr.mxu0 0.0
    %1567 = vmatpush1.msra.mxu0 0.0
    %1568 = vmatprep.subr.mxu0 0.0
    %1569 = vmatpush1.msra.mxu0 0.0
    %1570 = vmatprep.subr.mxu0 0.0
    %1571 = vmatpush1.msra.mxu0 0.0
    %1572 = vmatprep.subr.mxu0 0.0
    %1573 = vmatpush1.msra.mxu0 0.0
    %1574 = vmatprep.subr.mxu0 0.0
    %1575 = vmatpush1.msra.mxu0 0.0
    %1576 = vmatprep.subr.mxu0 0.0
    %1577 = vmatpush1.msra.mxu0 0.0
    %1578 = vmatprep.subr.mxu0 0.0
    %1579 = vmatpush1.msra.mxu0 0.0
    %1580 = vmatprep.subr.mxu0 0.0
    %1581 = vmatpush1.msra.mxu0 0.0
    %1582 = vmatprep.subr.mxu0 0.0
    %1583 = vmatpush1.msra.mxu0 0.0
    %1584 = vmatprep.subr.mxu0 0.0
    %1585 = vmatpush1.msra.mxu0 0.0
    %1586 = vmatprep.subr.mxu0 0.0
    %1587 = vmatpush1.msra.mxu0 0.0
    %1588 = vmatprep.subr.mxu0 0.0
    %1589 = vmatpush1.msra.mxu0 0.0
    %1590 = vmatprep.subr.mxu0 0.0
    %1591 = vmatpush1.msra.mxu0 0.0
    %1592 = vmatprep.subr.mxu0 0.0
    %1593 = vmatpush1.msra.mxu0 0.0
    %1594 = vmatprep.subr.mxu0 0.0
    %1595 = vmatpush1.msra.mxu0 0.0
    %1596 = vmatprep.subr.mxu0 0.0
    %1597 = vmatpush1.msra.mxu0 0.0
    %1598 = vmatprep.subr.mxu0 0.0
    %1599 = vmatpush1.msra.mxu0 0.0
    %1600 = vmatprep.subr.mxu0 0.0
    %1601 = vmatpush1.msra.mxu0 0.0
    %1602 = vmatprep.subr.mxu0 0.0
    %1603 = vmatpush1.msra.mxu0 0.0
    %1604 = vmatprep.subr.mxu0 0.0
    %1605 = vmatpush1.msra.mxu0 0.0
    %1606 = vmatprep.subr.mxu0 0.0
    %1607 = vmatpush1.msra.mxu0 0.0
    %1608 = vmatprep.subr.mxu0 0.0
    %1609 = vmatpush1.msra.mxu0 0.0
    %1610 = vmatprep.subr.mxu0 0.0
    %1611 = vmatpush1.msra.mxu0 0.0
    %1612 = vmatprep.subr.mxu0 0.0
    %1613 = vmatpush1.msra.mxu0 0.0
    %1614 = vmatprep.subr.mxu0 0.0
    %1615 = vmatpush1.msra.mxu0 0.0
    %1616 = vmatprep.subr.mxu0 0.0
    %1617 = vmatpush1.msra.mxu0 0.0
    %1618 = vmatprep.mubr.f32.mxu0 0.0
    %1619 = vmatmul.mubr.f32.gmra.mrb[0].mxu0 %v1552
    %v1620 = vpop.f32.mrb[0].mxu0
    %v1621 = vadd.f32 0.0, %v1620
    %v1622 = vpop.f32.mrb[0].mxu0
    %1623 = vdwg.mxu0
    %v1624 = vadd.f32 %v1534, %v1621
    %v1625 = vxor.u32 %v1624, 2147483648
    %v1626 = vmul.f32 %v1625, 1.442695
    %v1627 = vpow.pop %v1626
    %v1628 = vadd.f32 %v1627, 1.0
    %v1629 = vrcp.pop %v1628
    %v1630 = vmul.f32 1.0, %v1629
    %v1631 = vtanh.pop %v1624
    %v1632 = vmul.f32 %v1630, 0.0
    %1634 = vrot.lane.b32.xlu0 %v1631, 64
    %v1635 = vpop.permute.xlu0 %1634
    %v1637 = vmul.f32 %v1630, %v1635
    %1639 = vrot.lane.b32.xlu0 %v1637, 32
    %v1640 = vpop.permute.xlu0 %1639
    %v1642 = vadd.f32 %v1632, %v1640
    %v1643 = vtanh.pop %v1642
    %1645 = vrot.lane.b32.xlu0 %v1643, 64
    %v1646 = vpop.permute.xlu0 %1645
    %v1648 = vmul.f32 %v1630, %v1646
    %1650 = vrot.lane.b32.xlu0 %v1648, 32
    %v1651 = vpop.permute.xlu0 %1650
    %v1652 = vsel %vm871, %v1651, 0
    %1654 = vmatprep.subr.mxu0 0.0
    %1655 = vmatpush1.msra.mxu0 %v1444
    %1656 = vmatprep.subr.mxu0 0.0
    %1657 = vmatpush1.msra.mxu0 %v1445
    %1658 = vmatprep.subr.mxu0 0.0
    %1659 = vmatpush1.msra.mxu0 %v1446
    %1660 = vmatprep.subr.mxu0 0.0
    %1661 = vmatpush1.msra.mxu0 %v1447
    %1662 = vmatprep.subr.mxu0 0.0
    %1663 = vmatpush1.msra.mxu0 0.0
    %1664 = vmatprep.subr.mxu0 0.0
    %1665 = vmatpush1.msra.mxu0 0.0
    %1666 = vmatprep.subr.mxu0 0.0
    %1667 = vmatpush1.msra.mxu0 0.0
    %1668 = vmatprep.subr.mxu0 0.0
    %1669 = vmatpush1.msra.mxu0 0.0
    %1670 = vmatprep.subr.mxu0 0.0
    %1671 = vmatpush1.msra.mxu0 0.0
    %1672 = vmatprep.subr.mxu0 0.0
    %1673 = vmatpush1.msra.mxu0 0.0
    %1674 = vmatprep.subr.mxu0 0.0
    %1675 = vmatpush1.msra.mxu0 0.0
    %1676 = vmatprep.subr.mxu0 0.0
    %1677 = vmatpush1.msra.mxu0 0.0
    %1678 = vmatprep.subr.mxu0 0.0
    %1679 = vmatpush1.msra.mxu0 0.0
    %1680 = vmatprep.subr.mxu0 0.0
    %1681 = vmatpush1.msra.mxu0 0.0
    %1682 = vmatprep.subr.mxu0 0.0
    %1683 = vmatpush1.msra.mxu0 0.0
    %1684 = vmatprep.subr.mxu0 0.0
    %1685 = vmatpush1.msra.mxu0 0.0
    %1686 = vmatprep.subr.mxu0 0.0
    %1687 = vmatpush1.msra.mxu0 0.0
    %1688 = vmatprep.subr.mxu0 0.0
    %1689 = vmatpush1.msra.mxu0 0.0
    %1690 = vmatprep.subr.mxu0 0.0
    %1691 = vmatpush1.msra.mxu0 0.0
    %1692 = vmatprep.subr.mxu0 0.0
    %1693 = vmatpush1.msra.mxu0 0.0
    %1694 = vmatprep.subr.mxu0 0.0
    %1695 = vmatpush1.msra.mxu0 0.0
    %1696 = vmatprep.subr.mxu0 0.0
    %1697 = vmatpush1.msra.mxu0 0.0
    %1698 = vmatprep.subr.mxu0 0.0
    %1699 = vmatpush1.msra.mxu0 0.0
    %1700 = vmatprep.subr.mxu0 0.0
    %1701 = vmatpush1.msra.mxu0 0.0
    %1702 = vmatprep.subr.mxu0 0.0
    %1703 = vmatpush1.msra.mxu0 0.0
    %1704 = vmatprep.subr.mxu0 0.0
    %1705 = vmatpush1.msra.mxu0 0.0
    %1706 = vmatprep.subr.mxu0 0.0
    %1707 = vmatpush1.msra.mxu0 0.0
    %1708 = vmatprep.subr.mxu0 0.0
    %1709 = vmatpush1.msra.mxu0 0.0
    %1710 = vmatprep.subr.mxu0 0.0
    %1711 = vmatpush1.msra.mxu0 0.0
    %1712 = vmatprep.subr.mxu0 0.0
    %1713 = vmatpush1.msra.mxu0 0.0
    %1714 = vmatprep.subr.mxu0 0.0
    %1715 = vmatpush1.msra.mxu0 0.0
    %1716 = vmatprep.subr.mxu0 0.0
    %1717 = vmatpush1.msra.mxu0 0.0
    %1718 = vmatprep.mubr.f32.mxu0 0.0
    %1719 = vmatmul.mubr.f32.gmra.mrb[0].mxu0 %v1652
    %v1720 = vpop.f32.mrb[0].mxu0
    %v1721 = vadd.f32 0.0, %v1720
    %v1722 = vpop.f32.mrb[0].mxu0
    %1723 = vdwg.mxu0
    %v1725 = vrot.slane %v1721, 6
    %v1727 = vadd.f32 %v1534, %v1725
    %v1728 = vxor.u32 %v1727, 2147483648
    %v1729 = vmul.f32 %v1728, 1.442695
    %v1730 = vpow.pop %v1729
    %v1731 = vadd.f32 %v1730, 1.0
    %v1732 = vrcp.pop %v1731
    %v1733 = vmul.f32 1.0, %v1732
    %v1734 = vtanh.pop %v1727
    %v1736 = vrot.slane %v1642, 6
    %v1738 = vmul.f32 %v1733, %v1736
    %1740 = vrot.lane.b32.xlu0 %v1734, 64
    %v1741 = vpop.permute.xlu0 %1740
    %v1743 = vmul.f32 %v1733, %v1741
    %1745 = vrot.lane.b32.xlu0 %v1743, 32
    %v1746 = vpop.permute.xlu0 %1745
    %v1748 = vadd.f32 %v1738, %v1746
    %v1749 = vtanh.pop %v1748
    %1751 = vrot.lane.b32.xlu0 %v1749, 64
    %v1752 = vpop.permute.xlu0 %1751
    %v1754 = vmul.f32 %v1733, %v1752
    %v1756 = vrot.slane %v1754, 2
    %1757 = vrot.lane.b32.xlu0 %v1756, 32
    %v1758 = vpop.permute.xlu0 %1757
    %v1759 = vsel %vm871, %v1758, 0
    %1761 = vmatprep.subr.mxu0 0.0
    %1762 = vmatpush1.msra.mxu0 %v1444
    %1763 = vmatprep.subr.mxu0 0.0
    %1764 = vmatpush1.msra.mxu0 %v1445
    %1765 = vmatprep.subr.mxu0 0.0
    %1766 = vmatpush1.msra.mxu0 %v1446
    %1767 = vmatprep.subr.mxu0 0.0
    %1768 = vmatpush1.msra.mxu0 %v1447
    %1769 = vmatprep.subr.mxu0 0.0
    %1770 = vmatpush1.msra.mxu0 0.0
    %1771 = vmatprep.subr.mxu0 0.0
    %1772 = vmatpush1.msra.mxu0 0.0
    %1773 = vmatprep.subr.mxu0 0.0
    %1774 = vmatpush1.msra.mxu0 0.0
    %1775 = vmatprep.subr.mxu0 0.0
    %1776 = vmatpush1.msra.mxu0 0.0
    %1777 = vmatprep.subr.mxu0 0.0
    %1778 = vmatpush1.msra.mxu0 0.0
    %1779 = vmatprep.subr.mxu0 0.0
    %1780 = vmatpush1.msra.mxu0 0.0
    %1781 = vmatprep.subr.mxu0 0.0
    %1782 = vmatpush1.msra.mxu0 0.0
    %1783 = vmatprep.subr.mxu0 0.0
    %1784 = vmatpush1.msra.mxu0 0.0
    %1785 = vmatprep.subr.mxu0 0.0
    %1786 = vmatpush1.msra.mxu0 0.0
    %1787 = vmatprep.subr.mxu0 0.0
    %1788 = vmatpush1.msra.mxu0 0.0
    %1789 = vmatprep.subr.mxu0 0.0
    %1790 = vmatpush1.msra.mxu0 0.0
    %1791 = vmatprep.subr.mxu0 0.0
    %1792 = vmatpush1.msra.mxu0 0.0
    %1793 = vmatprep.subr.mxu0 0.0
    %1794 = vmatpush1.msra.mxu0 0.0
    %1795 = vmatprep.subr.mxu0 0.0
    %1796 = vmatpush1.msra.mxu0 0.0
    %1797 = vmatprep.subr.mxu0 0.0
    %1798 = vmatpush1.msra.mxu0 0.0
    %1799 = vmatprep.subr.mxu0 0.0
    %1800 = vmatpush1.msra.mxu0 0.0
    %1801 = vmatprep.subr.mxu0 0.0
    %1802 = vmatpush1.msra.mxu0 0.0
    %1803 = vmatprep.subr.mxu0 0.0
    %1804 = vmatpush1.msra.mxu0 0.0
    %1805 = vmatprep.subr.mxu0 0.0
    %1806 = vmatpush1.msra.mxu0 0.0
    %1807 = vmatprep.subr.mxu0 0.0
    %1808 = vmatpush1.msra.mxu0 0.0
    %1809 = vmatprep.subr.mxu0 0.0
    %1810 = vmatpush1.msra.mxu0 0.0
    %1811 = vmatprep.subr.mxu0 0.0
    %1812 = vmatpush1.msra.mxu0 0.0
    %1813 = vmatprep.subr.mxu0 0.0
    %1814 = vmatpush1.msra.mxu0 0.0
    %1815 = vmatprep.subr.mxu0 0.0
    %1816 = vmatpush1.msra.mxu0 0.0
    %1817 = vmatprep.subr.mxu0 0.0
    %1818 = vmatpush1.msra.mxu0 0.0
    %1819 = vmatprep.subr.mxu0 0.0
    %1820 = vmatpush1.msra.mxu0 0.0
    %1821 = vmatprep.subr.mxu0 0.0
    %1822 = vmatpush1.msra.mxu0 0.0
    %1823 = vmatprep.subr.mxu0 0.0
    %1824 = vmatpush1.msra.mxu0 0.0
    %1825 = vmatprep.mubr.f32.mxu0 0.0
    %1826 = vmatmul.mubr.f32.gmra.mrb[0].mxu0 %v1759
    %v1827 = vpop.f32.mrb[0].mxu0
    %v1828 = vadd.f32 0.0, %v1827
    %v1829 = vpop.f32.mrb[0].mxu0
    %1830 = vdwg.mxu0
    %v1832 = vrot.slane %v1828, 4
    %v1834 = vadd.f32 %v1534, %v1832
    %v1835 = vxor.u32 %v1834, 2147483648
    %v1836 = vmul.f32 %v1835, 1.442695
    %v1837 = vpow.pop %v1836
    %v1838 = vadd.f32 %v1837, 1.0
    %v1839 = vrcp.pop %v1838
    %v1840 = vmul.f32 1.0, %v1839
    %v1841 = vtanh.pop %v1834
    %v1843 = vrot.slane %v1748, 6
    %v1845 = vmul.f32 %v1840, %v1843
    %1847 = vrot.lane.b32.xlu0 %v1841, 64
    %v1848 = vpop.permute.xlu0 %1847
    %v1850 = vmul.f32 %v1840, %v1848
    %1852 = vrot.lane.b32.xlu0 %v1850, 32
    %v1853 = vpop.permute.xlu0 %1852
    %v1855 = vadd.f32 %v1845, %v1853
    %v1856 = vtanh.pop %v1855
    %1858 = vrot.lane.b32.xlu0 %v1856, 64
    %v1859 = vpop.permute.xlu0 %1858
    %v1861 = vmul.f32 %v1840, %v1859
    %v1863 = vrot.slane %v1861, 4
    %1864 = vrot.lane.b32.xlu0 %v1863, 32
    %v1865 = vpop.permute.xlu0 %1864
    %v1866 = vsel %vm871, %v1865, 0
    %1868 = vmatprep.subr.mxu0 0.0
    %1869 = vmatpush1.msra.mxu0 %v1444
    %1870 = vmatprep.subr.mxu0 0.0
    %1871 = vmatpush1.msra.mxu0 %v1445
    %1872 = vmatprep.subr.mxu0 0.0
    %1873 = vmatpush1.msra.mxu0 %v1446
    %1874 = vmatprep.subr.mxu0 0.0
    %1875 = vmatpush1.msra.mxu0 %v1447
    %1876 = vmatprep.subr.mxu0 0.0
    %1877 = vmatpush1.msra.mxu0 0.0
    %1878 = vmatprep.subr.mxu0 0.0
    %1879 = vmatpush1.msra.mxu0 0.0
    %1880 = vmatprep.subr.mxu0 0.0
    %1881 = vmatpush1.msra.mxu0 0.0
    %1882 = vmatprep.subr.mxu0 0.0
    %1883 = vmatpush1.msra.mxu0 0.0
    %1884 = vmatprep.subr.mxu0 0.0
    %1885 = vmatpush1.msra.mxu0 0.0
    %1886 = vmatprep.subr.mxu0 0.0
    %1887 = vmatpush1.msra.mxu0 0.0
    %1888 = vmatprep.subr.mxu0 0.0
    %1889 = vmatpush1.msra.mxu0 0.0
    %1890 = vmatprep.subr.mxu0 0.0
    %1891 = vmatpush1.msra.mxu0 0.0
    %1892 = vmatprep.subr.mxu0 0.0
    %1893 = vmatpush1.msra.mxu0 0.0
    %1894 = vmatprep.subr.mxu0 0.0
    %1895 = vmatpush1.msra.mxu0 0.0
    %1896 = vmatprep.subr.mxu0 0.0
    %1897 = vmatpush1.msra.mxu0 0.0
    %1898 = vmatprep.subr.mxu0 0.0
    %1899 = vmatpush1.msra.mxu0 0.0
    %1900 = vmatprep.subr.mxu0 0.0
    %1901 = vmatpush1.msra.mxu0 0.0
    %1902 = vmatprep.subr.mxu0 0.0
    %1903 = vmatpush1.msra.mxu0 0.0
    %1904 = vmatprep.subr.mxu0 0.0
    %1905 = vmatpush1.msra.mxu0 0.0
    %1906 = vmatprep.subr.mxu0 0.0
    %1907 = vmatpush1.msra.mxu0 0.0
    %1908 = vmatprep.subr.mxu0 0.0
    %1909 = vmatpush1.msra.mxu0 0.0
    %1910 = vmatprep.subr.mxu0 0.0
    %1911 = vmatpush1.msra.mxu0 0.0
    %1912 = vmatprep.subr.mxu0 0.0
    %1913 = vmatpush1.msra.mxu0 0.0
    %1914 = vmatprep.subr.mxu0 0.0
    %1915 = vmatpush1.msra.mxu0 0.0
    %1916 = vmatprep.subr.mxu0 0.0
    %1917 = vmatpush1.msra.mxu0 0.0
    %1918 = vmatprep.subr.mxu0 0.0
    %1919 = vmatpush1.msra.mxu0 0.0
    %1920 = vmatprep.subr.mxu0 0.0
    %1921 = vmatpush1.msra.mxu0 0.0
    %1922 = vmatprep.subr.mxu0 0.0
    %1923 = vmatpush1.msra.mxu0 0.0
    %1924 = vmatprep.subr.mxu0 0.0
    %1925 = vmatpush1.msra.mxu0 0.0
    %1926 = vmatprep.subr.mxu0 0.0
    %1927 = vmatpush1.msra.mxu0 0.0
    %1928 = vmatprep.subr.mxu0 0.0
    %1929 = vmatpush1.msra.mxu0 0.0
    %1930 = vmatprep.subr.mxu0 0.0
    %1931 = vmatpush1.msra.mxu0 0.0
    %1932 = vmatprep.mubr.f32.mxu0 0.0
    %1933 = vmatmul.mubr.f32.gmra.mrb[0].mxu0 %v1866
    %v1934 = vpop.f32.mrb[0].mxu0
    %v1935 = vadd.f32 0.0, %v1934
    %v1936 = vpop.f32.mrb[0].mxu0
    %1937 = vdwg.mxu0
    %v1939 = vrot.slane %v1935, 2
    %v1941 = vadd.f32 %v1534, %v1939
    %v1942 = vxor.u32 %v1941, 2147483648
    %v1943 = vmul.f32 %v1942, 1.442695
    %v1944 = vpow.pop %v1943
    %v1945 = vadd.f32 %v1944, 1.0
    %v1946 = vrcp.pop %v1945
    %v1947 = vmul.f32 1.0, %v1946
    %v1948 = vtanh.pop %v1941
    %v1950 = vrot.slane %v1855, 6
    %v1952 = vmul.f32 %v1947, %v1950
    %1954 = vrot.lane.b32.xlu0 %v1948, 64
    %v1955 = vpop.permute.xlu0 %1954
    %v1957 = vmul.f32 %v1947, %v1955
    %1959 = vrot.lane.b32.xlu0 %v1957, 32
    %v1960 = vpop.permute.xlu0 %1959
    %v1962 = vadd.f32 %v1952, %v1960
    %v1963 = vtanh.pop %v1962
    %1965 = vrot.lane.b32.xlu0 %v1963, 64
    %v1966 = vpop.permute.xlu0 %1965
    %v1968 = vmul.f32 %v1947, %v1966
    %v1970 = vrot.slane %v1968, 6
    %1971 = vrot.lane.b32.xlu0 %v1970, 32
    %v1972 = vpop.permute.xlu0 %1971
    %v1973 = vsel %vm871, %v1972, 0
    %1975 = vmatprep.subr.mxu0 0.0
    %1976 = vmatpush1.msra.mxu0 %v1444
    %1977 = vmatprep.subr.mxu0 0.0
    %1978 = vmatpush1.msra.mxu0 %v1445
    %1979 = vmatprep.subr.mxu0 0.0
    %1980 = vmatpush1.msra.mxu0 %v1446
    %1981 = vmatprep.subr.mxu0 0.0
    %1982 = vmatpush1.msra.mxu0 %v1447
    %1983 = vmatprep.subr.mxu0 0.0
    %1984 = vmatpush1.msra.mxu0 0.0
    %1985 = vmatprep.subr.mxu0 0.0
    %1986 = vmatpush1.msra.mxu0 0.0
    %1987 = vmatprep.subr.mxu0 0.0
    %1988 = vmatpush1.msra.mxu0 0.0
    %1989 = vmatprep.subr.mxu0 0.0
    %1990 = vmatpush1.msra.mxu0 0.0
    %1991 = vmatprep.subr.mxu0 0.0
    %1992 = vmatpush1.msra.mxu0 0.0
    %1993 = vmatprep.subr.mxu0 0.0
    %1994 = vmatpush1.msra.mxu0 0.0
    %1995 = vmatprep.subr.mxu0 0.0
    %1996 = vmatpush1.msra.mxu0 0.0
    %1997 = vmatprep.subr.mxu0 0.0
    %1998 = vmatpush1.msra.mxu0 0.0
    %1999 = vmatprep.subr.mxu0 0.0
    %2000 = vmatpush1.msra.mxu0 0.0
    %2001 = vmatprep.subr.mxu0 0.0
    %2002 = vmatpush1.msra.mxu0 0.0
    %2003 = vmatprep.subr.mxu0 0.0
    %2004 = vmatpush1.msra.mxu0 0.0
    %2005 = vmatprep.subr.mxu0 0.0
    %2006 = vmatpush1.msra.mxu0 0.0
    %2007 = vmatprep.subr.mxu0 0.0
    %2008 = vmatpush1.msra.mxu0 0.0
    %2009 = vmatprep.subr.mxu0 0.0
    %2010 = vmatpush1.msra.mxu0 0.0
    %2011 = vmatprep.subr.mxu0 0.0
    %2012 = vmatpush1.msra.mxu0 0.0
    %2013 = vmatprep.subr.mxu0 0.0
    %2014 = vmatpush1.msra.mxu0 0.0
    %2015 = vmatprep.subr.mxu0 0.0
    %2016 = vmatpush1.msra.mxu0 0.0
    %2017 = vmatprep.subr.mxu0 0.0
    %2018 = vmatpush1.msra.mxu0 0.0
    %2019 = vmatprep.subr.mxu0 0.0
    %2020 = vmatpush1.msra.mxu0 0.0
    %2021 = vmatprep.subr.mxu0 0.0
    %2022 = vmatpush1.msra.mxu0 0.0
    %2023 = vmatprep.subr.mxu0 0.0
    %2024 = vmatpush1.msra.mxu0 0.0
    %2025 = vmatprep.subr.mxu0 0.0
    %2026 = vmatpush1.msra.mxu0 0.0
    %2027 = vmatprep.subr.mxu0 0.0
    %2028 = vmatpush1.msra.mxu0 0.0
    %2029 = vmatprep.subr.mxu0 0.0
    %2030 = vmatpush1.msra.mxu0 0.0
    %2031 = vmatprep.subr.mxu0 0.0
    %2032 = vmatpush1.msra.mxu0 0.0
    %2033 = vmatprep.subr.mxu0 0.0
    %2034 = vmatpush1.msra.mxu0 0.0
    %2035 = vmatprep.subr.mxu0 0.0
    %2036 = vmatpush1.msra.mxu0 0.0
    %2037 = vmatprep.subr.mxu0 0.0
    %2038 = vmatpush1.msra.mxu0 0.0
    %2039 = vmatprep.mubr.f32.mxu0 0.0
    %2040 = vmatmul.mubr.f32.gmra.mrb[0].mxu0 %v1973
    %v2041 = vpop.f32.mrb[0].mxu0
    %v2042 = vadd.f32 0.0, %v2041
    %v2043 = vpop.f32.mrb[0].mxu0
    %2044 = vdwg.mxu0
    %v2045 = vadd.f32 %v1539, %v2042
    %v2046 = vxor.u32 %v2045, 2147483648
    %v2047 = vmul.f32 %v2046, 1.442695
    %v2048 = vpow.pop %v2047
    %v2049 = vadd.f32 %v2048, 1.0
    %v2050 = vrcp.pop %v2049
    %v2051 = vmul.f32 1.0, %v2050
    %v2052 = vtanh.pop %v2045
    %v2054 = vrot.slane %v1962, 6
    %v2056 = vmul.f32 %v2051, %v2054
    %2058 = vrot.lane.b32.xlu0 %v2052, 64
    %v2059 = vpop.permute.xlu0 %2058
    %v2061 = vmul.f32 %v2051, %v2059
    %2063 = vrot.lane.b32.xlu0 %v2061, 32
    %v2064 = vpop.permute.xlu0 %2063
    %v2066 = vadd.f32 %v2056, %v2064
    %v2067 = vtanh.pop %v2066
    %2069 = vrot.lane.b32.xlu0 %v2067, 64
    %v2070 = vpop.permute.xlu0 %2069
    %v2072 = vmul.f32 %v2051, %v2070
    %2074 = vrot.lane.b32.xlu0 %v2072, 32
    %v2075 = vpop.permute.xlu0 %2074
    %v2076 = vsel %vm871, %v2075, 0
    %2078 = vmatprep.subr.mxu0 0.0
    %2079 = vmatpush1.msra.mxu0 %v1444
    %2080 = vmatprep.subr.mxu0 0.0
    %2081 = vmatpush1.msra.mxu0 %v1445
    %2082 = vmatprep.subr.mxu0 0.0
    %2083 = vmatpush1.msra.mxu0 %v1446
    %2084 = vmatprep.subr.mxu0 0.0
    %2085 = vmatpush1.msra.mxu0 %v1447
    %2086 = vmatprep.subr.mxu0 0.0
    %2087 = vmatpush1.msra.mxu0 0.0
    %2088 = vmatprep.subr.mxu0 0.0
    %2089 = vmatpush1.msra.mxu0 0.0
    %2090 = vmatprep.subr.mxu0 0.0
    %2091 = vmatpush1.msra.mxu0 0.0
    %2092 = vmatprep.subr.mxu0 0.0
    %2093 = vmatpush1.msra.mxu0 0.0
    %2094 = vmatprep.subr.mxu0 0.0
    %2095 = vmatpush1.msra.mxu0 0.0
    %2096 = vmatprep.subr.mxu0 0.0
    %2097 = vmatpush1.msra.mxu0 0.0
    %2098 = vmatprep.subr.mxu0 0.0
    %2099 = vmatpush1.msra.mxu0 0.0
    %2100 = vmatprep.subr.mxu0 0.0
    %2101 = vmatpush1.msra.mxu0 0.0
    %2102 = vmatprep.subr.mxu0 0.0
    %2103 = vmatpush1.msra.mxu0 0.0
    %2104 = vmatprep.subr.mxu0 0.0
    %2105 = vmatpush1.msra.mxu0 0.0
    %2106 = vmatprep.subr.mxu0 0.0
    %2107 = vmatpush1.msra.mxu0 0.0
    %2108 = vmatprep.subr.mxu0 0.0
    %2109 = vmatpush1.msra.mxu0 0.0
    %2110 = vmatprep.subr.mxu0 0.0
    %2111 = vmatpush1.msra.mxu0 0.0
    %2112 = vmatprep.subr.mxu0 0.0
    %2113 = vmatpush1.msra.mxu0 0.0
    %2114 = vmatprep.subr.mxu0 0.0
    %2115 = vmatpush1.msra.mxu0 0.0
    %2116 = vmatprep.subr.mxu0 0.0
    %2117 = vmatpush1.msra.mxu0 0.0
    %2118 = vmatprep.subr.mxu0 0.0
    %2119 = vmatpush1.msra.mxu0 0.0
    %2120 = vmatprep.subr.mxu0 0.0
    %2121 = vmatpush1.msra.mxu0 0.0
    %2122 = vmatprep.subr.mxu0 0.0
    %2123 = vmatpush1.msra.mxu0 0.0
    %2124 = vmatprep.subr.mxu0 0.0
    %2125 = vmatpush1.msra.mxu0 0.0
    %2126 = vmatprep.subr.mxu0 0.0
    %2127 = vmatpush1.msra.mxu0 0.0
    %2128 = vmatprep.subr.mxu0 0.0
    %2129 = vmatpush1.msra.mxu0 0.0
    %2130 = vmatprep.subr.mxu0 0.0
    %2131 = vmatpush1.msra.mxu0 0.0
    %2132 = vmatprep.subr.mxu0 0.0
    %2133 = vmatpush1.msra.mxu0 0.0
    %2134 = vmatprep.subr.mxu0 0.0
    %2135 = vmatpush1.msra.mxu0 0.0
    %2136 = vmatprep.subr.mxu0 0.0
    %2137 = vmatpush1.msra.mxu0 0.0
    %2138 = vmatprep.subr.mxu0 0.0
    %2139 = vmatpush1.msra.mxu0 0.0
    %2140 = vmatprep.subr.mxu0 0.0
    %2141 = vmatpush1.msra.mxu0 0.0
    %2142 = vmatprep.mubr.f32.mxu0 0.0
    %2143 = vmatmul.mubr.f32.gmra.mrb[0].mxu0 %v2076
    %v2144 = vpop.f32.mrb[0].mxu0
    %v2145 = vadd.f32 0.0, %v2144
    %v2146 = vpop.f32.mrb[0].mxu0
    %2147 = vdwg.mxu0
    %v2149 = vrot.slane %v2145, 6
    %v2151 = vadd.f32 %v1539, %v2149
    %v2152 = vxor.u32 %v2151, 2147483648
    %v2153 = vmul.f32 %v2152, 1.442695
    %v2154 = vpow.pop %v2153
    %v2155 = vadd.f32 %v2154, 1.0
    %v2156 = vrcp.pop %v2155
    %v2157 = vmul.f32 1.0, %v2156
    %v2158 = vtanh.pop %v2151
    %v2160 = vrot.slane %v2066, 6
    %v2162 = vmul.f32 %v2157, %v2160
    %2164 = vrot.lane.b32.xlu0 %v2158, 64
    %v2165 = vpop.permute.xlu0 %2164
    %v2167 = vmul.f32 %v2157, %v2165
    %2169 = vrot.lane.b32.xlu0 %v2167, 32
    %v2170 = vpop.permute.xlu0 %2169
    %v2172 = vadd.f32 %v2162, %v2170
    %v2173 = vtanh.pop %v2172
    %2175 = vrot.lane.b32.xlu0 %v2173, 64
    %v2176 = vpop.permute.xlu0 %2175
    %v2178 = vmul.f32 %v2157, %v2176
    %v2180 = vrot.slane %v2178, 2
    %2181 = vrot.lane.b32.xlu0 %v2180, 32
    %v2182 = vpop.permute.xlu0 %2181
    %v2183 = vsel %vm871, %v2182, 0
    %2185 = vmatprep.subr.mxu0 0.0
    %2186 = vmatpush1.msra.mxu0 %v1444
    %2187 = vmatprep.subr.mxu0 0.0
    %2188 = vmatpush1.msra.mxu0 %v1445
    %2189 = vmatprep.subr.mxu0 0.0
    %2190 = vmatpush1.msra.mxu0 %v1446
    %2191 = vmatprep.subr.mxu0 0.0
    %2192 = vmatpush1.msra.mxu0 %v1447
    %2193 = vmatprep.subr.mxu0 0.0
    %2194 = vmatpush1.msra.mxu0 0.0
    %2195 = vmatprep.subr.mxu0 0.0
    %2196 = vmatpush1.msra.mxu0 0.0
    %2197 = vmatprep.subr.mxu0 0.0
    %2198 = vmatpush1.msra.mxu0 0.0
    %2199 = vmatprep.subr.mxu0 0.0
    %2200 = vmatpush1.msra.mxu0 0.0
    %2201 = vmatprep.subr.mxu0 0.0
    %2202 = vmatpush1.msra.mxu0 0.0
    %2203 = vmatprep.subr.mxu0 0.0
    %2204 = vmatpush1.msra.mxu0 0.0
    %2205 = vmatprep.subr.mxu0 0.0
    %2206 = vmatpush1.msra.mxu0 0.0
    %2207 = vmatprep.subr.mxu0 0.0
    %2208 = vmatpush1.msra.mxu0 0.0
    %2209 = vmatprep.subr.mxu0 0.0
    %2210 = vmatpush1.msra.mxu0 0.0
    %2211 = vmatprep.subr.mxu0 0.0
    %2212 = vmatpush1.msra.mxu0 0.0
    %2213 = vmatprep.subr.mxu0 0.0
    %2214 = vmatpush1.msra.mxu0 0.0
    %2215 = vmatprep.subr.mxu0 0.0
    %2216 = vmatpush1.msra.mxu0 0.0
    %2217 = vmatprep.subr.mxu0 0.0
    %2218 = vmatpush1.msra.mxu0 0.0
    %2219 = vmatprep.subr.mxu0 0.0
    %2220 = vmatpush1.msra.mxu0 0.0
    %2221 = vmatprep.subr.mxu0 0.0
    %2222 = vmatpush1.msra.mxu0 0.0
    %2223 = vmatprep.subr.mxu0 0.0
    %2224 = vmatpush1.msra.mxu0 0.0
    %2225 = vmatprep.subr.mxu0 0.0
    %2226 = vmatpush1.msra.mxu0 0.0
    %2227 = vmatprep.subr.mxu0 0.0
    %2228 = vmatpush1.msra.mxu0 0.0
    %2229 = vmatprep.subr.mxu0 0.0
    %2230 = vmatpush1.msra.mxu0 0.0
    %2231 = vmatprep.subr.mxu0 0.0
    %2232 = vmatpush1.msra.mxu0 0.0
    %2233 = vmatprep.subr.mxu0 0.0
    %2234 = vmatpush1.msra.mxu0 0.0
    %2235 = vmatprep.subr.mxu0 0.0
    %2236 = vmatpush1.msra.mxu0 0.0
    %2237 = vmatprep.subr.mxu0 0.0
    %2238 = vmatpush1.msra.mxu0 0.0
    %2239 = vmatprep.subr.mxu0 0.0
    %2240 = vmatpush1.msra.mxu0 0.0
    %2241 = vmatprep.subr.mxu0 0.0
    %2242 = vmatpush1.msra.mxu0 0.0
    %2243 = vmatprep.subr.mxu0 0.0
    %2244 = vmatpush1.msra.mxu0 0.0
    %2245 = vmatprep.subr.mxu0 0.0
    %2246 = vmatpush1.msra.mxu0 0.0
    %2247 = vmatprep.subr.mxu0 0.0
    %2248 = vmatpush1.msra.mxu0 0.0
    %2249 = vmatprep.mubr.f32.mxu0 0.0
    %2250 = vmatmul.mubr.f32.gmra.mrb[0].mxu0 %v2183
    %v2251 = vpop.f32.mrb[0].mxu0
    %v2252 = vadd.f32 0.0, %v2251
    %v2253 = vpop.f32.mrb[0].mxu0
    %2254 = vdwg.mxu0
    %v2256 = vrot.slane %v2252, 4
    %v2258 = vadd.f32 %v1539, %v2256
    %v2259 = vxor.u32 %v2258, 2147483648
    %v2260 = vmul.f32 %v2259, 1.442695
    %v2261 = vpow.pop %v2260
    %v2262 = vadd.f32 %v2261, 1.0
    %v2263 = vrcp.pop %v2262
    %v2264 = vmul.f32 1.0, %v2263
    %v2265 = vtanh.pop %v2258
    %v2267 = vrot.slane %v2172, 6
    %v2269 = vmul.f32 %v2264, %v2267
    %2271 = vrot.lane.b32.xlu0 %v2265, 64
    %v2272 = vpop.permute.xlu0 %2271
    %v2274 = vmul.f32 %v2264, %v2272
    %2276 = vrot.lane.b32.xlu0 %v2274, 32
    %v2277 = vpop.permute.xlu0 %2276
    %v2279 = vadd.f32 %v2269, %v2277
    %v2280 = vtanh.pop %v2279
    %2282 = vrot.lane.b32.xlu0 %v2280, 64
    %v2283 = vpop.permute.xlu0 %2282
    %v2285 = vmul.f32 %v2264, %v2283
    %v2287 = vrot.slane %v2285, 4
    %2288 = vrot.lane.b32.xlu0 %v2287, 32
    %v2289 = vpop.permute.xlu0 %2288
    %v2290 = vsel %vm871, %v2289, 0
    %2292 = vmatprep.subr.mxu0 0.0
    %2293 = vmatpush1.msra.mxu0 %v1444
    %2294 = vmatprep.subr.mxu0 0.0
    %2295 = vmatpush1.msra.mxu0 %v1445
    %2296 = vmatprep.subr.mxu0 0.0
    %2297 = vmatpush1.msra.mxu0 %v1446
    %2298 = vmatprep.subr.mxu0 0.0
    %2299 = vmatpush1.msra.mxu0 %v1447
    %2300 = vmatprep.subr.mxu0 0.0
    %2301 = vmatpush1.msra.mxu0 0.0
    %2302 = vmatprep.subr.mxu0 0.0
    %2303 = vmatpush1.msra.mxu0 0.0
    %2304 = vmatprep.subr.mxu0 0.0
    %2305 = vmatpush1.msra.mxu0 0.0
    %2306 = vmatprep.subr.mxu0 0.0
    %2307 = vmatpush1.msra.mxu0 0.0
    %2308 = vmatprep.subr.mxu0 0.0
    %2309 = vmatpush1.msra.mxu0 0.0
    %2310 = vmatprep.subr.mxu0 0.0
    %2311 = vmatpush1.msra.mxu0 0.0
    %2312 = vmatprep.subr.mxu0 0.0
    %2313 = vmatpush1.msra.mxu0 0.0
    %2314 = vmatprep.subr.mxu0 0.0
    %2315 = vmatpush1.msra.mxu0 0.0
    %2316 = vmatprep.subr.mxu0 0.0
    %2317 = vmatpush1.msra.mxu0 0.0
    %2318 = vmatprep.subr.mxu0 0.0
    %2319 = vmatpush1.msra.mxu0 0.0
    %2320 = vmatprep.subr.mxu0 0.0
    %2321 = vmatpush1.msra.mxu0 0.0
    %2322 = vmatprep.subr.mxu0 0.0
    %2323 = vmatpush1.msra.mxu0 0.0
    %2324 = vmatprep.subr.mxu0 0.0
    %2325 = vmatpush1.msra.mxu0 0.0
    %2326 = vmatprep.subr.mxu0 0.0
    %2327 = vmatpush1.msra.mxu0 0.0
    %2328 = vmatprep.subr.mxu0 0.0
    %2329 = vmatpush1.msra.mxu0 0.0
    %2330 = vmatprep.subr.mxu0 0.0
    %2331 = vmatpush1.msra.mxu0 0.0
    %2332 = vmatprep.subr.mxu0 0.0
    %2333 = vmatpush1.msra.mxu0 0.0
    %2334 = vmatprep.subr.mxu0 0.0
    %2335 = vmatpush1.msra.mxu0 0.0
    %2336 = vmatprep.subr.mxu0 0.0
    %2337 = vmatpush1.msra.mxu0 0.0
    %2338 = vmatprep.subr.mxu0 0.0
    %2339 = vmatpush1.msra.mxu0 0.0
    %2340 = vmatprep.subr.mxu0 0.0
    %2341 = vmatpush1.msra.mxu0 0.0
    %2342 = vmatprep.subr.mxu0 0.0
    %2343 = vmatpush1.msra.mxu0 0.0
    %2344 = vmatprep.subr.mxu0 0.0
    %2345 = vmatpush1.msra.mxu0 0.0
    %2346 = vmatprep.subr.mxu0 0.0
    %2347 = vmatpush1.msra.mxu0 0.0
    %2348 = vmatprep.subr.mxu0 0.0
    %2349 = vmatpush1.msra.mxu0 0.0
    %2350 = vmatprep.subr.mxu0 0.0
    %2351 = vmatpush1.msra.mxu0 0.0
    %2352 = vmatprep.subr.mxu0 0.0
    %2353 = vmatpush1.msra.mxu0 0.0
    %2354 = vmatprep.subr.mxu0 0.0
    %2355 = vmatpush1.msra.mxu0 0.0
    %2356 = vmatprep.mubr.f32.mxu0 0.0
    %2357 = vmatmul.mubr.f32.gmra.mrb[0].mxu0 %v2290
    %v2358 = vpop.f32.mrb[0].mxu0
    %v2359 = vadd.f32 0.0, %v2358
    %v2360 = vpop.f32.mrb[0].mxu0
    %2361 = vdwg.mxu0
    %v2363 = vrot.slane %v2359, 2
    %v2365 = vadd.f32 %v1539, %v2363
    %v2366 = vxor.u32 %v2365, 2147483648
    %v2367 = vmul.f32 %v2366, 1.442695
    %v2368 = vpow.pop %v2367
    %v2369 = vadd.f32 %v2368, 1.0
    %v2370 = vrcp.pop %v2369
    %v2371 = vmul.f32 1.0, %v2370
    %v2372 = vtanh.pop %v2365
    %v2374 = vrot.slane %v2279, 6
    %v2376 = vmul.f32 %v2371, %v2374
    %2378 = vrot.lane.b32.xlu0 %v2372, 64
    %v2379 = vpop.permute.xlu0 %2378
    %v2381 = vmul.f32 %v2371, %v2379
    %2383 = vrot.lane.b32.xlu0 %v2381, 32
    %v2384 = vpop.permute.xlu0 %2383
    %v2386 = vadd.f32 %v2376, %v2384
    %v2387 = vtanh.pop %v2386
    %2389 = vrot.lane.b32.xlu0 %v2387, 64
    %v2390 = vpop.permute.xlu0 %2389
    %v2392 = vmul.f32 %v2371, %v2390
    %v2394 = vrot.slane %v2392, 6
    %2395 = vrot.lane.b32.xlu0 %v2394, 32
    %v2396 = vpop.permute.xlu0 %2395
    %v2397 = vsel %vm871, %v2396, 0
    %2399 = vmatprep.subr.mxu0 0.0
    %2400 = vmatpush1.msra.mxu0 %v1444
    %2401 = vmatprep.subr.mxu0 0.0
    %2402 = vmatpush1.msra.mxu0 %v1445
    %2403 = vmatprep.subr.mxu0 0.0
    %2404 = vmatpush1.msra.mxu0 %v1446
    %2405 = vmatprep.subr.mxu0 0.0
    %2406 = vmatpush1.msra.mxu0 %v1447
    %2407 = vmatprep.subr.mxu0 0.0
    %2408 = vmatpush1.msra.mxu0 0.0
    %2409 = vmatprep.subr.mxu0 0.0
    %2410 = vmatpush1.msra.mxu0 0.0
    %2411 = vmatprep.subr.mxu0 0.0
    %2412 = vmatpush1.msra.mxu0 0.0
    %2413 = vmatprep.subr.mxu0 0.0
    %2414 = vmatpush1.msra.mxu0 0.0
    %2415 = vmatprep.subr.mxu0 0.0
    %2416 = vmatpush1.msra.mxu0 0.0
    %2417 = vmatprep.subr.mxu0 0.0
    %2418 = vmatpush1.msra.mxu0 0.0
    %2419 = vmatprep.subr.mxu0 0.0
    %2420 = vmatpush1.msra.mxu0 0.0
    %2421 = vmatprep.subr.mxu0 0.0
    %2422 = vmatpush1.msra.mxu0 0.0
    %2423 = vmatprep.subr.mxu0 0.0
    %2424 = vmatpush1.msra.mxu0 0.0
    %2425 = vmatprep.subr.mxu0 0.0
    %2426 = vmatpush1.msra.mxu0 0.0
    %2427 = vmatprep.subr.mxu0 0.0
    %2428 = vmatpush1.msra.mxu0 0.0
    %2429 = vmatprep.subr.mxu0 0.0
    %2430 = vmatpush1.msra.mxu0 0.0
    %2431 = vmatprep.subr.mxu0 0.0
    %2432 = vmatpush1.msra.mxu0 0.0
    %2433 = vmatprep.subr.mxu0 0.0
    %2434 = vmatpush1.msra.mxu0 0.0
    %2435 = vmatprep.subr.mxu0 0.0
    %2436 = vmatpush1.msra.mxu0 0.0
    %2437 = vmatprep.subr.mxu0 0.0
    %2438 = vmatpush1.msra.mxu0 0.0
    %2439 = vmatprep.subr.mxu0 0.0
    %2440 = vmatpush1.msra.mxu0 0.0
    %2441 = vmatprep.subr.mxu0 0.0
    %2442 = vmatpush1.msra.mxu0 0.0
    %2443 = vmatprep.subr.mxu0 0.0
    %2444 = vmatpush1.msra.mxu0 0.0
    %2445 = vmatprep.subr.mxu0 0.0
    %2446 = vmatpush1.msra.mxu0 0.0
    %2447 = vmatprep.subr.mxu0 0.0
    %2448 = vmatpush1.msra.mxu0 0.0
    %2449 = vmatprep.subr.mxu0 0.0
    %2450 = vmatpush1.msra.mxu0 0.0
    %2451 = vmatprep.subr.mxu0 0.0
    %2452 = vmatpush1.msra.mxu0 0.0
    %2453 = vmatprep.subr.mxu0 0.0
    %2454 = vmatpush1.msra.mxu0 0.0
    %2455 = vmatprep.subr.mxu0 0.0
    %2456 = vmatpush1.msra.mxu0 0.0
    %2457 = vmatprep.subr.mxu0 0.0
    %2458 = vmatpush1.msra.mxu0 0.0
    %2459 = vmatprep.subr.mxu0 0.0
    %2460 = vmatpush1.msra.mxu0 0.0
    %2461 = vmatprep.subr.mxu0 0.0
    %2462 = vmatpush1.msra.mxu0 0.0
    %2463 = vmatprep.mubr.f32.mxu0 0.0
    %2464 = vmatmul.mubr.f32.gmra.mrb[0].mxu0 %v2397
    %v2465 = vpop.f32.mrb[0].mxu0
    %v2466 = vadd.f32 0.0, %v2465
    %v2467 = vpop.f32.mrb[0].mxu0
    %2468 = vdwg.mxu0
    %v2469 = vadd.f32 %v1544, %v2466
    %v2470 = vxor.u32 %v2469, 2147483648
    %v2471 = vmul.f32 %v2470, 1.442695
    %v2472 = vpow.pop %v2471
    %v2473 = vadd.f32 %v2472, 1.0
    %v2474 = vrcp.pop %v2473
    %v2475 = vmul.f32 1.0, %v2474
    %v2476 = vtanh.pop %v2469
    %v2478 = vrot.slane %v2386, 6
    %v2480 = vmul.f32 %v2475, %v2478
    %2482 = vrot.lane.b32.xlu0 %v2476, 64
    %v2483 = vpop.permute.xlu0 %2482
    %v2485 = vmul.f32 %v2475, %v2483
    %2487 = vrot.lane.b32.xlu0 %v2485, 32
    %v2488 = vpop.permute.xlu0 %2487
    %v2490 = vadd.f32 %v2480, %v2488
    %v2491 = vtanh.pop %v2490
    %2493 = vrot.lane.b32.xlu0 %v2491, 64
    %v2494 = vpop.permute.xlu0 %2493
    %v2496 = vmul.f32 %v2475, %v2494
    %2498 = vrot.lane.b32.xlu0 %v2496, 32
    %v2499 = vpop.permute.xlu0 %2498
    %v2500 = vsel %vm871, %v2499, 0
    %2502 = vmatprep.subr.mxu0 0.0
    %2503 = vmatpush1.msra.mxu0 %v1444
    %2504 = vmatprep.subr.mxu0 0.0
    %2505 = vmatpush1.msra.mxu0 %v1445
    %2506 = vmatprep.subr.mxu0 0.0
    %2507 = vmatpush1.msra.mxu0 %v1446
    %2508 = vmatprep.subr.mxu0 0.0
    %2509 = vmatpush1.msra.mxu0 %v1447
    %2510 = vmatprep.subr.mxu0 0.0
    %2511 = vmatpush1.msra.mxu0 0.0
    %2512 = vmatprep.subr.mxu0 0.0
    %2513 = vmatpush1.msra.mxu0 0.0
    %2514 = vmatprep.subr.mxu0 0.0
    %2515 = vmatpush1.msra.mxu0 0.0
    %2516 = vmatprep.subr.mxu0 0.0
    %2517 = vmatpush1.msra.mxu0 0.0
    %2518 = vmatprep.subr.mxu0 0.0
    %2519 = vmatpush1.msra.mxu0 0.0
    %2520 = vmatprep.subr.mxu0 0.0
    %2521 = vmatpush1.msra.mxu0 0.0
    %2522 = vmatprep.subr.mxu0 0.0
    %2523 = vmatpush1.msra.mxu0 0.0
    %2524 = vmatprep.subr.mxu0 0.0
    %2525 = vmatpush1.msra.mxu0 0.0
    %2526 = vmatprep.subr.mxu0 0.0
    %2527 = vmatpush1.msra.mxu0 0.0
    %2528 = vmatprep.subr.mxu0 0.0
    %2529 = vmatpush1.msra.mxu0 0.0
    %2530 = vmatprep.subr.mxu0 0.0
    %2531 = vmatpush1.msra.mxu0 0.0
    %2532 = vmatprep.subr.mxu0 0.0
    %2533 = vmatpush1.msra.mxu0 0.0
    %2534 = vmatprep.subr.mxu0 0.0
    %2535 = vmatpush1.msra.mxu0 0.0
    %2536 = vmatprep.subr.mxu0 0.0
    %2537 = vmatpush1.msra.mxu0 0.0
    %2538 = vmatprep.subr.mxu0 0.0
    %2539 = vmatpush1.msra.mxu0 0.0
    %2540 = vmatprep.subr.mxu0 0.0
    %2541 = vmatpush1.msra.mxu0 0.0
    %2542 = vmatprep.subr.mxu0 0.0
    %2543 = vmatpush1.msra.mxu0 0.0
    %2544 = vmatprep.subr.mxu0 0.0
    %2545 = vmatpush1.msra.mxu0 0.0
    %2546 = vmatprep.subr.mxu0 0.0
    %2547 = vmatpush1.msra.mxu0 0.0
    %2548 = vmatprep.subr.mxu0 0.0
    %2549 = vmatpush1.msra.mxu0 0.0
    %2550 = vmatprep.subr.mxu0 0.0
    %2551 = vmatpush1.msra.mxu0 0.0
    %2552 = vmatprep.subr.mxu0 0.0
    %2553 = vmatpush1.msra.mxu0 0.0
    %2554 = vmatprep.subr.mxu0 0.0
    %2555 = vmatpush1.msra.mxu0 0.0
    %2556 = vmatprep.subr.mxu0 0.0
    %2557 = vmatpush1.msra.mxu0 0.0
    %2558 = vmatprep.subr.mxu0 0.0
    %2559 = vmatpush1.msra.mxu0 0.0
    %2560 = vmatprep.subr.mxu0 0.0
    %2561 = vmatpush1.msra.mxu0 0.0
    %2562 = vmatprep.subr.mxu0 0.0
    %2563 = vmatpush1.msra.mxu0 0.0
    %2564 = vmatprep.subr.mxu0 0.0
    %2565 = vmatpush1.msra.mxu0 0.0
    %2566 = vmatprep.mubr.f32.mxu0 0.0
    %2567 = vmatmul.mubr.f32.gmra.mrb[0].mxu0 %v2500
    %v2568 = vpop.f32.mrb[0].mxu0
    %v2569 = vadd.f32 0.0, %v2568
    %v2570 = vpop.f32.mrb[0].mxu0
    %2571 = vdwg.mxu0
    %v2573 = vrot.slane %v2569, 6
    %v2575 = vadd.f32 %v1544, %v2573
    %v2576 = vxor.u32 %v2575, 2147483648
    %v2577 = vmul.f32 %v2576, 1.442695
    %v2578 = vpow.pop %v2577
    %v2579 = vadd.f32 %v2578, 1.0
    %v2580 = vrcp.pop %v2579
    %v2581 = vmul.f32 1.0, %v2580
    %v2582 = vtanh.pop %v2575
    %v2584 = vrot.slane %v2490, 6
    %v2586 = vmul.f32 %v2581, %v2584
    %2588 = vrot.lane.b32.xlu0 %v2582, 64
    %v2589 = vpop.permute.xlu0 %2588
    %v2591 = vmul.f32 %v2581, %v2589
    %2593 = vrot.lane.b32.xlu0 %v2591, 32
    %v2594 = vpop.permute.xlu0 %2593
    %v2596 = vadd.f32 %v2586, %v2594
    %v2597 = vtanh.pop %v2596
    %2599 = vrot.lane.b32.xlu0 %v2597, 64
    %v2600 = vpop.permute.xlu0 %2599
    %v2602 = vmul.f32 %v2581, %v2600
    %v2604 = vrot.slane %v2602, 2
    %2605 = vrot.lane.b32.xlu0 %v2604, 32
    %v2606 = vpop.permute.xlu0 %2605
    %v2607 = vsel %vm871, %v2606, 0
    %2609 = vmatprep.subr.mxu0 0.0
    %2610 = vmatpush1.msra.mxu0 %v1444
    %2611 = vmatprep.subr.mxu0 0.0
    %2612 = vmatpush1.msra.mxu0 %v1445
    %2613 = vmatprep.subr.mxu0 0.0
    %2614 = vmatpush1.msra.mxu0 %v1446
    %2615 = vmatprep.subr.mxu0 0.0
    %2616 = vmatpush1.msra.mxu0 %v1447
    %2617 = vmatprep.subr.mxu0 0.0
    %2618 = vmatpush1.msra.mxu0 0.0
    %2619 = vmatprep.subr.mxu0 0.0
    %2620 = vmatpush1.msra.mxu0 0.0
    %2621 = vmatprep.subr.mxu0 0.0
    %2622 = vmatpush1.msra.mxu0 0.0
    %2623 = vmatprep.subr.mxu0 0.0
    %2624 = vmatpush1.msra.mxu0 0.0
    %2625 = vmatprep.subr.mxu0 0.0
    %2626 = vmatpush1.msra.mxu0 0.0
    %2627 = vmatprep.subr.mxu0 0.0
    %2628 = vmatpush1.msra.mxu0 0.0
    %2629 = vmatprep.subr.mxu0 0.0
    %2630 = vmatpush1.msra.mxu0 0.0
    %2631 = vmatprep.subr.mxu0 0.0
    %2632 = vmatpush1.msra.mxu0 0.0
    %2633 = vmatprep.subr.mxu0 0.0
    %2634 = vmatpush1.msra.mxu0 0.0
    %2635 = vmatprep.subr.mxu0 0.0
    %2636 = vmatpush1.msra.mxu0 0.0
    %2637 = vmatprep.subr.mxu0 0.0
    %2638 = vmatpush1.msra.mxu0 0.0
    %2639 = vmatprep.subr.mxu0 0.0
    %2640 = vmatpush1.msra.mxu0 0.0
    %2641 = vmatprep.subr.mxu0 0.0
    %2642 = vmatpush1.msra.mxu0 0.0
    %2643 = vmatprep.subr.mxu0 0.0
    %2644 = vmatpush1.msra.mxu0 0.0
    %2645 = vmatprep.subr.mxu0 0.0
    %2646 = vmatpush1.msra.mxu0 0.0
    %2647 = vmatprep.subr.mxu0 0.0
    %2648 = vmatpush1.msra.mxu0 0.0
    %2649 = vmatprep.subr.mxu0 0.0
    %2650 = vmatpush1.msra.mxu0 0.0
    %2651 = vmatprep.subr.mxu0 0.0
    %2652 = vmatpush1.msra.mxu0 0.0
    %2653 = vmatprep.subr.mxu0 0.0
    %2654 = vmatpush1.msra.mxu0 0.0
    %2655 = vmatprep.subr.mxu0 0.0
    %2656 = vmatpush1.msra.mxu0 0.0
    %2657 = vmatprep.subr.mxu0 0.0
    %2658 = vmatpush1.msra.mxu0 0.0
    %2659 = vmatprep.subr.mxu0 0.0
    %2660 = vmatpush1.msra.mxu0 0.0
    %2661 = vmatprep.subr.mxu0 0.0
    %2662 = vmatpush1.msra.mxu0 0.0
    %2663 = vmatprep.subr.mxu0 0.0
    %2664 = vmatpush1.msra.mxu0 0.0
    %2665 = vmatprep.subr.mxu0 0.0
    %2666 = vmatpush1.msra.mxu0 0.0
    %2667 = vmatprep.subr.mxu0 0.0
    %2668 = vmatpush1.msra.mxu0 0.0
    %2669 = vmatprep.subr.mxu0 0.0
    %2670 = vmatpush1.msra.mxu0 0.0
    %2671 = vmatprep.subr.mxu0 0.0
    %2672 = vmatpush1.msra.mxu0 0.0
    %2673 = vmatprep.mubr.f32.mxu0 0.0
    %2674 = vmatmul.mubr.f32.gmra.mrb[0].mxu0 %v2607
    %v2675 = vpop.f32.mrb[0].mxu0
    %v2676 = vadd.f32 0.0, %v2675
    %v2677 = vpop.f32.mrb[0].mxu0
    %2678 = vdwg.mxu0
    %v2680 = vrot.slane %v2676, 4
    %v2682 = vadd.f32 %v1544, %v2680
    %v2683 = vxor.u32 %v2682, 2147483648
    %v2684 = vmul.f32 %v2683, 1.442695
    %v2685 = vpow.pop %v2684
    %v2686 = vadd.f32 %v2685, 1.0
    %v2687 = vrcp.pop %v2686
    %v2688 = vmul.f32 1.0, %v2687
    %v2689 = vtanh.pop %v2682
    %v2691 = vrot.slane %v2596, 6
    %v2693 = vmul.f32 %v2688, %v2691
    %2695 = vrot.lane.b32.xlu0 %v2689, 64
    %v2696 = vpop.permute.xlu0 %2695
    %v2698 = vmul.f32 %v2688, %v2696
    %2700 = vrot.lane.b32.xlu0 %v2698, 32
    %v2701 = vpop.permute.xlu0 %2700
    %v2703 = vadd.f32 %v2693, %v2701
    %v2704 = vtanh.pop %v2703
    %2706 = vrot.lane.b32.xlu0 %v2704, 64
    %v2707 = vpop.permute.xlu0 %2706
    %v2709 = vmul.f32 %v2688, %v2707
    %v2711 = vrot.slane %v2709, 4
    %2712 = vrot.lane.b32.xlu0 %v2711, 32
    %v2713 = vpop.permute.xlu0 %2712
    %v2714 = vsel %vm871, %v2713, 0
    %2716 = vmatprep.subr.mxu0 0.0
    %2717 = vmatpush1.msra.mxu0 %v1444
    %2718 = vmatprep.subr.mxu0 0.0
    %2719 = vmatpush1.msra.mxu0 %v1445
    %2720 = vmatprep.subr.mxu0 0.0
    %2721 = vmatpush1.msra.mxu0 %v1446
    %2722 = vmatprep.subr.mxu0 0.0
    %2723 = vmatpush1.msra.mxu0 %v1447
    %2724 = vmatprep.subr.mxu0 0.0
    %2725 = vmatpush1.msra.mxu0 0.0
    %2726 = vmatprep.subr.mxu0 0.0
    %2727 = vmatpush1.msra.mxu0 0.0
    %2728 = vmatprep.subr.mxu0 0.0
    %2729 = vmatpush1.msra.mxu0 0.0
    %2730 = vmatprep.subr.mxu0 0.0
    %2731 = vmatpush1.msra.mxu0 0.0
    %2732 = vmatprep.subr.mxu0 0.0
    %2733 = vmatpush1.msra.mxu0 0.0
    %2734 = vmatprep.subr.mxu0 0.0
    %2735 = vmatpush1.msra.mxu0 0.0
    %2736 = vmatprep.subr.mxu0 0.0
    %2737 = vmatpush1.msra.mxu0 0.0
    %2738 = vmatprep.subr.mxu0 0.0
    %2739 = vmatpush1.msra.mxu0 0.0
    %2740 = vmatprep.subr.mxu0 0.0
    %2741 = vmatpush1.msra.mxu0 0.0
    %2742 = vmatprep.subr.mxu0 0.0
    %2743 = vmatpush1.msra.mxu0 0.0
    %2744 = vmatprep.subr.mxu0 0.0
    %2745 = vmatpush1.msra.mxu0 0.0
    %2746 = vmatprep.subr.mxu0 0.0
    %2747 = vmatpush1.msra.mxu0 0.0
    %2748 = vmatprep.subr.mxu0 0.0
    %2749 = vmatpush1.msra.mxu0 0.0
    %2750 = vmatprep.subr.mxu0 0.0
    %2751 = vmatpush1.msra.mxu0 0.0
    %2752 = vmatprep.subr.mxu0 0.0
    %2753 = vmatpush1.msra.mxu0 0.0
    %2754 = vmatprep.subr.mxu0 0.0
    %2755 = vmatpush1.msra.mxu0 0.0
    %2756 = vmatprep.subr.mxu0 0.0
    %2757 = vmatpush1.msra.mxu0 0.0
    %2758 = vmatprep.subr.mxu0 0.0
    %2759 = vmatpush1.msra.mxu0 0.0
    %2760 = vmatprep.subr.mxu0 0.0
    %2761 = vmatpush1.msra.mxu0 0.0
    %2762 = vmatprep.subr.mxu0 0.0
    %2763 = vmatpush1.msra.mxu0 0.0
    %2764 = vmatprep.subr.mxu0 0.0
    %2765 = vmatpush1.msra.mxu0 0.0
    %2766 = vmatprep.subr.mxu0 0.0
    %2767 = vmatpush1.msra.mxu0 0.0
    %2768 = vmatprep.subr.mxu0 0.0
    %2769 = vmatpush1.msra.mxu0 0.0
    %2770 = vmatprep.subr.mxu0 0.0
    %2771 = vmatpush1.msra.mxu0 0.0
    %2772 = vmatprep.subr.mxu0 0.0
    %2773 = vmatpush1.msra.mxu0 0.0
    %2774 = vmatprep.subr.mxu0 0.0
    %2775 = vmatpush1.msra.mxu0 0.0
    %2776 = vmatprep.subr.mxu0 0.0
    %2777 = vmatpush1.msra.mxu0 0.0
    %2778 = vmatprep.subr.mxu0 0.0
    %2779 = vmatpush1.msra.mxu0 0.0
    %2780 = vmatprep.mubr.f32.mxu0 0.0
    %2781 = vmatmul.mubr.f32.gmra.mrb[0].mxu0 %v2714
    %v2782 = vpop.f32.mrb[0].mxu0
    %v2783 = vadd.f32 0.0, %v2782
    %v2784 = vpop.f32.mrb[0].mxu0
    %2785 = vdwg.mxu0
    %v2787 = vrot.slane %v2783, 2
    %v2789 = vadd.f32 %v1544, %v2787
    %v2790 = vxor.u32 %v2789, 2147483648
    %v2791 = vmul.f32 %v2790, 1.442695
    %v2792 = vpow.pop %v2791
    %v2793 = vadd.f32 %v2792, 1.0
    %v2794 = vrcp.pop %v2793
    %v2795 = vmul.f32 1.0, %v2794
    %v2796 = vtanh.pop %v2789
    %v2798 = vrot.slane %v2703, 6
    %v2800 = vmul.f32 %v2795, %v2798
    %2802 = vrot.lane.b32.xlu0 %v2796, 64
    %v2803 = vpop.permute.xlu0 %2802
    %v2805 = vmul.f32 %v2795, %v2803
    %2807 = vrot.lane.b32.xlu0 %v2805, 32
    %v2808 = vpop.permute.xlu0 %2807
    %v2810 = vadd.f32 %v2800, %v2808
    %v2811 = vtanh.pop %v2810
    %2813 = vrot.lane.b32.xlu0 %v2811, 64
    %v2814 = vpop.permute.xlu0 %2813
    %v2816 = vmul.f32 %v2795, %v2814
    %v2818 = vrot.slane %v2816, 6
    %2819 = vrot.lane.b32.xlu0 %v2818, 32
    %v2820 = vpop.permute.xlu0 %2819
    %v2821 = vsel %vm871, %v2820, 0
    %2823 = vmatprep.subr.mxu0 0.0
    %2824 = vmatpush1.msra.mxu0 %v1444
    %2825 = vmatprep.subr.mxu0 0.0
    %2826 = vmatpush1.msra.mxu0 %v1445
    %2827 = vmatprep.subr.mxu0 0.0
    %2828 = vmatpush1.msra.mxu0 %v1446
    %2829 = vmatprep.subr.mxu0 0.0
    %2830 = vmatpush1.msra.mxu0 %v1447
    %2831 = vmatprep.subr.mxu0 0.0
    %2832 = vmatpush1.msra.mxu0 0.0
    %2833 = vmatprep.subr.mxu0 0.0
    %2834 = vmatpush1.msra.mxu0 0.0
    %2835 = vmatprep.subr.mxu0 0.0
    %2836 = vmatpush1.msra.mxu0 0.0
    %2837 = vmatprep.subr.mxu0 0.0
    %2838 = vmatpush1.msra.mxu0 0.0
    %2839 = vmatprep.subr.mxu0 0.0
    %2840 = vmatpush1.msra.mxu0 0.0
    %2841 = vmatprep.subr.mxu0 0.0
    %2842 = vmatpush1.msra.mxu0 0.0
    %2843 = vmatprep.subr.mxu0 0.0
    %2844 = vmatpush1.msra.mxu0 0.0
    %2845 = vmatprep.subr.mxu0 0.0
    %2846 = vmatpush1.msra.mxu0 0.0
    %2847 = vmatprep.subr.mxu0 0.0
    %2848 = vmatpush1.msra.mxu0 0.0
    %2849 = vmatprep.subr.mxu0 0.0
    %2850 = vmatpush1.msra.mxu0 0.0
    %2851 = vmatprep.subr.mxu0 0.0
    %2852 = vmatpush1.msra.mxu0 0.0
    %2853 = vmatprep.subr.mxu0 0.0
    %2854 = vmatpush1.msra.mxu0 0.0
    %2855 = vmatprep.subr.mxu0 0.0
    %2856 = vmatpush1.msra.mxu0 0.0
    %2857 = vmatprep.subr.mxu0 0.0
    %2858 = vmatpush1.msra.mxu0 0.0
    %2859 = vmatprep.subr.mxu0 0.0
    %2860 = vmatpush1.msra.mxu0 0.0
    %2861 = vmatprep.subr.mxu0 0.0
    %2862 = vmatpush1.msra.mxu0 0.0
    %2863 = vmatprep.subr.mxu0 0.0
    %2864 = vmatpush1.msra.mxu0 0.0
    %2865 = vmatprep.subr.mxu0 0.0
    %2866 = vmatpush1.msra.mxu0 0.0
    %2867 = vmatprep.subr.mxu0 0.0
    %2868 = vmatpush1.msra.mxu0 0.0
    %2869 = vmatprep.subr.mxu0 0.0
    %2870 = vmatpush1.msra.mxu0 0.0
    %2871 = vmatprep.subr.mxu0 0.0
    %2872 = vmatpush1.msra.mxu0 0.0
    %2873 = vmatprep.subr.mxu0 0.0
    %2874 = vmatpush1.msra.mxu0 0.0
    %2875 = vmatprep.subr.mxu0 0.0
    %2876 = vmatpush1.msra.mxu0 0.0
    %2877 = vmatprep.subr.mxu0 0.0
    %2878 = vmatpush1.msra.mxu0 0.0
    %2879 = vmatprep.subr.mxu0 0.0
    %2880 = vmatpush1.msra.mxu0 0.0
    %2881 = vmatprep.subr.mxu0 0.0
    %2882 = vmatpush1.msra.mxu0 0.0
    %2883 = vmatprep.subr.mxu0 0.0
    %2884 = vmatpush1.msra.mxu0 0.0
    %2885 = vmatprep.subr.mxu0 0.0
    %2886 = vmatpush1.msra.mxu0 0.0
    %2887 = vmatprep.mubr.f32.mxu0 0.0
    %2888 = vmatmul.mubr.f32.gmra.mrb[0].mxu0 %v2821
    %v2889 = vpop.f32.mrb[0].mxu0
    %v2890 = vadd.f32 0.0, %v2889
    %v2891 = vpop.f32.mrb[0].mxu0
    %2892 = vdwg.mxu0
    %v2893 = vadd.f32 %v1549, %v2890
    %v2894 = vxor.u32 %v2893, 2147483648
    %v2895 = vmul.f32 %v2894, 1.442695
    %v2896 = vpow.pop %v2895
    %v2897 = vadd.f32 %v2896, 1.0
    %v2898 = vrcp.pop %v2897
    %v2899 = vmul.f32 1.0, %v2898
    %v2900 = vtanh.pop %v2893
    %v2902 = vrot.slane %v2810, 6
    %v2904 = vmul.f32 %v2899, %v2902
    %2906 = vrot.lane.b32.xlu0 %v2900, 64
    %v2907 = vpop.permute.xlu0 %2906
    %v2909 = vmul.f32 %v2899, %v2907
    %2911 = vrot.lane.b32.xlu0 %v2909, 32
    %v2912 = vpop.permute.xlu0 %2911
    %v2914 = vadd.f32 %v2904, %v2912
    %v2915 = vtanh.pop %v2914
    %2917 = vrot.lane.b32.xlu0 %v2915, 64
    %v2918 = vpop.permute.xlu0 %2917
    %v2920 = vmul.f32 %v2899, %v2918
    %2922 = vrot.lane.b32.xlu0 %v2920, 32
    %v2923 = vpop.permute.xlu0 %2922
    %v2924 = vsel %vm871, %v2923, 0
    %2926 = vmatprep.subr.mxu0 0.0
    %2927 = vmatpush1.msra.mxu0 %v1444
    %2928 = vmatprep.subr.mxu0 0.0
    %2929 = vmatpush1.msra.mxu0 %v1445
    %2930 = vmatprep.subr.mxu0 0.0
    %2931 = vmatpush1.msra.mxu0 %v1446
    %2932 = vmatprep.subr.mxu0 0.0
    %2933 = vmatpush1.msra.mxu0 %v1447
    %2934 = vmatprep.subr.mxu0 0.0
    %2935 = vmatpush1.msra.mxu0 0.0
    %2936 = vmatprep.subr.mxu0 0.0
    %2937 = vmatpush1.msra.mxu0 0.0
    %2938 = vmatprep.subr.mxu0 0.0
    %2939 = vmatpush1.msra.mxu0 0.0
    %2940 = vmatprep.subr.mxu0 0.0
    %2941 = vmatpush1.msra.mxu0 0.0
    %2942 = vmatprep.subr.mxu0 0.0
    %2943 = vmatpush1.msra.mxu0 0.0
    %2944 = vmatprep.subr.mxu0 0.0
    %2945 = vmatpush1.msra.mxu0 0.0
    %2946 = vmatprep.subr.mxu0 0.0
    %2947 = vmatpush1.msra.mxu0 0.0
    %2948 = vmatprep.subr.mxu0 0.0
    %2949 = vmatpush1.msra.mxu0 0.0
    %2950 = vmatprep.subr.mxu0 0.0
    %2951 = vmatpush1.msra.mxu0 0.0
    %2952 = vmatprep.subr.mxu0 0.0
    %2953 = vmatpush1.msra.mxu0 0.0
    %2954 = vmatprep.subr.mxu0 0.0
    %2955 = vmatpush1.msra.mxu0 0.0
    %2956 = vmatprep.subr.mxu0 0.0
    %2957 = vmatpush1.msra.mxu0 0.0
    %2958 = vmatprep.subr.mxu0 0.0
    %2959 = vmatpush1.msra.mxu0 0.0
    %2960 = vmatprep.subr.mxu0 0.0
    %2961 = vmatpush1.msra.mxu0 0.0
    %2962 = vmatprep.subr.mxu0 0.0
    %2963 = vmatpush1.msra.mxu0 0.0
    %2964 = vmatprep.subr.mxu0 0.0
    %2965 = vmatpush1.msra.mxu0 0.0
    %2966 = vmatprep.subr.mxu0 0.0
    %2967 = vmatpush1.msra.mxu0 0.0
    %2968 = vmatprep.subr.mxu0 0.0
    %2969 = vmatpush1.msra.mxu0 0.0
    %2970 = vmatprep.subr.mxu0 0.0
    %2971 = vmatpush1.msra.mxu0 0.0
    %2972 = vmatprep.subr.mxu0 0.0
    %2973 = vmatpush1.msra.mxu0 0.0
    %2974 = vmatprep.subr.mxu0 0.0
    %2975 = vmatpush1.msra.mxu0 0.0
    %2976 = vmatprep.subr.mxu0 0.0
    %2977 = vmatpush1.msra.mxu0 0.0
    %2978 = vmatprep.subr.mxu0 0.0
    %2979 = vmatpush1.msra.mxu0 0.0
    %2980 = vmatprep.subr.mxu0 0.0
    %2981 = vmatpush1.msra.mxu0 0.0
    %2982 = vmatprep.subr.mxu0 0.0
    %2983 = vmatpush1.msra.mxu0 0.0
    %2984 = vmatprep.subr.mxu0 0.0
    %2985 = vmatpush1.msra.mxu0 0.0
    %2986 = vmatprep.subr.mxu0 0.0
    %2987 = vmatpush1.msra.mxu0 0.0
    %2988 = vmatprep.subr.mxu0 0.0
    %2989 = vmatpush1.msra.mxu0 0.0
    %2990 = vmatprep.mubr.f32.mxu0 0.0
    %2991 = vmatmul.mubr.f32.gmra.mrb[0].mxu0 %v2924
    %v2992 = vpop.f32.mrb[0].mxu0
    %v2993 = vadd.f32 0.0, %v2992
    %v2994 = vpop.f32.mrb[0].mxu0
    %2995 = vdwg.mxu0
    %v2997 = vrot.slane %v2993, 6
    %v2999 = vadd.f32 %v1549, %v2997
    %v3000 = vxor.u32 %v2999, 2147483648
    %v3001 = vmul.f32 %v3000, 1.442695
    %v3002 = vpow.pop %v3001
    %v3003 = vadd.f32 %v3002, 1.0
    %v3004 = vrcp.pop %v3003
    %v3005 = vmul.f32 1.0, %v3004
    %v3006 = vtanh.pop %v2999
    %v3008 = vrot.slane %v2914, 6
    %v3010 = vmul.f32 %v3005, %v3008
    %3012 = vrot.lane.b32.xlu0 %v3006, 64
    %v3013 = vpop.permute.xlu0 %3012
    %v3015 = vmul.f32 %v3005, %v3013
    %3017 = vrot.lane.b32.xlu0 %v3015, 32
    %v3018 = vpop.permute.xlu0 %3017
    %v3020 = vadd.f32 %v3010, %v3018
    %v3021 = vtanh.pop %v3020
    %3023 = vrot.lane.b32.xlu0 %v3021, 64
    %v3024 = vpop.permute.xlu0 %3023
    %v3026 = vmul.f32 %v3005, %v3024
    %vm3027 = vcmask 1041408
    %v3028 = vsel %vm3027, %v1648, %v1754
    %v3029 = vsel %vm299, %v3028, %v1861
    %vm3030 = vcmask 1045504
    %v3031 = vsel %vm3030, %v3029, %v1968
    %v3032 = vsel %vm3027, %v2072, %v2178
    %v3033 = vsel %vm299, %v3032, %v2285
    %v3034 = vsel %vm3030, %v3033, %v2392
    %v3035 = vsel %vm3027, %v2496, %v2602
    %v3036 = vsel %vm299, %v3035, %v2709
    %v3037 = vsel %vm3030, %v3036, %v2816
    %v3038 = vsel %vm3027, %v2920, %v3026
    %v3039 = vld [vmem:[%s16] sm:$0xff]
    %v3040 = vld [vmem:[%s16 + $0x8] sm:$0xff]
    %v3041 = vld [vmem:[%s16 + $0x10] sm:$0xff]
    %v3042 = vld [vmem:[%s16 + $0x18] sm:$0xff]
    %v3043 = vld [vmem:[%s17] sm:$0xff]
    %v3044 = vld [vmem:[%s17 + $0x8] sm:$0xff]
    %v3045 = vld [vmem:[%s17 + $0x10] sm:$0xff]
    %v3046 = vld [vmem:[%s17 + $0x18] sm:$0xff]
    %v3047 = vld [vmem:[%s18] sm:$0x1]
    %v3049 = vlaneseq
    %v3050 = vshrl.u32 %v3049, 7
    %v3051 = vsub.s32 0, %v3050
    %v3052 = vrot.slane %v3047, %v3051
    %3058 = vrot.lane.b32.xlu0 %v3031, 32
    %v3059 = vpop.permute.xlu0 %3058
    %3060 = vrot.lane.b32.xlu0 %v3034, 32
    %v3061 = vpop.permute.xlu0 %3060
    %3062 = vrot.lane.b32.xlu0 %v3037, 32
    %v3063 = vpop.permute.xlu0 %3062
    %3064 = vrot.lane.b32.xlu0 %v3038, 32
    %v3065 = vpop.permute.xlu0 %3064
    %v3066 = vsel %vm871, %v3059, 0
    %v3068 = vsel %vm871, %v3061, 0
    %v3070 = vsel %vm871, %v3063, 0
    %v3072 = vsel %vm871, %v3065, 0
    %3074 = vmatprep.subr.mxu0 0.0
    %3075 = vmatpush1.msra.mxu0 %v3039
    %3076 = vmatprep.subr.mxu0 0.0
    %3077 = vmatpush1.msra.mxu0 %v3040
    %3078 = vmatprep.subr.mxu0 0.0
    %3079 = vmatpush1.msra.mxu0 %v3041
    %3080 = vmatprep.subr.mxu0 0.0
    %3081 = vmatpush1.msra.mxu0 %v3042
    %3082 = vmatprep.subr.mxu0 0.0
    %3083 = vmatpush1.msra.mxu0 0.0
    %3084 = vmatprep.subr.mxu0 0.0
    %3085 = vmatpush1.msra.mxu0 0.0
    %3086 = vmatprep.subr.mxu0 0.0
    %3087 = vmatpush1.msra.mxu0 0.0
    %3088 = vmatprep.subr.mxu0 0.0
    %3089 = vmatpush1.msra.mxu0 0.0
    %3090 = vmatprep.subr.mxu0 0.0
    %3091 = vmatpush1.msra.mxu0 0.0
    %3092 = vmatprep.subr.mxu0 0.0
    %3093 = vmatpush1.msra.mxu0 0.0
    %3094 = vmatprep.subr.mxu0 0.0
    %3095 = vmatpush1.msra.mxu0 0.0
    %3096 = vmatprep.subr.mxu0 0.0
    %3097 = vmatpush1.msra.mxu0 0.0
    %3098 = vmatprep.subr.mxu0 0.0
    %3099 = vmatpush1.msra.mxu0 0.0
    %3100 = vmatprep.subr.mxu0 0.0
    %3101 = vmatpush1.msra.mxu0 0.0
    %3102 = vmatprep.subr.mxu0 0.0
    %3103 = vmatpush1.msra.mxu0 0.0
    %3104 = vmatprep.subr.mxu0 0.0
    %3105 = vmatpush1.msra.mxu0 0.0
    %3106 = vmatprep.subr.mxu0 0.0
    %3107 = vmatpush1.msra.mxu0 0.0
    %3108 = vmatprep.subr.mxu0 0.0
    %3109 = vmatpush1.msra.mxu0 0.0
    %3110 = vmatprep.subr.mxu0 0.0
    %3111 = vmatpush1.msra.mxu0 0.0
    %3112 = vmatprep.subr.mxu0 0.0
    %3113 = vmatpush1.msra.mxu0 0.0
    %3114 = vmatprep.subr.mxu0 0.0
    %3115 = vmatpush1.msra.mxu0 0.0
    %3116 = vmatprep.subr.mxu0 0.0
    %3117 = vmatpush1.msra.mxu0 0.0
    %3118 = vmatprep.subr.mxu0 0.0
    %3119 = vmatpush1.msra.mxu0 0.0
    %3120 = vmatprep.subr.mxu0 0.0
    %3121 = vmatpush1.msra.mxu0 0.0
    %3122 = vmatprep.subr.mxu0 0.0
    %3123 = vmatpush1.msra.mxu0 0.0
    %3124 = vmatprep.subr.mxu0 0.0
    %3125 = vmatpush1.msra.mxu0 0.0
    %3126 = vmatprep.subr.mxu0 0.0
    %3127 = vmatpush1.msra.mxu0 0.0
    %3128 = vmatprep.subr.mxu0 0.0
    %3129 = vmatpush1.msra.mxu0 0.0
    %3130 = vmatprep.subr.mxu0 0.0
    %3131 = vmatpush1.msra.mxu0 0.0
    %3132 = vmatprep.subr.mxu0 0.0
    %3133 = vmatpush1.msra.mxu0 0.0
    %3134 = vmatprep.subr.mxu0 0.0
    %3135 = vmatpush1.msra.mxu0 0.0
    %3136 = vmatprep.subr.mxu0 0.0
    %3137 = vmatpush1.msra.mxu0 0.0
    %3138 = vmatprep.mubr.f32.mxu0 0.0
    %3139 = vmatmul.mubr.f32.gmra.mrb[0].mxu0 %v3066
    %v3140 = vpop.f32.mrb[0].mxu0
    %v3141 = vadd.f32 %v3052, %v3140
    %v3142 = vpop.f32.mrb[0].mxu0
    %3143 = vmatprep.mubr.f32.mxu0 0.0
    %3144 = vmatmul.mubr.f32.gmra.mrb[0].mxu0 %v3068
    %v3145 = vpop.f32.mrb[0].mxu0
    %v3146 = vadd.f32 %v3052, %v3145
    %v3147 = vpop.f32.mrb[0].mxu0
    %3148 = vmatprep.mubr.f32.mxu0 0.0
    %3149 = vmatmul.mubr.f32.gmra.mrb[0].mxu0 %v3070
    %v3150 = vpop.f32.mrb[0].mxu0
    %v3151 = vadd.f32 %v3052, %v3150
    %v3152 = vpop.f32.mrb[0].mxu0
    %3153 = vmatprep.mubr.f32.mxu0 0.0
    %3154 = vmatmul.mubr.f32.gmra.mrb[0].mxu0 %v3072
    %v3155 = vpop.f32.mrb[0].mxu0
    %v3156 = vadd.f32 %v3052, %v3155
    %v3157 = vpop.f32.mrb[0].mxu0
    %3158 = vdwg.mxu0
    %3159 = vmatprep.subr.mxu0 0.0
    %3160 = vmatpush1.msra.mxu0 %v3043
    %3161 = vmatprep.subr.mxu0 0.0
    %3162 = vmatpush1.msra.mxu0 %v3044
    %3163 = vmatprep.subr.mxu0 0.0
    %3164 = vmatpush1.msra.mxu0 %v3045
    %3165 = vmatprep.subr.mxu0 0.0
    %3166 = vmatpush1.msra.mxu0 %v3046
    %3167 = vmatprep.subr.mxu0 0.0
    %3168 = vmatpush1.msra.mxu0 0.0
    %3169 = vmatprep.subr.mxu0 0.0
    %3170 = vmatpush1.msra.mxu0 0.0
    %3171 = vmatprep.subr.mxu0 0.0
    %3172 = vmatpush1.msra.mxu0 0.0
    %3173 = vmatprep.subr.mxu0 0.0
    %3174 = vmatpush1.msra.mxu0 0.0
    %3175 = vmatprep.subr.mxu0 0.0
    %3176 = vmatpush1.msra.mxu0 0.0
    %3177 = vmatprep.subr.mxu0 0.0
    %3178 = vmatpush1.msra.mxu0 0.0
    %3179 = vmatprep.subr.mxu0 0.0
    %3180 = vmatpush1.msra.mxu0 0.0
    %3181 = vmatprep.subr.mxu0 0.0
    %3182 = vmatpush1.msra.mxu0 0.0
    %3183 = vmatprep.subr.mxu0 0.0
    %3184 = vmatpush1.msra.mxu0 0.0
    %3185 = vmatprep.subr.mxu0 0.0
    %3186 = vmatpush1.msra.mxu0 0.0
    %3187 = vmatprep.subr.mxu0 0.0
    %3188 = vmatpush1.msra.mxu0 0.0
    %3189 = vmatprep.subr.mxu0 0.0
    %3190 = vmatpush1.msra.mxu0 0.0
    %3191 = vmatprep.subr.mxu0 0.0
    %3192 = vmatpush1.msra.mxu0 0.0
    %3193 = vmatprep.subr.mxu0 0.0
    %3194 = vmatpush1.msra.mxu0 0.0
    %3195 = vmatprep.subr.mxu0 0.0
    %3196 = vmatpush1.msra.mxu0 0.0
    %3197 = vmatprep.subr.mxu0 0.0
    %3198 = vmatpush1.msra.mxu0 0.0
    %3199 = vmatprep.subr.mxu0 0.0
    %3200 = vmatpush1.msra.mxu0 0.0
    %3201 = vmatprep.subr.mxu0 0.0
    %3202 = vmatpush1.msra.mxu0 0.0
    %3203 = vmatprep.subr.mxu0 0.0
    %3204 = vmatpush1.msra.mxu0 0.0
    %3205 = vmatprep.subr.mxu0 0.0
    %3206 = vmatpush1.msra.mxu0 0.0
    %3207 = vmatprep.subr.mxu0 0.0
    %3208 = vmatpush1.msra.mxu0 0.0
    %3209 = vmatprep.subr.mxu0 0.0
    %3210 = vmatpush1.msra.mxu0 0.0
    %3211 = vmatprep.subr.mxu0 0.0
    %3212 = vmatpush1.msra.mxu0 0.0
    %3213 = vmatprep.subr.mxu0 0.0
    %3214 = vmatpush1.msra.mxu0 0.0
    %3215 = vmatprep.subr.mxu0 0.0
    %3216 = vmatpush1.msra.mxu0 0.0
    %3217 = vmatprep.subr.mxu0 0.0
    %3218 = vmatpush1.msra.mxu0 0.0
    %3219 = vmatprep.subr.mxu0 0.0
    %3220 = vmatpush1.msra.mxu0 0.0
    %3221 = vmatprep.subr.mxu0 0.0
    %3222 = vmatpush1.msra.mxu0 0.0
    %3223 = vmatprep.mubr.f32.mxu0 0.0
    %3224 = vmatmul.mubr.f32.gmra.mrb[0].mxu0 %v1552
    %v3225 = vpop.f32.mrb[0].mxu0
    %v3226 = vadd.f32 0.0, %v3225
    %v3227 = vpop.f32.mrb[0].mxu0
    %3228 = vdwg.mxu0
    %v3229 = vadd.f32 %v3141, %v3226
    %v3230 = vxor.u32 %v3229, 2147483648
    %v3231 = vmul.f32 %v3230, 1.442695
    %v3232 = vpow.pop %v3231
    %v3233 = vadd.f32 %v3232, 1.0
    %v3234 = vrcp.pop %v3233
    %v3235 = vmul.f32 1.0, %v3234
    %v3236 = vtanh.pop %v3229
    %v3237 = vmul.f32 %v3235, 0.0
    %3239 = vrot.lane.b32.xlu0 %v3236, 64
    %v3240 = vpop.permute.xlu0 %3239
    %v3242 = vmul.f32 %v3235, %v3240
    %3244 = vrot.lane.b32.xlu0 %v3242, 32
    %v3245 = vpop.permute.xlu0 %3244
    %v3247 = vadd.f32 %v3237, %v3245
    %v3248 = vtanh.pop %v3247
    %3250 = vrot.lane.b32.xlu0 %v3248, 64
    %v3251 = vpop.permute.xlu0 %3250
    %v3253 = vmul.f32 %v3235, %v3251
    %3255 = vrot.lane.b32.xlu0 %v3253, 32
    %v3256 = vpop.permute.xlu0 %3255
    %v3257 = vsel %vm871, %v3256, 0
    %3259 = vmatprep.subr.mxu0 0.0
    %3260 = vmatpush1.msra.mxu0 %v3043
    %3261 = vmatprep.subr.mxu0 0.0
    %3262 = vmatpush1.msra.mxu0 %v3044
    %3263 = vmatprep.subr.mxu0 0.0
    %3264 = vmatpush1.msra.mxu0 %v3045
    %3265 = vmatprep.subr.mxu0 0.0
    %3266 = vmatpush1.msra.mxu0 %v3046
    %3267 = vmatprep.subr.mxu0 0.0
    %3268 = vmatpush1.msra.mxu0 0.0
    %3269 = vmatprep.subr.mxu0 0.0
    %3270 = vmatpush1.msra.mxu0 0.0
    %3271 = vmatprep.subr.mxu0 0.0
    %3272 = vmatpush1.msra.mxu0 0.0
    %3273 = vmatprep.subr.mxu0 0.0
    %3274 = vmatpush1.msra.mxu0 0.0
    %3275 = vmatprep.subr.mxu0 0.0
    %3276 = vmatpush1.msra.mxu0 0.0
    %3277 = vmatprep.subr.mxu0 0.0
    %3278 = vmatpush1.msra.mxu0 0.0
    %3279 = vmatprep.subr.mxu0 0.0
    %3280 = vmatpush1.msra.mxu0 0.0
    %3281 = vmatprep.subr.mxu0 0.0
    %3282 = vmatpush1.msra.mxu0 0.0
    %3283 = vmatprep.subr.mxu0 0.0
    %3284 = vmatpush1.msra.mxu0 0.0
    %3285 = vmatprep.subr.mxu0 0.0
    %3286 = vmatpush1.msra.mxu0 0.0
    %3287 = vmatprep.subr.mxu0 0.0
    %3288 = vmatpush1.msra.mxu0 0.0
    %3289 = vmatprep.subr.mxu0 0.0
    %3290 = vmatpush1.msra.mxu0 0.0
    %3291 = vmatprep.subr.mxu0 0.0
    %3292 = vmatpush1.msra.mxu0 0.0
    %3293 = vmatprep.subr.mxu0 0.0
    %3294 = vmatpush1.msra.mxu0 0.0
    %3295 = vmatprep.subr.mxu0 0.0
    %3296 = vmatpush1.msra.mxu0 0.0
    %3297 = vmatprep.subr.mxu0 0.0
    %3298 = vmatpush1.msra.mxu0 0.0
    %3299 = vmatprep.subr.mxu0 0.0
    %3300 = vmatpush1.msra.mxu0 0.0
    %3301 = vmatprep.subr.mxu0 0.0
    %3302 = vmatpush1.msra.mxu0 0.0
    %3303 = vmatprep.subr.mxu0 0.0
    %3304 = vmatpush1.msra.mxu0 0.0
    %3305 = vmatprep.subr.mxu0 0.0
    %3306 = vmatpush1.msra.mxu0 0.0
    %3307 = vmatprep.subr.mxu0 0.0
    %3308 = vmatpush1.msra.mxu0 0.0
    %3309 = vmatprep.subr.mxu0 0.0
    %3310 = vmatpush1.msra.mxu0 0.0
    %3311 = vmatprep.subr.mxu0 0.0
    %3312 = vmatpush1.msra.mxu0 0.0
    %3313 = vmatprep.subr.mxu0 0.0
    %3314 = vmatpush1.msra.mxu0 0.0
    %3315 = vmatprep.subr.mxu0 0.0
    %3316 = vmatpush1.msra.mxu0 0.0
    %3317 = vmatprep.subr.mxu0 0.0
    %3318 = vmatpush1.msra.mxu0 0.0
    %3319 = vmatprep.subr.mxu0 0.0
    %3320 = vmatpush1.msra.mxu0 0.0
    %3321 = vmatprep.subr.mxu0 0.0
    %3322 = vmatpush1.msra.mxu0 0.0
    %3323 = vmatprep.mubr.f32.mxu0 0.0
    %3324 = vmatmul.mubr.f32.gmra.mrb[0].mxu0 %v3257
    %v3325 = vpop.f32.mrb[0].mxu0
    %v3326 = vadd.f32 0.0, %v3325
    %v3327 = vpop.f32.mrb[0].mxu0
    %3328 = vdwg.mxu0
    %v3330 = vrot.slane %v3326, 6
    %v3332 = vadd.f32 %v3141, %v3330
    %v3333 = vxor.u32 %v3332, 2147483648
    %v3334 = vmul.f32 %v3333, 1.442695
    %v3335 = vpow.pop %v3334
    %v3336 = vadd.f32 %v3335, 1.0
    %v3337 = vrcp.pop %v3336
    %v3338 = vmul.f32 1.0, %v3337
    %v3339 = vtanh.pop %v3332
    %v3341 = vrot.slane %v3247, 6
    %v3343 = vmul.f32 %v3338, %v3341
    %3345 = vrot.lane.b32.xlu0 %v3339, 64
    %v3346 = vpop.permute.xlu0 %3345
    %v3348 = vmul.f32 %v3338, %v3346
    %3350 = vrot.lane.b32.xlu0 %v3348, 32
    %v3351 = vpop.permute.xlu0 %3350
    %v3353 = vadd.f32 %v3343, %v3351
    %v3354 = vtanh.pop %v3353
    %3356 = vrot.lane.b32.xlu0 %v3354, 64
    %v3357 = vpop.permute.xlu0 %3356
    %v3359 = vmul.f32 %v3338, %v3357
    %v3361 = vrot.slane %v3359, 2
    %3362 = vrot.lane.b32.xlu0 %v3361, 32
    %v3363 = vpop.permute.xlu0 %3362
    %v3364 = vsel %vm871, %v3363, 0
    %3366 = vmatprep.subr.mxu0 0.0
    %3367 = vmatpush1.msra.mxu0 %v3043
    %3368 = vmatprep.subr.mxu0 0.0
    %3369 = vmatpush1.msra.mxu0 %v3044
    %3370 = vmatprep.subr.mxu0 0.0
    %3371 = vmatpush1.msra.mxu0 %v3045
    %3372 = vmatprep.subr.mxu0 0.0
    %3373 = vmatpush1.msra.mxu0 %v3046
    %3374 = vmatprep.subr.mxu0 0.0
    %3375 = vmatpush1.msra.mxu0 0.0
    %3376 = vmatprep.subr.mxu0 0.0
    %3377 = vmatpush1.msra.mxu0 0.0
    %3378 = vmatprep.subr.mxu0 0.0
    %3379 = vmatpush1.msra.mxu0 0.0
    %3380 = vmatprep.subr.mxu0 0.0
    %3381 = vmatpush1.msra.mxu0 0.0
    %3382 = vmatprep.subr.mxu0 0.0
    %3383 = vmatpush1.msra.mxu0 0.0
    %3384 = vmatprep.subr.mxu0 0.0
    %3385 = vmatpush1.msra.mxu0 0.0
    %3386 = vmatprep.subr.mxu0 0.0
    %3387 = vmatpush1.msra.mxu0 0.0
    %3388 = vmatprep.subr.mxu0 0.0
    %3389 = vmatpush1.msra.mxu0 0.0
    %3390 = vmatprep.subr.mxu0 0.0
    %3391 = vmatpush1.msra.mxu0 0.0
    %3392 = vmatprep.subr.mxu0 0.0
    %3393 = vmatpush1.msra.mxu0 0.0
    %3394 = vmatprep.subr.mxu0 0.0
    %3395 = vmatpush1.msra.mxu0 0.0
    %3396 = vmatprep.subr.mxu0 0.0
    %3397 = vmatpush1.msra.mxu0 0.0
    %3398 = vmatprep.subr.mxu0 0.0
    %3399 = vmatpush1.msra.mxu0 0.0
    %3400 = vmatprep.subr.mxu0 0.0
    %3401 = vmatpush1.msra.mxu0 0.0
    %3402 = vmatprep.subr.mxu0 0.0
    %3403 = vmatpush1.msra.mxu0 0.0
    %3404 = vmatprep.subr.mxu0 0.0
    %3405 = vmatpush1.msra.mxu0 0.0
    %3406 = vmatprep.subr.mxu0 0.0
    %3407 = vmatpush1.msra.mxu0 0.0
    %3408 = vmatprep.subr.mxu0 0.0
    %3409 = vmatpush1.msra.mxu0 0.0
    %3410 = vmatprep.subr.mxu0 0.0
    %3411 = vmatpush1.msra.mxu0 0.0
    %3412 = vmatprep.subr.mxu0 0.0
    %3413 = vmatpush1.msra.mxu0 0.0
    %3414 = vmatprep.subr.mxu0 0.0
    %3415 = vmatpush1.msra.mxu0 0.0
    %3416 = vmatprep.subr.mxu0 0.0
    %3417 = vmatpush1.msra.mxu0 0.0
    %3418 = vmatprep.subr.mxu0 0.0
    %3419 = vmatpush1.msra.mxu0 0.0
    %3420 = vmatprep.subr.mxu0 0.0
    %3421 = vmatpush1.msra.mxu0 0.0
    %3422 = vmatprep.subr.mxu0 0.0
    %3423 = vmatpush1.msra.mxu0 0.0
    %3424 = vmatprep.subr.mxu0 0.0
    %3425 = vmatpush1.msra.mxu0 0.0
    %3426 = vmatprep.subr.mxu0 0.0
    %3427 = vmatpush1.msra.mxu0 0.0
    %3428 = vmatprep.subr.mxu0 0.0
    %3429 = vmatpush1.msra.mxu0 0.0
    %3430 = vmatprep.mubr.f32.mxu0 0.0
    %3431 = vmatmul.mubr.f32.gmra.mrb[0].mxu0 %v3364
    %v3432 = vpop.f32.mrb[0].mxu0
    %v3433 = vadd.f32 0.0, %v3432
    %v3434 = vpop.f32.mrb[0].mxu0
    %3435 = vdwg.mxu0
    %v3437 = vrot.slane %v3433, 4
    %v3439 = vadd.f32 %v3141, %v3437
    %v3440 = vxor.u32 %v3439, 2147483648
    %v3441 = vmul.f32 %v3440, 1.442695
    %v3442 = vpow.pop %v3441
    %v3443 = vadd.f32 %v3442, 1.0
    %v3444 = vrcp.pop %v3443
    %v3445 = vmul.f32 1.0, %v3444
    %v3446 = vtanh.pop %v3439
    %v3448 = vrot.slane %v3353, 6
    %v3450 = vmul.f32 %v3445, %v3448
    %3452 = vrot.lane.b32.xlu0 %v3446, 64
    %v3453 = vpop.permute.xlu0 %3452
    %v3455 = vmul.f32 %v3445, %v3453
    %3457 = vrot.lane.b32.xlu0 %v3455, 32
    %v3458 = vpop.permute.xlu0 %3457
    %v3460 = vadd.f32 %v3450, %v3458
    %v3461 = vtanh.pop %v3460
    %3463 = vrot.lane.b32.xlu0 %v3461, 64
    %v3464 = vpop.permute.xlu0 %3463
    %v3466 = vmul.f32 %v3445, %v3464
    %v3468 = vrot.slane %v3466, 4
    %3469 = vrot.lane.b32.xlu0 %v3468, 32
    %v3470 = vpop.permute.xlu0 %3469
    %v3471 = vsel %vm871, %v3470, 0
    %3473 = vmatprep.subr.mxu0 0.0
    %3474 = vmatpush1.msra.mxu0 %v3043
    %3475 = vmatprep.subr.mxu0 0.0
    %3476 = vmatpush1.msra.mxu0 %v3044
    %3477 = vmatprep.subr.mxu0 0.0
    %3478 = vmatpush1.msra.mxu0 %v3045
    %3479 = vmatprep.subr.mxu0 0.0
    %3480 = vmatpush1.msra.mxu0 %v3046
    %3481 = vmatprep.subr.mxu0 0.0
    %3482 = vmatpush1.msra.mxu0 0.0
    %3483 = vmatprep.subr.mxu0 0.0
    %3484 = vmatpush1.msra.mxu0 0.0
    %3485 = vmatprep.subr.mxu0 0.0
    %3486 = vmatpush1.msra.mxu0 0.0
    %3487 = vmatprep.subr.mxu0 0.0
    %3488 = vmatpush1.msra.mxu0 0.0
    %3489 = vmatprep.subr.mxu0 0.0
    %3490 = vmatpush1.msra.mxu0 0.0
    %3491 = vmatprep.subr.mxu0 0.0
    %3492 = vmatpush1.msra.mxu0 0.0
    %3493 = vmatprep.subr.mxu0 0.0
    %3494 = vmatpush1.msra.mxu0 0.0
    %3495 = vmatprep.subr.mxu0 0.0
    %3496 = vmatpush1.msra.mxu0 0.0
    %3497 = vmatprep.subr.mxu0 0.0
    %3498 = vmatpush1.msra.mxu0 0.0
    %3499 = vmatprep.subr.mxu0 0.0
    %3500 = vmatpush1.msra.mxu0 0.0
    %3501 = vmatprep.subr.mxu0 0.0
    %3502 = vmatpush1.msra.mxu0 0.0
    %3503 = vmatprep.subr.mxu0 0.0
    %3504 = vmatpush1.msra.mxu0 0.0
    %3505 = vmatprep.subr.mxu0 0.0
    %3506 = vmatpush1.msra.mxu0 0.0
    %3507 = vmatprep.subr.mxu0 0.0
    %3508 = vmatpush1.msra.mxu0 0.0
    %3509 = vmatprep.subr.mxu0 0.0
    %3510 = vmatpush1.msra.mxu0 0.0
    %3511 = vmatprep.subr.mxu0 0.0
    %3512 = vmatpush1.msra.mxu0 0.0
    %3513 = vmatprep.subr.mxu0 0.0
    %3514 = vmatpush1.msra.mxu0 0.0
    %3515 = vmatprep.subr.mxu0 0.0
    %3516 = vmatpush1.msra.mxu0 0.0
    %3517 = vmatprep.subr.mxu0 0.0
    %3518 = vmatpush1.msra.mxu0 0.0
    %3519 = vmatprep.subr.mxu0 0.0
    %3520 = vmatpush1.msra.mxu0 0.0
    %3521 = vmatprep.subr.mxu0 0.0
    %3522 = vmatpush1.msra.mxu0 0.0
    %3523 = vmatprep.subr.mxu0 0.0
    %3524 = vmatpush1.msra.mxu0 0.0
    %3525 = vmatprep.subr.mxu0 0.0
    %3526 = vmatpush1.msra.mxu0 0.0
    %3527 = vmatprep.subr.mxu0 0.0
    %3528 = vmatpush1.msra.mxu0 0.0
    %3529 = vmatprep.subr.mxu0 0.0
    %3530 = vmatpush1.msra.mxu0 0.0
    %3531 = vmatprep.subr.mxu0 0.0
    %3532 = vmatpush1.msra.mxu0 0.0
    %3533 = vmatprep.subr.mxu0 0.0
    %3534 = vmatpush1.msra.mxu0 0.0
    %3535 = vmatprep.subr.mxu0 0.0
    %3536 = vmatpush1.msra.mxu0 0.0
    %3537 = vmatprep.mubr.f32.mxu0 0.0
    %3538 = vmatmul.mubr.f32.gmra.mrb[0].mxu0 %v3471
    %v3539 = vpop.f32.mrb[0].mxu0
    %v3540 = vadd.f32 0.0, %v3539
    %v3541 = vpop.f32.mrb[0].mxu0
    %3542 = vdwg.mxu0
    %v3544 = vrot.slane %v3540, 2
    %v3546 = vadd.f32 %v3141, %v3544
    %v3547 = vxor.u32 %v3546, 2147483648
    %v3548 = vmul.f32 %v3547, 1.442695
    %v3549 = vpow.pop %v3548
    %v3550 = vadd.f32 %v3549, 1.0
    %v3551 = vrcp.pop %v3550
    %v3552 = vmul.f32 1.0, %v3551
    %v3553 = vtanh.pop %v3546
    %v3555 = vrot.slane %v3460, 6
    %v3557 = vmul.f32 %v3552, %v3555
    %3559 = vrot.lane.b32.xlu0 %v3553, 64
    %v3560 = vpop.permute.xlu0 %3559
    %v3562 = vmul.f32 %v3552, %v3560
    %3564 = vrot.lane.b32.xlu0 %v3562, 32
    %v3565 = vpop.permute.xlu0 %3564
    %v3567 = vadd.f32 %v3557, %v3565
    %v3568 = vtanh.pop %v3567
    %3570 = vrot.lane.b32.xlu0 %v3568, 64
    %v3571 = vpop.permute.xlu0 %3570
    %v3573 = vmul.f32 %v3552, %v3571
    %v3575 = vrot.slane %v3573, 6
    %3576 = vrot.lane.b32.xlu0 %v3575, 32
    %v3577 = vpop.permute.xlu0 %3576
    %v3578 = vsel %vm871, %v3577, 0
    %3580 = vmatprep.subr.mxu0 0.0
    %3581 = vmatpush1.msra.mxu0 %v3043
    %3582 = vmatprep.subr.mxu0 0.0
    %3583 = vmatpush1.msra.mxu0 %v3044
    %3584 = vmatprep.subr.mxu0 0.0
    %3585 = vmatpush1.msra.mxu0 %v3045
    %3586 = vmatprep.subr.mxu0 0.0
    %3587 = vmatpush1.msra.mxu0 %v3046
    %3588 = vmatprep.subr.mxu0 0.0
    %3589 = vmatpush1.msra.mxu0 0.0
    %3590 = vmatprep.subr.mxu0 0.0
    %3591 = vmatpush1.msra.mxu0 0.0
    %3592 = vmatprep.subr.mxu0 0.0
    %3593 = vmatpush1.msra.mxu0 0.0
    %3594 = vmatprep.subr.mxu0 0.0
    %3595 = vmatpush1.msra.mxu0 0.0
    %3596 = vmatprep.subr.mxu0 0.0
    %3597 = vmatpush1.msra.mxu0 0.0
    %3598 = vmatprep.subr.mxu0 0.0
    %3599 = vmatpush1.msra.mxu0 0.0
    %3600 = vmatprep.subr.mxu0 0.0
    %3601 = vmatpush1.msra.mxu0 0.0
    %3602 = vmatprep.subr.mxu0 0.0
    %3603 = vmatpush1.msra.mxu0 0.0
    %3604 = vmatprep.subr.mxu0 0.0
    %3605 = vmatpush1.msra.mxu0 0.0
    %3606 = vmatprep.subr.mxu0 0.0
    %3607 = vmatpush1.msra.mxu0 0.0
    %3608 = vmatprep.subr.mxu0 0.0
    %3609 = vmatpush1.msra.mxu0 0.0
    %3610 = vmatprep.subr.mxu0 0.0
    %3611 = vmatpush1.msra.mxu0 0.0
    %3612 = vmatprep.subr.mxu0 0.0
    %3613 = vmatpush1.msra.mxu0 0.0
    %3614 = vmatprep.subr.mxu0 0.0
    %3615 = vmatpush1.msra.mxu0 0.0
    %3616 = vmatprep.subr.mxu0 0.0
    %3617 = vmatpush1.msra.mxu0 0.0
    %3618 = vmatprep.subr.mxu0 0.0
    %3619 = vmatpush1.msra.mxu0 0.0
    %3620 = vmatprep.subr.mxu0 0.0
    %3621 = vmatpush1.msra.mxu0 0.0
    %3622 = vmatprep.subr.mxu0 0.0
    %3623 = vmatpush1.msra.mxu0 0.0
    %3624 = vmatprep.subr.mxu0 0.0
    %3625 = vmatpush1.msra.mxu0 0.0
    %3626 = vmatprep.subr.mxu0 0.0
    %3627 = vmatpush1.msra.mxu0 0.0
    %3628 = vmatprep.subr.mxu0 0.0
    %3629 = vmatpush1.msra.mxu0 0.0
    %3630 = vmatprep.subr.mxu0 0.0
    %3631 = vmatpush1.msra.mxu0 0.0
    %3632 = vmatprep.subr.mxu0 0.0
    %3633 = vmatpush1.msra.mxu0 0.0
    %3634 = vmatprep.subr.mxu0 0.0
    %3635 = vmatpush1.msra.mxu0 0.0
    %3636 = vmatprep.subr.mxu0 0.0
    %3637 = vmatpush1.msra.mxu0 0.0
    %3638 = vmatprep.subr.mxu0 0.0
    %3639 = vmatpush1.msra.mxu0 0.0
    %3640 = vmatprep.subr.mxu0 0.0
    %3641 = vmatpush1.msra.mxu0 0.0
    %3642 = vmatprep.subr.mxu0 0.0
    %3643 = vmatpush1.msra.mxu0 0.0
    %3644 = vmatprep.mubr.f32.mxu0 0.0
    %3645 = vmatmul.mubr.f32.gmra.mrb[0].mxu0 %v3578
    %v3646 = vpop.f32.mrb[0].mxu0
    %v3647 = vadd.f32 0.0, %v3646
    %v3648 = vpop.f32.mrb[0].mxu0
    %3649 = vdwg.mxu0
    %v3650 = vadd.f32 %v3146, %v3647
    %v3651 = vxor.u32 %v3650, 2147483648
    %v3652 = vmul.f32 %v3651, 1.442695
    %v3653 = vpow.pop %v3652
    %v3654 = vadd.f32 %v3653, 1.0
    %v3655 = vrcp.pop %v3654
    %v3656 = vmul.f32 1.0, %v3655
    %v3657 = vtanh.pop %v3650
    %v3659 = vrot.slane %v3567, 6
    %v3661 = vmul.f32 %v3656, %v3659
    %3663 = vrot.lane.b32.xlu0 %v3657, 64
    %v3664 = vpop.permute.xlu0 %3663
    %v3666 = vmul.f32 %v3656, %v3664
    %3668 = vrot.lane.b32.xlu0 %v3666, 32
    %v3669 = vpop.permute.xlu0 %3668
    %v3671 = vadd.f32 %v3661, %v3669
    %v3672 = vtanh.pop %v3671
    %3674 = vrot.lane.b32.xlu0 %v3672, 64
    %v3675 = vpop.permute.xlu0 %3674
    %v3677 = vmul.f32 %v3656, %v3675
    %3679 = vrot.lane.b32.xlu0 %v3677, 32
    %v3680 = vpop.permute.xlu0 %3679
    %v3681 = vsel %vm871, %v3680, 0
    %3683 = vmatprep.subr.mxu0 0.0
    %3684 = vmatpush1.msra.mxu0 %v3043
    %3685 = vmatprep.subr.mxu0 0.0
    %3686 = vmatpush1.msra.mxu0 %v3044
    %3687 = vmatprep.subr.mxu0 0.0
    %3688 = vmatpush1.msra.mxu0 %v3045
    %3689 = vmatprep.subr.mxu0 0.0
    %3690 = vmatpush1.msra.mxu0 %v3046
    %3691 = vmatprep.subr.mxu0 0.0
    %3692 = vmatpush1.msra.mxu0 0.0
    %3693 = vmatprep.subr.mxu0 0.0
    %3694 = vmatpush1.msra.mxu0 0.0
    %3695 = vmatprep.subr.mxu0 0.0
    %3696 = vmatpush1.msra.mxu0 0.0
    %3697 = vmatprep.subr.mxu0 0.0
    %3698 = vmatpush1.msra.mxu0 0.0
    %3699 = vmatprep.subr.mxu0 0.0
    %3700 = vmatpush1.msra.mxu0 0.0
    %3701 = vmatprep.subr.mxu0 0.0
    %3702 = vmatpush1.msra.mxu0 0.0
    %3703 = vmatprep.subr.mxu0 0.0
    %3704 = vmatpush1.msra.mxu0 0.0
    %3705 = vmatprep.subr.mxu0 0.0
    %3706 = vmatpush1.msra.mxu0 0.0
    %3707 = vmatprep.subr.mxu0 0.0
    %3708 = vmatpush1.msra.mxu0 0.0
    %3709 = vmatprep.subr.mxu0 0.0
    %3710 = vmatpush1.msra.mxu0 0.0
    %3711 = vmatprep.subr.mxu0 0.0
    %3712 = vmatpush1.msra.mxu0 0.0
    %3713 = vmatprep.subr.mxu0 0.0
    %3714 = vmatpush1.msra.mxu0 0.0
    %3715 = vmatprep.subr.mxu0 0.0
    %3716 = vmatpush1.msra.mxu0 0.0
    %3717 = vmatprep.subr.mxu0 0.0
    %3718 = vmatpush1.msra.mxu0 0.0
    %3719 = vmatprep.subr.mxu0 0.0
    %3720 = vmatpush1.msra.mxu0 0.0
    %3721 = vmatprep.subr.mxu0 0.0
    %3722 = vmatpush1.msra.mxu0 0.0
    %3723 = vmatprep.subr.mxu0 0.0
    %3724 = vmatpush1.msra.mxu0 0.0
    %3725 = vmatprep.subr.mxu0 0.0
    %3726 = vmatpush1.msra.mxu0 0.0
    %3727 = vmatprep.subr.mxu0 0.0
    %3728 = vmatpush1.msra.mxu0 0.0
    %3729 = vmatprep.subr.mxu0 0.0
    %3730 = vmatpush1.msra.mxu0 0.0
    %3731 = vmatprep.subr.mxu0 0.0
    %3732 = vmatpush1.msra.mxu0 0.0
    %3733 = vmatprep.subr.mxu0 0.0
    %3734 = vmatpush1.msra.mxu0 0.0
    %3735 = vmatprep.subr.mxu0 0.0
    %3736 = vmatpush1.msra.mxu0 0.0
    %3737 = vmatprep.subr.mxu0 0.0
    %3738 = vmatpush1.msra.mxu0 0.0
    %3739 = vmatprep.subr.mxu0 0.0
    %3740 = vmatpush1.msra.mxu0 0.0
    %3741 = vmatprep.subr.mxu0 0.0
    %3742 = vmatpush1.msra.mxu0 0.0
    %3743 = vmatprep.subr.mxu0 0.0
    %3744 = vmatpush1.msra.mxu0 0.0
    %3745 = vmatprep.subr.mxu0 0.0
    %3746 = vmatpush1.msra.mxu0 0.0
    %3747 = vmatprep.mubr.f32.mxu0 0.0
    %3748 = vmatmul.mubr.f32.gmra.mrb[0].mxu0 %v3681
    %v3749 = vpop.f32.mrb[0].mxu0
    %v3750 = vadd.f32 0.0, %v3749
    %v3751 = vpop.f32.mrb[0].mxu0
    %3752 = vdwg.mxu0
    %v3754 = vrot.slane %v3750, 6
    %v3756 = vadd.f32 %v3146, %v3754
    %v3757 = vxor.u32 %v3756, 2147483648
    %v3758 = vmul.f32 %v3757, 1.442695
    %v3759 = vpow.pop %v3758
    %v3760 = vadd.f32 %v3759, 1.0
    %v3761 = vrcp.pop %v3760
    %v3762 = vmul.f32 1.0, %v3761
    %v3763 = vtanh.pop %v3756
    %v3765 = vrot.slane %v3671, 6
    %v3767 = vmul.f32 %v3762, %v3765
    %3769 = vrot.lane.b32.xlu0 %v3763, 64
    %v3770 = vpop.permute.xlu0 %3769
    %v3772 = vmul.f32 %v3762, %v3770
    %3774 = vrot.lane.b32.xlu0 %v3772, 32
    %v3775 = vpop.permute.xlu0 %3774
    %v3777 = vadd.f32 %v3767, %v3775
    %v3778 = vtanh.pop %v3777
    %3780 = vrot.lane.b32.xlu0 %v3778, 64
    %v3781 = vpop.permute.xlu0 %3780
    %v3783 = vmul.f32 %v3762, %v3781
    %v3785 = vrot.slane %v3783, 2
    %3786 = vrot.lane.b32.xlu0 %v3785, 32
    %v3787 = vpop.permute.xlu0 %3786
    %v3788 = vsel %vm871, %v3787, 0
    %3790 = vmatprep.subr.mxu0 0.0
    %3791 = vmatpush1.msra.mxu0 %v3043
    %3792 = vmatprep.subr.mxu0 0.0
    %3793 = vmatpush1.msra.mxu0 %v3044
    %3794 = vmatprep.subr.mxu0 0.0
    %3795 = vmatpush1.msra.mxu0 %v3045
    %3796 = vmatprep.subr.mxu0 0.0
    %3797 = vmatpush1.msra.mxu0 %v3046
    %3798 = vmatprep.subr.mxu0 0.0
    %3799 = vmatpush1.msra.mxu0 0.0
    %3800 = vmatprep.subr.mxu0 0.0
    %3801 = vmatpush1.msra.mxu0 0.0
    %3802 = vmatprep.subr.mxu0 0.0
    %3803 = vmatpush1.msra.mxu0 0.0
    %3804 = vmatprep.subr.mxu0 0.0
    %3805 = vmatpush1.msra.mxu0 0.0
    %3806 = vmatprep.subr.mxu0 0.0
    %3807 = vmatpush1.msra.mxu0 0.0
    %3808 = vmatprep.subr.mxu0 0.0
    %3809 = vmatpush1.msra.mxu0 0.0
    %3810 = vmatprep.subr.mxu0 0.0
    %3811 = vmatpush1.msra.mxu0 0.0
    %3812 = vmatprep.subr.mxu0 0.0
    %3813 = vmatpush1.msra.mxu0 0.0
    %3814 = vmatprep.subr.mxu0 0.0
    %3815 = vmatpush1.msra.mxu0 0.0
    %3816 = vmatprep.subr.mxu0 0.0
    %3817 = vmatpush1.msra.mxu0 0.0
    %3818 = vmatprep.subr.mxu0 0.0
    %3819 = vmatpush1.msra.mxu0 0.0
    %3820 = vmatprep.subr.mxu0 0.0
    %3821 = vmatpush1.msra.mxu0 0.0
    %3822 = vmatprep.subr.mxu0 0.0
    %3823 = vmatpush1.msra.mxu0 0.0
    %3824 = vmatprep.subr.mxu0 0.0
    %3825 = vmatpush1.msra.mxu0 0.0
    %3826 = vmatprep.subr.mxu0 0.0
    %3827 = vmatpush1.msra.mxu0 0.0
    %3828 = vmatprep.subr.mxu0 0.0
    %3829 = vmatpush1.msra.mxu0 0.0
    %3830 = vmatprep.subr.mxu0 0.0
    %3831 = vmatpush1.msra.mxu0 0.0
    %3832 = vmatprep.subr.mxu0 0.0
    %3833 = vmatpush1.msra.mxu0 0.0
    %3834 = vmatprep.subr.mxu0 0.0
    %3835 = vmatpush1.msra.mxu0 0.0
    %3836 = vmatprep.subr.mxu0 0.0
    %3837 = vmatpush1.msra.mxu0 0.0
    %3838 = vmatprep.subr.mxu0 0.0
    %3839 = vmatpush1.msra.mxu0 0.0
    %3840 = vmatprep.subr.mxu0 0.0
    %3841 = vmatpush1.msra.mxu0 0.0
    %3842 = vmatprep.subr.mxu0 0.0
    %3843 = vmatpush1.msra.mxu0 0.0
    %3844 = vmatprep.subr.mxu0 0.0
    %3845 = vmatpush1.msra.mxu0 0.0
    %3846 = vmatprep.subr.mxu0 0.0
    %3847 = vmatpush1.msra.mxu0 0.0
    %3848 = vmatprep.subr.mxu0 0.0
    %3849 = vmatpush1.msra.mxu0 0.0
    %3850 = vmatprep.subr.mxu0 0.0
    %3851 = vmatpush1.msra.mxu0 0.0
    %3852 = vmatprep.subr.mxu0 0.0
    %3853 = vmatpush1.msra.mxu0 0.0
    %3854 = vmatprep.mubr.f32.mxu0 0.0
    %3855 = vmatmul.mubr.f32.gmra.mrb[0].mxu0 %v3788
    %v3856 = vpop.f32.mrb[0].mxu0
    %v3857 = vadd.f32 0.0, %v3856
    %v3858 = vpop.f32.mrb[0].mxu0
    %3859 = vdwg.mxu0
    %v3861 = vrot.slane %v3857, 4
    %v3863 = vadd.f32 %v3146, %v3861
    %v3864 = vxor.u32 %v3863, 2147483648
    %v3865 = vmul.f32 %v3864, 1.442695
    %v3866 = vpow.pop %v3865
    %v3867 = vadd.f32 %v3866, 1.0
    %v3868 = vrcp.pop %v3867
    %v3869 = vmul.f32 1.0, %v3868
    %v3870 = vtanh.pop %v3863
    %v3872 = vrot.slane %v3777, 6
    %v3874 = vmul.f32 %v3869, %v3872
    %3876 = vrot.lane.b32.xlu0 %v3870, 64
    %v3877 = vpop.permute.xlu0 %3876
    %v3879 = vmul.f32 %v3869, %v3877
    %3881 = vrot.lane.b32.xlu0 %v3879, 32
    %v3882 = vpop.permute.xlu0 %3881
    %v3884 = vadd.f32 %v3874, %v3882
    %v3885 = vtanh.pop %v3884
    %3887 = vrot.lane.b32.xlu0 %v3885, 64
    %v3888 = vpop.permute.xlu0 %3887
    %v3890 = vmul.f32 %v3869, %v3888
    %v3892 = vrot.slane %v3890, 4
    %3893 = vrot.lane.b32.xlu0 %v3892, 32
    %v3894 = vpop.permute.xlu0 %3893
    %v3895 = vsel %vm871, %v3894, 0
    %3897 = vmatprep.subr.mxu0 0.0
    %3898 = vmatpush1.msra.mxu0 %v3043
    %3899 = vmatprep.subr.mxu0 0.0
    %3900 = vmatpush1.msra.mxu0 %v3044
    %3901 = vmatprep.subr.mxu0 0.0
    %3902 = vmatpush1.msra.mxu0 %v3045
    %3903 = vmatprep.subr.mxu0 0.0
    %3904 = vmatpush1.msra.mxu0 %v3046
    %3905 = vmatprep.subr.mxu0 0.0
    %3906 = vmatpush1.msra.mxu0 0.0
    %3907 = vmatprep.subr.mxu0 0.0
    %3908 = vmatpush1.msra.mxu0 0.0
    %3909 = vmatprep.subr.mxu0 0.0
    %3910 = vmatpush1.msra.mxu0 0.0
    %3911 = vmatprep.subr.mxu0 0.0
    %3912 = vmatpush1.msra.mxu0 0.0
    %3913 = vmatprep.subr.mxu0 0.0
    %3914 = vmatpush1.msra.mxu0 0.0
    %3915 = vmatprep.subr.mxu0 0.0
    %3916 = vmatpush1.msra.mxu0 0.0
    %3917 = vmatprep.subr.mxu0 0.0
    %3918 = vmatpush1.msra.mxu0 0.0
    %3919 = vmatprep.subr.mxu0 0.0
    %3920 = vmatpush1.msra.mxu0 0.0
    %3921 = vmatprep.subr.mxu0 0.0
    %3922 = vmatpush1.msra.mxu0 0.0
    %3923 = vmatprep.subr.mxu0 0.0
    %3924 = vmatpush1.msra.mxu0 0.0
    %3925 = vmatprep.subr.mxu0 0.0
    %3926 = vmatpush1.msra.mxu0 0.0
    %3927 = vmatprep.subr.mxu0 0.0
    %3928 = vmatpush1.msra.mxu0 0.0
    %3929 = vmatprep.subr.mxu0 0.0
    %3930 = vmatpush1.msra.mxu0 0.0
    %3931 = vmatprep.subr.mxu0 0.0
    %3932 = vmatpush1.msra.mxu0 0.0
    %3933 = vmatprep.subr.mxu0 0.0
    %3934 = vmatpush1.msra.mxu0 0.0
    %3935 = vmatprep.subr.mxu0 0.0
    %3936 = vmatpush1.msra.mxu0 0.0
    %3937 = vmatprep.subr.mxu0 0.0
    %3938 = vmatpush1.msra.mxu0 0.0
    %3939 = vmatprep.subr.mxu0 0.0
    %3940 = vmatpush1.msra.mxu0 0.0
    %3941 = vmatprep.subr.mxu0 0.0
    %3942 = vmatpush1.msra.mxu0 0.0
    %3943 = vmatprep.subr.mxu0 0.0
    %3944 = vmatpush1.msra.mxu0 0.0
    %3945 = vmatprep.subr.mxu0 0.0
    %3946 = vmatpush1.msra.mxu0 0.0
    %3947 = vmatprep.subr.mxu0 0.0
    %3948 = vmatpush1.msra.mxu0 0.0
    %3949 = vmatprep.subr.mxu0 0.0
    %3950 = vmatpush1.msra.mxu0 0.0
    %3951 = vmatprep.subr.mxu0 0.0
    %3952 = vmatpush1.msra.mxu0 0.0
    %3953 = vmatprep.subr.mxu0 0.0
    %3954 = vmatpush1.msra.mxu0 0.0
    %3955 = vmatprep.subr.mxu0 0.0
    %3956 = vmatpush1.msra.mxu0 0.0
    %3957 = vmatprep.subr.mxu0 0.0
    %3958 = vmatpush1.msra.mxu0 0.0
    %3959 = vmatprep.subr.mxu0 0.0
    %3960 = vmatpush1.msra.mxu0 0.0
    %3961 = vmatprep.mubr.f32.mxu0 0.0
    %3962 = vmatmul.mubr.f32.gmra.mrb[0].mxu0 %v3895
    %v3963 = vpop.f32.mrb[0].mxu0
    %v3964 = vadd.f32 0.0, %v3963
    %v3965 = vpop.f32.mrb[0].mxu0
    %3966 = vdwg.mxu0
    %v3968 = vrot.slane %v3964, 2
    %v3970 = vadd.f32 %v3146, %v3968
    %v3971 = vxor.u32 %v3970, 2147483648
    %v3972 = vmul.f32 %v3971, 1.442695
    %v3973 = vpow.pop %v3972
    %v3974 = vadd.f32 %v3973, 1.0
    %v3975 = vrcp.pop %v3974
    %v3976 = vmul.f32 1.0, %v3975
    %v3977 = vtanh.pop %v3970
    %v3979 = vrot.slane %v3884, 6
    %v3981 = vmul.f32 %v3976, %v3979
    %3983 = vrot.lane.b32.xlu0 %v3977, 64
    %v3984 = vpop.permute.xlu0 %3983
    %v3986 = vmul.f32 %v3976, %v3984
    %3988 = vrot.lane.b32.xlu0 %v3986, 32
    %v3989 = vpop.permute.xlu0 %3988
    %v3991 = vadd.f32 %v3981, %v3989
    %v3992 = vtanh.pop %v3991
    %3994 = vrot.lane.b32.xlu0 %v3992, 64
    %v3995 = vpop.permute.xlu0 %3994
    %v3997 = vmul.f32 %v3976, %v3995
    %v3999 = vrot.slane %v3997, 6
    %4000 = vrot.lane.b32.xlu0 %v3999, 32
    %v4001 = vpop.permute.xlu0 %4000
    %v4002 = vsel %vm871, %v4001, 0
    %4004 = vmatprep.subr.mxu0 0.0
    %4005 = vmatpush1.msra.mxu0 %v3043
    %4006 = vmatprep.subr.mxu0 0.0
    %4007 = vmatpush1.msra.mxu0 %v3044
    %4008 = vmatprep.subr.mxu0 0.0
    %4009 = vmatpush1.msra.mxu0 %v3045
    %4010 = vmatprep.subr.mxu0 0.0
    %4011 = vmatpush1.msra.mxu0 %v3046
    %4012 = vmatprep.subr.mxu0 0.0
    %4013 = vmatpush1.msra.mxu0 0.0
    %4014 = vmatprep.subr.mxu0 0.0
    %4015 = vmatpush1.msra.mxu0 0.0
    %4016 = vmatprep.subr.mxu0 0.0
    %4017 = vmatpush1.msra.mxu0 0.0
    %4018 = vmatprep.subr.mxu0 0.0
    %4019 = vmatpush1.msra.mxu0 0.0
    %4020 = vmatprep.subr.mxu0 0.0
    %4021 = vmatpush1.msra.mxu0 0.0
    %4022 = vmatprep.subr.mxu0 0.0
    %4023 = vmatpush1.msra.mxu0 0.0
    %4024 = vmatprep.subr.mxu0 0.0
    %4025 = vmatpush1.msra.mxu0 0.0
    %4026 = vmatprep.subr.mxu0 0.0
    %4027 = vmatpush1.msra.mxu0 0.0
    %4028 = vmatprep.subr.mxu0 0.0
    %4029 = vmatpush1.msra.mxu0 0.0
    %4030 = vmatprep.subr.mxu0 0.0
    %4031 = vmatpush1.msra.mxu0 0.0
    %4032 = vmatprep.subr.mxu0 0.0
    %4033 = vmatpush1.msra.mxu0 0.0
    %4034 = vmatprep.subr.mxu0 0.0
    %4035 = vmatpush1.msra.mxu0 0.0
    %4036 = vmatprep.subr.mxu0 0.0
    %4037 = vmatpush1.msra.mxu0 0.0
    %4038 = vmatprep.subr.mxu0 0.0
    %4039 = vmatpush1.msra.mxu0 0.0
    %4040 = vmatprep.subr.mxu0 0.0
    %4041 = vmatpush1.msra.mxu0 0.0
    %4042 = vmatprep.subr.mxu0 0.0
    %4043 = vmatpush1.msra.mxu0 0.0
    %4044 = vmatprep.subr.mxu0 0.0
    %4045 = vmatpush1.msra.mxu0 0.0
    %4046 = vmatprep.subr.mxu0 0.0
    %4047 = vmatpush1.msra.mxu0 0.0
    %4048 = vmatprep.subr.mxu0 0.0
    %4049 = vmatpush1.msra.mxu0 0.0
    %4050 = vmatprep.subr.mxu0 0.0
    %4051 = vmatpush1.msra.mxu0 0.0
    %4052 = vmatprep.subr.mxu0 0.0
    %4053 = vmatpush1.msra.mxu0 0.0
    %4054 = vmatprep.subr.mxu0 0.0
    %4055 = vmatpush1.msra.mxu0 0.0
    %4056 = vmatprep.subr.mxu0 0.0
    %4057 = vmatpush1.msra.mxu0 0.0
    %4058 = vmatprep.subr.mxu0 0.0
    %4059 = vmatpush1.msra.mxu0 0.0
    %4060 = vmatprep.subr.mxu0 0.0
    %4061 = vmatpush1.msra.mxu0 0.0
    %4062 = vmatprep.subr.mxu0 0.0
    %4063 = vmatpush1.msra.mxu0 0.0
    %4064 = vmatprep.subr.mxu0 0.0
    %4065 = vmatpush1.msra.mxu0 0.0
    %4066 = vmatprep.subr.mxu0 0.0
    %4067 = vmatpush1.msra.mxu0 0.0
    %4068 = vmatprep.mubr.f32.mxu0 0.0
    %4069 = vmatmul.mubr.f32.gmra.mrb[0].mxu0 %v4002
    %v4070 = vpop.f32.mrb[0].mxu0
    %v4071 = vadd.f32 0.0, %v4070
    %v4072 = vpop.f32.mrb[0].mxu0
    %4073 = vdwg.mxu0
    %v4074 = vadd.f32 %v3151, %v4071
    %v4075 = vxor.u32 %v4074, 2147483648
    %v4076 = vmul.f32 %v4075, 1.442695
    %v4077 = vpow.pop %v4076
    %v4078 = vadd.f32 %v4077, 1.0
    %v4079 = vrcp.pop %v4078
    %v4080 = vmul.f32 1.0, %v4079
    %v4081 = vtanh.pop %v4074
    %v4083 = vrot.slane %v3991, 6
    %v4085 = vmul.f32 %v4080, %v4083
    %4087 = vrot.lane.b32.xlu0 %v4081, 64
    %v4088 = vpop.permute.xlu0 %4087
    %v4090 = vmul.f32 %v4080, %v4088
    %4092 = vrot.lane.b32.xlu0 %v4090, 32
    %v4093 = vpop.permute.xlu0 %4092
    %v4095 = vadd.f32 %v4085, %v4093
    %v4096 = vtanh.pop %v4095
    %4098 = vrot.lane.b32.xlu0 %v4096, 64
    %v4099 = vpop.permute.xlu0 %4098
    %v4101 = vmul.f32 %v4080, %v4099
    %4103 = vrot.lane.b32.xlu0 %v4101, 32
    %v4104 = vpop.permute.xlu0 %4103
    %v4105 = vsel %vm871, %v4104, 0
    %4107 = vmatprep.subr.mxu0 0.0
    %4108 = vmatpush1.msra.mxu0 %v3043
    %4109 = vmatprep.subr.mxu0 0.0
    %4110 = vmatpush1.msra.mxu0 %v3044
    %4111 = vmatprep.subr.mxu0 0.0
    %4112 = vmatpush1.msra.mxu0 %v3045
    %4113 = vmatprep.subr.mxu0 0.0
    %4114 = vmatpush1.msra.mxu0 %v3046
    %4115 = vmatprep.subr.mxu0 0.0
    %4116 = vmatpush1.msra.mxu0 0.0
    %4117 = vmatprep.subr.mxu0 0.0
    %4118 = vmatpush1.msra.mxu0 0.0
    %4119 = vmatprep.subr.mxu0 0.0
    %4120 = vmatpush1.msra.mxu0 0.0
    %4121 = vmatprep.subr.mxu0 0.0
    %4122 = vmatpush1.msra.mxu0 0.0
    %4123 = vmatprep.subr.mxu0 0.0
    %4124 = vmatpush1.msra.mxu0 0.0
    %4125 = vmatprep.subr.mxu0 0.0
    %4126 = vmatpush1.msra.mxu0 0.0
    %4127 = vmatprep.subr.mxu0 0.0
    %4128 = vmatpush1.msra.mxu0 0.0
    %4129 = vmatprep.subr.mxu0 0.0
    %4130 = vmatpush1.msra.mxu0 0.0
    %4131 = vmatprep.subr.mxu0 0.0
    %4132 = vmatpush1.msra.mxu0 0.0
    %4133 = vmatprep.subr.mxu0 0.0
    %4134 = vmatpush1.msra.mxu0 0.0
    %4135 = vmatprep.subr.mxu0 0.0
    %4136 = vmatpush1.msra.mxu0 0.0
    %4137 = vmatprep.subr.mxu0 0.0
    %4138 = vmatpush1.msra.mxu0 0.0
    %4139 = vmatprep.subr.mxu0 0.0
    %4140 = vmatpush1.msra.mxu0 0.0
    %4141 = vmatprep.subr.mxu0 0.0
    %4142 = vmatpush1.msra.mxu0 0.0
    %4143 = vmatprep.subr.mxu0 0.0
    %4144 = vmatpush1.msra.mxu0 0.0
    %4145 = vmatprep.subr.mxu0 0.0
    %4146 = vmatpush1.msra.mxu0 0.0
    %4147 = vmatprep.subr.mxu0 0.0
    %4148 = vmatpush1.msra.mxu0 0.0
    %4149 = vmatprep.subr.mxu0 0.0
    %4150 = vmatpush1.msra.mxu0 0.0
    %4151 = vmatprep.subr.mxu0 0.0
    %4152 = vmatpush1.msra.mxu0 0.0
    %4153 = vmatprep.subr.mxu0 0.0
    %4154 = vmatpush1.msra.mxu0 0.0
    %4155 = vmatprep.subr.mxu0 0.0
    %4156 = vmatpush1.msra.mxu0 0.0
    %4157 = vmatprep.subr.mxu0 0.0
    %4158 = vmatpush1.msra.mxu0 0.0
    %4159 = vmatprep.subr.mxu0 0.0
    %4160 = vmatpush1.msra.mxu0 0.0
    %4161 = vmatprep.subr.mxu0 0.0
    %4162 = vmatpush1.msra.mxu0 0.0
    %4163 = vmatprep.subr.mxu0 0.0
    %4164 = vmatpush1.msra.mxu0 0.0
    %4165 = vmatprep.subr.mxu0 0.0
    %4166 = vmatpush1.msra.mxu0 0.0
    %4167 = vmatprep.subr.mxu0 0.0
    %4168 = vmatpush1.msra.mxu0 0.0
    %4169 = vmatprep.subr.mxu0 0.0
    %4170 = vmatpush1.msra.mxu0 0.0
    %4171 = vmatprep.mubr.f32.mxu0 0.0
    %4172 = vmatmul.mubr.f32.gmra.mrb[0].mxu0 %v4105
    %v4173 = vpop.f32.mrb[0].mxu0
    %v4174 = vadd.f32 0.0, %v4173
    %v4175 = vpop.f32.mrb[0].mxu0
    %4176 = vdwg.mxu0
    %v4178 = vrot.slane %v4174, 6
    %v4180 = vadd.f32 %v3151, %v4178
    %v4181 = vxor.u32 %v4180, 2147483648
    %v4182 = vmul.f32 %v4181, 1.442695
    %v4183 = vpow.pop %v4182
    %v4184 = vadd.f32 %v4183, 1.0
    %v4185 = vrcp.pop %v4184
    %v4186 = vmul.f32 1.0, %v4185
    %v4187 = vtanh.pop %v4180
    %v4189 = vrot.slane %v4095, 6
    %v4191 = vmul.f32 %v4186, %v4189
    %4193 = vrot.lane.b32.xlu0 %v4187, 64
    %v4194 = vpop.permute.xlu0 %4193
    %v4196 = vmul.f32 %v4186, %v4194
    %4198 = vrot.lane.b32.xlu0 %v4196, 32
    %v4199 = vpop.permute.xlu0 %4198
    %v4201 = vadd.f32 %v4191, %v4199
    %v4202 = vtanh.pop %v4201
    %4204 = vrot.lane.b32.xlu0 %v4202, 64
    %v4205 = vpop.permute.xlu0 %4204
    %v4207 = vmul.f32 %v4186, %v4205
    %v4209 = vrot.slane %v4207, 2
    %4210 = vrot.lane.b32.xlu0 %v4209, 32
    %v4211 = vpop.permute.xlu0 %4210
    %v4212 = vsel %vm871, %v4211, 0
    %4214 = vmatprep.subr.mxu0 0.0
    %4215 = vmatpush1.msra.mxu0 %v3043
    %4216 = vmatprep.subr.mxu0 0.0
    %4217 = vmatpush1.msra.mxu0 %v3044
    %4218 = vmatprep.subr.mxu0 0.0
    %4219 = vmatpush1.msra.mxu0 %v3045
    %4220 = vmatprep.subr.mxu0 0.0
    %4221 = vmatpush1.msra.mxu0 %v3046
    %4222 = vmatprep.subr.mxu0 0.0
    %4223 = vmatpush1.msra.mxu0 0.0
    %4224 = vmatprep.subr.mxu0 0.0
    %4225 = vmatpush1.msra.mxu0 0.0
    %4226 = vmatprep.subr.mxu0 0.0
    %4227 = vmatpush1.msra.mxu0 0.0
    %4228 = vmatprep.subr.mxu0 0.0
    %4229 = vmatpush1.msra.mxu0 0.0
    %4230 = vmatprep.subr.mxu0 0.0
    %4231 = vmatpush1.msra.mxu0 0.0
    %4232 = vmatprep.subr.mxu0 0.0
    %4233 = vmatpush1.msra.mxu0 0.0
    %4234 = vmatprep.subr.mxu0 0.0
    %4235 = vmatpush1.msra.mxu0 0.0
    %4236 = vmatprep.subr.mxu0 0.0
    %4237 = vmatpush1.msra.mxu0 0.0
    %4238 = vmatprep.subr.mxu0 0.0
    %4239 = vmatpush1.msra.mxu0 0.0
    %4240 = vmatprep.subr.mxu0 0.0
    %4241 = vmatpush1.msra.mxu0 0.0
    %4242 = vmatprep.subr.mxu0 0.0
    %4243 = vmatpush1.msra.mxu0 0.0
    %4244 = vmatprep.subr.mxu0 0.0
    %4245 = vmatpush1.msra.mxu0 0.0
    %4246 = vmatprep.subr.mxu0 0.0
    %4247 = vmatpush1.msra.mxu0 0.0
    %4248 = vmatprep.subr.mxu0 0.0
    %4249 = vmatpush1.msra.mxu0 0.0
    %4250 = vmatprep.subr.mxu0 0.0
    %4251 = vmatpush1.msra.mxu0 0.0
    %4252 = vmatprep.subr.mxu0 0.0
    %4253 = vmatpush1.msra.mxu0 0.0
    %4254 = vmatprep.subr.mxu0 0.0
    %4255 = vmatpush1.msra.mxu0 0.0
    %4256 = vmatprep.subr.mxu0 0.0
    %4257 = vmatpush1.msra.mxu0 0.0
    %4258 = vmatprep.subr.mxu0 0.0
    %4259 = vmatpush1.msra.mxu0 0.0
    %4260 = vmatprep.subr.mxu0 0.0
    %4261 = vmatpush1.msra.mxu0 0.0
    %4262 = vmatprep.subr.mxu0 0.0
    %4263 = vmatpush1.msra.mxu0 0.0
    %4264 = vmatprep.subr.mxu0 0.0
    %4265 = vmatpush1.msra.mxu0 0.0
    %4266 = vmatprep.subr.mxu0 0.0
    %4267 = vmatpush1.msra.mxu0 0.0
    %4268 = vmatprep.subr.mxu0 0.0
    %4269 = vmatpush1.msra.mxu0 0.0
    %4270 = vmatprep.subr.mxu0 0.0
    %4271 = vmatpush1.msra.mxu0 0.0
    %4272 = vmatprep.subr.mxu0 0.0
    %4273 = vmatpush1.msra.mxu0 0.0
    %4274 = vmatprep.subr.mxu0 0.0
    %4275 = vmatpush1.msra.mxu0 0.0
    %4276 = vmatprep.subr.mxu0 0.0
    %4277 = vmatpush1.msra.mxu0 0.0
    %4278 = vmatprep.mubr.f32.mxu0 0.0
    %4279 = vmatmul.mubr.f32.gmra.mrb[0].mxu0 %v4212
    %v4280 = vpop.f32.mrb[0].mxu0
    %v4281 = vadd.f32 0.0, %v4280
    %v4282 = vpop.f32.mrb[0].mxu0
    %4283 = vdwg.mxu0
    %v4285 = vrot.slane %v4281, 4
    %v4287 = vadd.f32 %v3151, %v4285
    %v4288 = vxor.u32 %v4287, 2147483648
    %v4289 = vmul.f32 %v4288, 1.442695
    %v4290 = vpow.pop %v4289
    %v4291 = vadd.f32 %v4290, 1.0
    %v4292 = vrcp.pop %v4291
    %v4293 = vmul.f32 1.0, %v4292
    %v4294 = vtanh.pop %v4287
    %v4296 = vrot.slane %v4201, 6
    %v4298 = vmul.f32 %v4293, %v4296
    %4300 = vrot.lane.b32.xlu0 %v4294, 64
    %v4301 = vpop.permute.xlu0 %4300
    %v4303 = vmul.f32 %v4293, %v4301
    %4305 = vrot.lane.b32.xlu0 %v4303, 32
    %v4306 = vpop.permute.xlu0 %4305
    %v4308 = vadd.f32 %v4298, %v4306
    %v4309 = vtanh.pop %v4308
    %4311 = vrot.lane.b32.xlu0 %v4309, 64
    %v4312 = vpop.permute.xlu0 %4311
    %v4314 = vmul.f32 %v4293, %v4312
    %v4316 = vrot.slane %v4314, 4
    %4317 = vrot.lane.b32.xlu0 %v4316, 32
    %v4318 = vpop.permute.xlu0 %4317
    %v4319 = vsel %vm871, %v4318, 0
    %4321 = vmatprep.subr.mxu0 0.0
    %4322 = vmatpush1.msra.mxu0 %v3043
    %4323 = vmatprep.subr.mxu0 0.0
    %4324 = vmatpush1.msra.mxu0 %v3044
    %4325 = vmatprep.subr.mxu0 0.0
    %4326 = vmatpush1.msra.mxu0 %v3045
    %4327 = vmatprep.subr.mxu0 0.0
    %4328 = vmatpush1.msra.mxu0 %v3046
    %4329 = vmatprep.subr.mxu0 0.0
    %4330 = vmatpush1.msra.mxu0 0.0
    %4331 = vmatprep.subr.mxu0 0.0
    %4332 = vmatpush1.msra.mxu0 0.0
    %4333 = vmatprep.subr.mxu0 0.0
    %4334 = vmatpush1.msra.mxu0 0.0
    %4335 = vmatprep.subr.mxu0 0.0
    %4336 = vmatpush1.msra.mxu0 0.0
    %4337 = vmatprep.subr.mxu0 0.0
    %4338 = vmatpush1.msra.mxu0 0.0
    %4339 = vmatprep.subr.mxu0 0.0
    %4340 = vmatpush1.msra.mxu0 0.0
    %4341 = vmatprep.subr.mxu0 0.0
    %4342 = vmatpush1.msra.mxu0 0.0
    %4343 = vmatprep.subr.mxu0 0.0
    %4344 = vmatpush1.msra.mxu0 0.0
    %4345 = vmatprep.subr.mxu0 0.0
    %4346 = vmatpush1.msra.mxu0 0.0
    %4347 = vmatprep.subr.mxu0 0.0
    %4348 = vmatpush1.msra.mxu0 0.0
    %4349 = vmatprep.subr.mxu0 0.0
    %4350 = vmatpush1.msra.mxu0 0.0
    %4351 = vmatprep.subr.mxu0 0.0
    %4352 = vmatpush1.msra.mxu0 0.0
    %4353 = vmatprep.subr.mxu0 0.0
    %4354 = vmatpush1.msra.mxu0 0.0
    %4355 = vmatprep.subr.mxu0 0.0
    %4356 = vmatpush1.msra.mxu0 0.0
    %4357 = vmatprep.subr.mxu0 0.0
    %4358 = vmatpush1.msra.mxu0 0.0
    %4359 = vmatprep.subr.mxu0 0.0
    %4360 = vmatpush1.msra.mxu0 0.0
    %4361 = vmatprep.subr.mxu0 0.0
    %4362 = vmatpush1.msra.mxu0 0.0
    %4363 = vmatprep.subr.mxu0 0.0
    %4364 = vmatpush1.msra.mxu0 0.0
    %4365 = vmatprep.subr.mxu0 0.0
    %4366 = vmatpush1.msra.mxu0 0.0
    %4367 = vmatprep.subr.mxu0 0.0
    %4368 = vmatpush1.msra.mxu0 0.0
    %4369 = vmatprep.subr.mxu0 0.0
    %4370 = vmatpush1.msra.mxu0 0.0
    %4371 = vmatprep.subr.mxu0 0.0
    %4372 = vmatpush1.msra.mxu0 0.0
    %4373 = vmatprep.subr.mxu0 0.0
    %4374 = vmatpush1.msra.mxu0 0.0
    %4375 = vmatprep.subr.mxu0 0.0
    %4376 = vmatpush1.msra.mxu0 0.0
    %4377 = vmatprep.subr.mxu0 0.0
    %4378 = vmatpush1.msra.mxu0 0.0
    %4379 = vmatprep.subr.mxu0 0.0
    %4380 = vmatpush1.msra.mxu0 0.0
    %4381 = vmatprep.subr.mxu0 0.0
    %4382 = vmatpush1.msra.mxu0 0.0
    %4383 = vmatprep.subr.mxu0 0.0
    %4384 = vmatpush1.msra.mxu0 0.0
    %4385 = vmatprep.mubr.f32.mxu0 0.0
    %4386 = vmatmul.mubr.f32.gmra.mrb[0].mxu0 %v4319
    %v4387 = vpop.f32.mrb[0].mxu0
    %v4388 = vadd.f32 0.0, %v4387
    %v4389 = vpop.f32.mrb[0].mxu0
    %4390 = vdwg.mxu0
    %v4392 = vrot.slane %v4388, 2
    %v4394 = vadd.f32 %v3151, %v4392
    %v4395 = vxor.u32 %v4394, 2147483648
    %v4396 = vmul.f32 %v4395, 1.442695
    %v4397 = vpow.pop %v4396
    %v4398 = vadd.f32 %v4397, 1.0
    %v4399 = vrcp.pop %v4398
    %v4400 = vmul.f32 1.0, %v4399
    %v4401 = vtanh.pop %v4394
    %v4403 = vrot.slane %v4308, 6
    %v4405 = vmul.f32 %v4400, %v4403
    %4407 = vrot.lane.b32.xlu0 %v4401, 64
    %v4408 = vpop.permute.xlu0 %4407
    %v4410 = vmul.f32 %v4400, %v4408
    %4412 = vrot.lane.b32.xlu0 %v4410, 32
    %v4413 = vpop.permute.xlu0 %4412
    %v4415 = vadd.f32 %v4405, %v4413
    %v4416 = vtanh.pop %v4415
    %4418 = vrot.lane.b32.xlu0 %v4416, 64
    %v4419 = vpop.permute.xlu0 %4418
    %v4421 = vmul.f32 %v4400, %v4419
    %v4423 = vrot.slane %v4421, 6
    %4424 = vrot.lane.b32.xlu0 %v4423, 32
    %v4425 = vpop.permute.xlu0 %4424
    %v4426 = vsel %vm871, %v4425, 0
    %4428 = vmatprep.subr.mxu0 0.0
    %4429 = vmatpush1.msra.mxu0 %v3043
    %4430 = vmatprep.subr.mxu0 0.0
    %4431 = vmatpush1.msra.mxu0 %v3044
    %4432 = vmatprep.subr.mxu0 0.0
    %4433 = vmatpush1.msra.mxu0 %v3045
    %4434 = vmatprep.subr.mxu0 0.0
    %4435 = vmatpush1.msra.mxu0 %v3046
    %4436 = vmatprep.subr.mxu0 0.0
    %4437 = vmatpush1.msra.mxu0 0.0
    %4438 = vmatprep.subr.mxu0 0.0
    %4439 = vmatpush1.msra.mxu0 0.0
    %4440 = vmatprep.subr.mxu0 0.0
    %4441 = vmatpush1.msra.mxu0 0.0
    %4442 = vmatprep.subr.mxu0 0.0
    %4443 = vmatpush1.msra.mxu0 0.0
    %4444 = vmatprep.subr.mxu0 0.0
    %4445 = vmatpush1.msra.mxu0 0.0
    %4446 = vmatprep.subr.mxu0 0.0
    %4447 = vmatpush1.msra.mxu0 0.0
    %4448 = vmatprep.subr.mxu0 0.0
    %4449 = vmatpush1.msra.mxu0 0.0
    %4450 = vmatprep.subr.mxu0 0.0
    %4451 = vmatpush1.msra.mxu0 0.0
    %4452 = vmatprep.subr.mxu0 0.0
    %4453 = vmatpush1.msra.mxu0 0.0
    %4454 = vmatprep.subr.mxu0 0.0
    %4455 = vmatpush1.msra.mxu0 0.0
    %4456 = vmatprep.subr.mxu0 0.0
    %4457 = vmatpush1.msra.mxu0 0.0
    %4458 = vmatprep.subr.mxu0 0.0
    %4459 = vmatpush1.msra.mxu0 0.0
    %4460 = vmatprep.subr.mxu0 0.0
    %4461 = vmatpush1.msra.mxu0 0.0
    %4462 = vmatprep.subr.mxu0 0.0
    %4463 = vmatpush1.msra.mxu0 0.0
    %4464 = vmatprep.subr.mxu0 0.0
    %4465 = vmatpush1.msra.mxu0 0.0
    %4466 = vmatprep.subr.mxu0 0.0
    %4467 = vmatpush1.msra.mxu0 0.0
    %4468 = vmatprep.subr.mxu0 0.0
    %4469 = vmatpush1.msra.mxu0 0.0
    %4470 = vmatprep.subr.mxu0 0.0
    %4471 = vmatpush1.msra.mxu0 0.0
    %4472 = vmatprep.subr.mxu0 0.0
    %4473 = vmatpush1.msra.mxu0 0.0
    %4474 = vmatprep.subr.mxu0 0.0
    %4475 = vmatpush1.msra.mxu0 0.0
    %4476 = vmatprep.subr.mxu0 0.0
    %4477 = vmatpush1.msra.mxu0 0.0
    %4478 = vmatprep.subr.mxu0 0.0
    %4479 = vmatpush1.msra.mxu0 0.0
    %4480 = vmatprep.subr.mxu0 0.0
    %4481 = vmatpush1.msra.mxu0 0.0
    %4482 = vmatprep.subr.mxu0 0.0
    %4483 = vmatpush1.msra.mxu0 0.0
    %4484 = vmatprep.subr.mxu0 0.0
    %4485 = vmatpush1.msra.mxu0 0.0
    %4486 = vmatprep.subr.mxu0 0.0
    %4487 = vmatpush1.msra.mxu0 0.0
    %4488 = vmatprep.subr.mxu0 0.0
    %4489 = vmatpush1.msra.mxu0 0.0
    %4490 = vmatprep.subr.mxu0 0.0
    %4491 = vmatpush1.msra.mxu0 0.0
    %4492 = vmatprep.mubr.f32.mxu0 0.0
    %4493 = vmatmul.mubr.f32.gmra.mrb[0].mxu0 %v4426
    %v4494 = vpop.f32.mrb[0].mxu0
    %v4495 = vadd.f32 0.0, %v4494
    %v4496 = vpop.f32.mrb[0].mxu0
    %4497 = vdwg.mxu0
    %v4498 = vadd.f32 %v3156, %v4495
    %v4499 = vxor.u32 %v4498, 2147483648
    %v4500 = vmul.f32 %v4499, 1.442695
    %v4501 = vpow.pop %v4500
    %v4502 = vadd.f32 %v4501, 1.0
    %v4503 = vrcp.pop %v4502
    %v4504 = vmul.f32 1.0, %v4503
    %v4505 = vtanh.pop %v4498
    %v4507 = vrot.slane %v4415, 6
    %v4509 = vmul.f32 %v4504, %v4507
    %4511 = vrot.lane.b32.xlu0 %v4505, 64
    %v4512 = vpop.permute.xlu0 %4511
    %v4514 = vmul.f32 %v4504, %v4512
    %4516 = vrot.lane.b32.xlu0 %v4514, 32
    %v4517 = vpop.permute.xlu0 %4516
    %v4519 = vadd.f32 %v4509, %v4517
    %v4520 = vtanh.pop %v4519
    %4522 = vrot.lane.b32.xlu0 %v4520, 64
    %v4523 = vpop.permute.xlu0 %4522
    %v4525 = vmul.f32 %v4504, %v4523
    %4527 = vrot.lane.b32.xlu0 %v4525, 32
    %v4528 = vpop.permute.xlu0 %4527
    %v4529 = vsel %vm871, %v4528, 0
    %4531 = vmatprep.subr.mxu0 0.0
    %4532 = vmatpush1.msra.mxu0 %v3043
    %4533 = vmatprep.subr.mxu0 0.0
    %4534 = vmatpush1.msra.mxu0 %v3044
    %4535 = vmatprep.subr.mxu0 0.0
    %4536 = vmatpush1.msra.mxu0 %v3045
    %4537 = vmatprep.subr.mxu0 0.0
    %4538 = vmatpush1.msra.mxu0 %v3046
    %4539 = vmatprep.subr.mxu0 0.0
    %4540 = vmatpush1.msra.mxu0 0.0
    %4541 = vmatprep.subr.mxu0 0.0
    %4542 = vmatpush1.msra.mxu0 0.0
    %4543 = vmatprep.subr.mxu0 0.0
    %4544 = vmatpush1.msra.mxu0 0.0
    %4545 = vmatprep.subr.mxu0 0.0
    %4546 = vmatpush1.msra.mxu0 0.0
    %4547 = vmatprep.subr.mxu0 0.0
    %4548 = vmatpush1.msra.mxu0 0.0
    %4549 = vmatprep.subr.mxu0 0.0
    %4550 = vmatpush1.msra.mxu0 0.0
    %4551 = vmatprep.subr.mxu0 0.0
    %4552 = vmatpush1.msra.mxu0 0.0
    %4553 = vmatprep.subr.mxu0 0.0
    %4554 = vmatpush1.msra.mxu0 0.0
    %4555 = vmatprep.subr.mxu0 0.0
    %4556 = vmatpush1.msra.mxu0 0.0
    %4557 = vmatprep.subr.mxu0 0.0
    %4558 = vmatpush1.msra.mxu0 0.0
    %4559 = vmatprep.subr.mxu0 0.0
    %4560 = vmatpush1.msra.mxu0 0.0
    %4561 = vmatprep.subr.mxu0 0.0
    %4562 = vmatpush1.msra.mxu0 0.0
    %4563 = vmatprep.subr.mxu0 0.0
    %4564 = vmatpush1.msra.mxu0 0.0
    %4565 = vmatprep.subr.mxu0 0.0
    %4566 = vmatpush1.msra.mxu0 0.0
    %4567 = vmatprep.subr.mxu0 0.0
    %4568 = vmatpush1.msra.mxu0 0.0
    %4569 = vmatprep.subr.mxu0 0.0
    %4570 = vmatpush1.msra.mxu0 0.0
    %4571 = vmatprep.subr.mxu0 0.0
    %4572 = vmatpush1.msra.mxu0 0.0
    %4573 = vmatprep.subr.mxu0 0.0
    %4574 = vmatpush1.msra.mxu0 0.0
    %4575 = vmatprep.subr.mxu0 0.0
    %4576 = vmatpush1.msra.mxu0 0.0
    %4577 = vmatprep.subr.mxu0 0.0
    %4578 = vmatpush1.msra.mxu0 0.0
    %4579 = vmatprep.subr.mxu0 0.0
    %4580 = vmatpush1.msra.mxu0 0.0
    %4581 = vmatprep.subr.mxu0 0.0
    %4582 = vmatpush1.msra.mxu0 0.0
    %4583 = vmatprep.subr.mxu0 0.0
    %4584 = vmatpush1.msra.mxu0 0.0
    %4585 = vmatprep.subr.mxu0 0.0
    %4586 = vmatpush1.msra.mxu0 0.0
    %4587 = vmatprep.subr.mxu0 0.0
    %4588 = vmatpush1.msra.mxu0 0.0
    %4589 = vmatprep.subr.mxu0 0.0
    %4590 = vmatpush1.msra.mxu0 0.0
    %4591 = vmatprep.subr.mxu0 0.0
    %4592 = vmatpush1.msra.mxu0 0.0
    %4593 = vmatprep.subr.mxu0 0.0
    %4594 = vmatpush1.msra.mxu0 0.0
    %4595 = vmatprep.mubr.f32.mxu0 0.0
    %4596 = vmatmul.mubr.f32.gmra.mrb[0].mxu0 %v4529
    %v4597 = vpop.f32.mrb[0].mxu0
    %v4598 = vadd.f32 0.0, %v4597
    %v4599 = vpop.f32.mrb[0].mxu0
    %4600 = vdwg.mxu0
    %v4602 = vrot.slane %v4598, 6
    %v4604 = vadd.f32 %v3156, %v4602
    %v4605 = vxor.u32 %v4604, 2147483648
    %v4606 = vmul.f32 %v4605, 1.442695
    %v4607 = vpow.pop %v4606
    %v4608 = vadd.f32 %v4607, 1.0
    %v4609 = vrcp.pop %v4608
    %v4610 = vmul.f32 1.0, %v4609
    %v4611 = vtanh.pop %v4604
    %v4613 = vrot.slane %v4519, 6
    %v4615 = vmul.f32 %v4610, %v4613
    %4617 = vrot.lane.b32.xlu0 %v4611, 64
    %v4618 = vpop.permute.xlu0 %4617
    %v4620 = vmul.f32 %v4610, %v4618
    %4622 = vrot.lane.b32.xlu0 %v4620, 32
    %v4623 = vpop.permute.xlu0 %4622
    %v4625 = vadd.f32 %v4615, %v4623
    %v4626 = vtanh.pop %v4625
    %4628 = vrot.lane.b32.xlu0 %v4626, 64
    %v4629 = vpop.permute.xlu0 %4628
    %v4631 = vmul.f32 %v4610, %v4629
    %v4632 = vld [vmem:[%s11] sm:$0xff]
    %v4633 = vld [vmem:[%s11 + $0x8] sm:$0xff]
    %v4634 = vld [vmem:[%s11 + $0x10] sm:$0xff]
    %v4635 = vld [vmem:[%s11 + $0x18] sm:$0xff]
    %v4636 = vld [vmem:[%s12] sm:$0x1]
    %v4638 = vlaneseq
    %v4639 = vshrl.u32 %v4638, 7
    %v4640 = vsub.s32 0, %v4639
    %v4641 = vrot.slane %v4636, %v4640
    %v4644 = vrot.slane %v4631, 2
    %4645 = vrot.lane.b32.xlu0 %v4644, 32
    %v4646 = vpop.permute.xlu0 %4645
    %v4647 = vsel %vm871, %v4646, 0
    %4649 = vmatprep.subr.mxu0 0.0
    %4650 = vmatpush1.msra.mxu0 %v4632
    %4651 = vmatprep.subr.mxu0 0.0
    %4652 = vmatpush1.msra.mxu0 %v4633
    %4653 = vmatprep.subr.mxu0 0.0
    %4654 = vmatpush1.msra.mxu0 %v4634
    %4655 = vmatprep.subr.mxu0 0.0
    %4656 = vmatpush1.msra.mxu0 %v4635
    %4657 = vmatprep.subr.mxu0 0.0
    %4658 = vmatpush1.msra.mxu0 0.0
    %4659 = vmatprep.subr.mxu0 0.0
    %4660 = vmatpush1.msra.mxu0 0.0
    %4661 = vmatprep.subr.mxu0 0.0
    %4662 = vmatpush1.msra.mxu0 0.0
    %4663 = vmatprep.subr.mxu0 0.0
    %4664 = vmatpush1.msra.mxu0 0.0
    %4665 = vmatprep.subr.mxu0 0.0
    %4666 = vmatpush1.msra.mxu0 0.0
    %4667 = vmatprep.subr.mxu0 0.0
    %4668 = vmatpush1.msra.mxu0 0.0
    %4669 = vmatprep.subr.mxu0 0.0
    %4670 = vmatpush1.msra.mxu0 0.0
    %4671 = vmatprep.subr.mxu0 0.0
    %4672 = vmatpush1.msra.mxu0 0.0
    %4673 = vmatprep.subr.mxu0 0.0
    %4674 = vmatpush1.msra.mxu0 0.0
    %4675 = vmatprep.subr.mxu0 0.0
    %4676 = vmatpush1.msra.mxu0 0.0
    %4677 = vmatprep.subr.mxu0 0.0
    %4678 = vmatpush1.msra.mxu0 0.0
    %4679 = vmatprep.subr.mxu0 0.0
    %4680 = vmatpush1.msra.mxu0 0.0
    %4681 = vmatprep.subr.mxu0 0.0
    %4682 = vmatpush1.msra.mxu0 0.0
    %4683 = vmatprep.subr.mxu0 0.0
    %4684 = vmatpush1.msra.mxu0 0.0
    %4685 = vmatprep.subr.mxu0 0.0
    %4686 = vmatpush1.msra.mxu0 0.0
    %4687 = vmatprep.subr.mxu0 0.0
    %4688 = vmatpush1.msra.mxu0 0.0
    %4689 = vmatprep.subr.mxu0 0.0
    %4690 = vmatpush1.msra.mxu0 0.0
    %4691 = vmatprep.subr.mxu0 0.0
    %4692 = vmatpush1.msra.mxu0 0.0
    %4693 = vmatprep.subr.mxu0 0.0
    %4694 = vmatpush1.msra.mxu0 0.0
    %4695 = vmatprep.subr.mxu0 0.0
    %4696 = vmatpush1.msra.mxu0 0.0
    %4697 = vmatprep.subr.mxu0 0.0
    %4698 = vmatpush1.msra.mxu0 0.0
    %4699 = vmatprep.subr.mxu0 0.0
    %4700 = vmatpush1.msra.mxu0 0.0
    %4701 = vmatprep.subr.mxu0 0.0
    %4702 = vmatpush1.msra.mxu0 0.0
    %4703 = vmatprep.subr.mxu0 0.0
    %4704 = vmatpush1.msra.mxu0 0.0
    %4705 = vmatprep.subr.mxu0 0.0
    %4706 = vmatpush1.msra.mxu0 0.0
    %4707 = vmatprep.subr.mxu0 0.0
    %4708 = vmatpush1.msra.mxu0 0.0
    %4709 = vmatprep.subr.mxu0 0.0
    %4710 = vmatpush1.msra.mxu0 0.0
    %4711 = vmatprep.subr.mxu0 0.0
    %4712 = vmatpush1.msra.mxu0 0.0
    %4713 = vmatprep.mubr.f32.mxu0 0.0
    %4714 = vmatmul.mubr.f32.gmra.mrb[0].mxu0 %v4647
    %v4715 = vpop.f32.mrb[0].mxu0
    %v4716 = vadd.f32 %v4641, %v4715
    %v4717 = vpop.f32.mrb[0].mxu0
    %4718 = vdwg.mxu0
    %vm4719 = vcmask 17408
    %4720 = vst.msk [vmem:[#allocation2] sm:$0x3] %vm4719, %v4716
    // Predicated region
    $region78: #{tpu_custom_call.1} parent=1 // pred_check
      _
    $region79: #{tpu_custom_call.1} parent=1 // pred_check_branch
      %4722 = sbr.rel (0) target = $region81
    $region80: #{tpu_custom_call.1} parent=1 // pred_region
      %s4724 = ssub.s32 32, 32
      %4725 = vsyncadd [#allocation3], %s4724
      %s4727 = sshll.u32 [#allocation2], 4
      %s4728 = int_to_ptr.vmem [resolvable:$true] %s4727
      %4730 = dma.vmem_to_hbm [thread:$0]  %s4728, 32, %s19, [#allocation3]
    $region81: #{tpu_custom_call.1} parent=1 // pred_fallthru
      _
    // Predicated region
    $region82: #{tpu_custom_call.1} parent=1 // pred_check
      _
    $region83: #{tpu_custom_call.1} parent=1 // pred_check_branch
      %4732 = sbr.rel (0) target = $region85
    $region84: #{tpu_custom_call.1} parent=1 // pred_region
      %4733 = dma.done [#allocation3], 32
    $region85: #{tpu_custom_call.1} parent=1 // pred_fallthru
      _
    %4734 = vsyncpa [#allocation3], 1

</llo_original>
